<compile_context>
chip_gen: v6e
topology: v6e:2x2x1
jax: 0.10.0
libtpu: 0.0.40
codegen_flags: <defaults>
</compile_context>

<pallas_src>
import functools

import jax
import jax.numpy as jnp
from jax import lax
from jax.experimental import pallas as pl
from jax.experimental.pallas import tpu as pltpu

EPS = 1e-5
COMPUTE_DTYPE = jnp.float32   # set to jnp.bfloat16 for native-rate MXU (loosen tol to ~5e-2)


# ------------------------------ fused Pallas kernel ------------------------------

def _fused_decoder_kernel(x_ref, w0_ref, b0_ref, wblk_ref, bblk_ref, o_ref, cat_ref,
                          *, dils, N, L, C):
    # x_ref:    (N, C, L) f32 NCL input (whole batch, resident in VMEM)
    # w0_ref:   (C, C)   start 1x1-conv weight with BN scale folded in
    # b0_ref:   (1, C)   folded BN bias for conv_start
    # wblk_ref: (2*nb, 3C, C) packed dilated-conv weights (BN scale folded in)
    # bblk_ref: (2*nb, 1, C)  folded BN biases
    # o_ref:    (N, C, L) f32 output
    # cat_ref:  (N*L, 3C) persistent VMEM scratch for the packed taps
    M = N * L

    # In-kernel NCL -> (N*L, C): one cheap 2-D XLU transpose per batch element
    # (replaces the two boundary XLA transpose launches of the previous version).
    x = jnp.concatenate([x_ref[n].T for n in range(N)], axis=0)          # (M, C) f32

    # Row position within its own sequence. Because masking is done per-position, the
    # roll-based zero padding stays correct with batch folded into M (wrapped rows from a
    # neighbouring batch element only ever land on masked positions).
    pos = jnp.concatenate(
        [lax.broadcasted_iota(jnp.int32, (L, 1), 0)] * N, axis=0)        # (M, 1)

    # conv_start: 1x1 conv == matmul (BN scale pre-folded into weight), + bias + ReLU
    h = jnp.dot(x.astype(COMPUTE_DTYPE), w0_ref[...],
                preferred_element_type=jnp.float32)
    x = jnp.maximum(h + b0_ref[...], 0.0)

    def dilated_conv(x, layer, dil, residual):
        # Zero-padded dilated taps via roll + per-position mask, written into the
        # persistent (M, 3C) scratch -> single K=3C MXU matmul per conv.
        x_prev = jnp.where(pos >= dil, pltpu.roll(x, dil, axis=0), 0.0)          # x[l-dil]
        x_next = jnp.where(pos < L - dil, pltpu.roll(x, M - dil, axis=0), 0.0)   # x[l+dil]
        cat_ref[:, 0:C] = x_prev.astype(COMPUTE_DTYPE)
        cat_ref[:, C:2 * C] = x.astype(COMPUTE_DTYPE)
        cat_ref[:, 2 * C:3 * C] = x_next.astype(COMPUTE_DTYPE)
        acc = jnp.dot(cat_ref[...], wblk_ref[layer],
                      preferred_element_type=jnp.float32)                        # (M, C) f32
        y = acc + bblk_ref[layer]                                                # folded BN bias
        if residual is not None:
            y = y + residual                                                     # identity add
        return jnp.maximum(y, 0.0)                                               # ReLU

    # dilated residual blocks, statically unrolled (dilations are compile-time constants)
    for i, dil in enumerate(dils):
        identity = x
        h = dilated_conv(x, 2 * i, dil, None)
        x = dilated_conv(h, 2 * i + 1, dil, identity)

    # (M, C) -> NCL output, per-batch 2-D transposes.
    for n in range(N):
        o_ref[n] = x[n * L:(n + 1) * L, :].T


def make_decoder(dils, N, L, C):
    num_blocks = len(dils)
    kernel = functools.partial(_fused_decoder_kernel, dils=tuple(dils), N=N, L=L, C=C)

    itemsize = jnp.dtype(COMPUTE_DTYPE).itemsize
    flops = 2 * N * L * C * C * (1 + 6 * num_blocks)                     # 1x1 + 8 K=3C convs
    bytes_accessed = (2 * N * C * L * 4                                  # activation in + out
                      + (C * C + 2 * num_blocks * 3 * C * C) * itemsize  # packed weights
                      + (1 + 2 * num_blocks) * C * 4)                    # biases

    call = pl.pallas_call(
        kernel,
        out_shape=jax.ShapeDtypeStruct((N, C, L), jnp.float32),
        # No grid: all operands are whole-array, single-buffered VMEM residents.
        scratch_shapes=[pltpu.VMEM((N * L, 3 * C), COMPUTE_DTYPE)],
        cost_estimate=pl.CostEstimate(flops=flops, transcendentals=0,
                                      bytes_accessed=bytes_accessed),
    )

    @jax.jit
    def forward(x_ncl, packed):
        return call(x_ncl.astype(jnp.float32), packed["w_start"], packed["b_start"],
                    packed["w_blocks"], packed["b_blocks"])

    return forward


# --------------------------- parameters & packing ---------------------------

def _fold_bn(bn):
    scale = bn["gamma"] / jnp.sqrt(bn["var"] + EPS)
    bias = bn["beta"] - bn["mean"] * scale
    return scale, bias


def prepare_params(params):
    """One-time fold/pack of PyTorch-layout params into kernel-ready arrays.

    BN scale is folded directly into the conv weight columns; only biases remain.
    """
    C = params["start_w"].shape[0]
    s0, b0 = _fold_bn(params["start_bn"])
    # Conv1d weight (O, I, 1) -> (I, O) matmul weight, BN scale folded into output cols.
    w_start = jnp.transpose(params["start_w"][:, :, 0], (1, 0)) * s0[None, :]
    packed = {
        "w_start": w_start.astype(COMPUTE_DTYPE),
        "b_start": b0.reshape(1, C),
    }
    w_list, b_list, dils = [], [], []
    for blk in params["blocks"]:
        dils.append(int(blk["dil"]))
        for j in (1, 2):
            s, b = _fold_bn(blk[f"bn{j}"])
            # (O, I, K=3) -> (K, I, O) -> packed (3*I, O): rows = [x[l-d] | x[l] | x[l+d]]
            w = jnp.transpose(blk[f"w{j}"], (2, 1, 0)).reshape(3 * C, C) * s[None, :]
            w_list.append(w)
            b_list.append(b.reshape(1, C))
    packed["w_blocks"] = jnp.stack(w_list, axis=0).astype(COMPUTE_DTYPE)   # (2*nb, 3C, C)
    packed["b_blocks"] = jnp.stack(b_list, axis=0)                         # (2*nb, 1, C)
    return packed, tuple(dils)


def init_params(key, C, num_blocks):
    def bn_init(k):
        k1, k2, k3, k4 = jax.random.split(k, 4)
        return dict(
            gamma=jax.random.uniform(k1, (C,), jnp.float32, 0.8, 1.2),
            beta=0.1 * jax.random.normal(k2, (C,), jnp.float32),
            mean=0.1 * jax.random.normal(k3, (C,), jnp.float32),
            var=jax.random.uniform(k4, (C,), jnp.float32, 0.5, 1.5),
        )

    p = {}
    key, k = jax.random.split(key)
    # PyTorch Conv1d weight layout: (out_channels, in_channels, kernel_size)
    p["start_w"] = (1.0 / jnp.sqrt(C)) * jax.random.normal(k, (C, C, 1), jnp.float32)
    key, k = jax.random.split(key)
    p["start_bn"] = bn_init(k)
    blocks = []
    for i in range(num_blocks):
        blk = {"dil": 2 ** (i + 1)}
        for j in (1, 2):
            key, k = jax.random.split(key)
            blk[f"w{j}"] = (1.0 / jnp.sqrt(3 * C)) * jax.random.normal(k, (C, C, 3), jnp.float32)
            key, k = jax.random.split(key)
            blk[f"bn{j}"] = bn_init(k)
        blocks.append(blk)
    p["blocks"] = blocks
    return p


# ------------------------------ pure-JAX reference ---------------------------

def residual_decoder_ref(x_ncl, params):
    def bn(x, bnp):
        return ((x - bnp["mean"][None, :, None])
                / jnp.sqrt(bnp["var"][None, :, None] + EPS)
                * bnp["gamma"][None, :, None] + bnp["beta"][None, :, None])

    def conv(x, w, dil, pad):
        return lax.conv_general_dilated(
            x, w, window_strides=(1,), padding=[(pad, pad)],
            rhs_dilation=(dil,), dimension_numbers=("NCH", "OIH", "NCH"))

    x = jnp.maximum(bn(conv(x_ncl, params["start_w"], 1, 0), params["start_bn"]), 0.0)
    for blk in params["blocks"]:
        d = blk["dil"]
        identity = x
        h = jnp.maximum(bn(conv(x, blk["w1"], d, d), blk["bn1"]), 0.0)
        x = jnp.maximum(bn(conv(h, blk["w2"], d, d), blk["bn2"]) + identity, 0.0)
    return x


# ----------------------------------- main ------------------------------------

if __name__ == "__main__":
    key = jax.random.PRNGKey(0)
    kp, kx = jax.random.split(key)

    N, C, L = 2, 128, 64          # batch, hidden channels, sequence length
    num_blocks = 4                # dilations 2, 4, 8, 16 (all < L)

    params = init_params(kp, C, num_blocks)
    x = jax.random.normal(kx, (N, C, L), jnp.float32)     # PyTorch NCL input

    packed, dils = prepare_params(params)
    forward = make_decoder(dils, N, L, C)

    out = jax.block_until_ready(forward(x, packed))

    ref = residual_decoder_ref(x, params)
    assert out.shape == (N, C, L)
    max_err = float(jnp.max(jnp.abs(out - ref)))
    tol = 2e-3 if COMPUTE_DTYPE == jnp.float32 else 5e-2
    assert jnp.allclose(out, ref, atol=tol, rtol=tol), f"max_err={max_err}"

    print("KERNEL_OK")
</pallas_src>

<mosaic_0001>
module attributes {stable_mosaic.version = 11 : i64} {
  func.func @_fused_decoder_kernel(%arg0: memref<2x128x64xf32, #tpu.memory_space<vmem>>, %arg1: memref<128x128xf32, #tpu.memory_space<vmem>>, %arg2: memref<1x128xf32, #tpu.memory_space<vmem>>, %arg3: memref<8x384x128xf32, #tpu.memory_space<vmem>>, %arg4: memref<8x1x128xf32, #tpu.memory_space<vmem>>, %arg5: memref<2x128x64xf32, #tpu.memory_space<vmem>>, %arg6: memref<128x384xf32, #tpu.memory_space<vmem>>) attributes {dimension_semantics = [], scalar_prefetch = 0 : i64, scratch_operands = 1 : i64, tpu.core_type = #tpu.core_type<tc>} {
    %c0 = arith.constant 0 : index
    %c0_0 = arith.constant 0 : index
    %c0_1 = arith.constant 0 : index
    %0 = vector.load %arg0[%c0, %c0_0, %c0_1] : memref<2x128x64xf32, #tpu.memory_space<vmem>>, vector<1x128x64xf32>
    %1 = vector.shape_cast %0 : vector<1x128x64xf32> to vector<128x64xf32>
    %2 = tpu.transpose %1, [1, 0] : vector<128x64xf32> -> vector<64x128xf32>
    %c1 = arith.constant 1 : index
    %c0_2 = arith.constant 0 : index
    %c0_3 = arith.constant 0 : index
    %3 = vector.load %arg0[%c1, %c0_2, %c0_3] : memref<2x128x64xf32, #tpu.memory_space<vmem>>, vector<1x128x64xf32>
    %4 = vector.shape_cast %3 : vector<1x128x64xf32> to vector<128x64xf32>
    %5 = tpu.transpose %4, [1, 0] : vector<128x64xf32> -> vector<64x128xf32>
    %6 = tpu.concatenate %2, %5 in 0 : vector<64x128xf32>, vector<64x128xf32> -> vector<128x128xf32>
    %7 = tpu.iota {dimensions = array<i32: 0>} : vector<64x1xi32>
    %8 = tpu.concatenate %7, %7 in 0 : vector<64x1xi32>, vector<64x1xi32> -> vector<128x1xi32>
    %c0_4 = arith.constant 0 : index
    %c0_5 = arith.constant 0 : index
    %9 = vector.load %arg1[%c0_4, %c0_5] : memref<128x128xf32, #tpu.memory_space<vmem>>, vector<128x128xf32>
    %cst = arith.constant dense<0.000000e+00> : vector<128x128xf32>
    %10 = tpu.matmul %6, %9, %cst {dimension_numbers = #tpu.dot_dimension_numbers<[1], [0], [0], [1], [0, 0, 1, 1], [], []>} : vector<128x128xf32>, vector<128x128xf32>, vector<128x128xf32> -> vector<128x128xf32>
    %c0_6 = arith.constant 0 : index
    %c0_7 = arith.constant 0 : index
    %11 = vector.load %arg2[%c0_6, %c0_7] : memref<1x128xf32, #tpu.memory_space<vmem>>, vector<1x128xf32>
    %12 = vector.broadcast %11 : vector<1x128xf32> to vector<128x128xf32>
    %13 = arith.addf %10, %12 : vector<128x128xf32>
    %cst_8 = arith.constant 0.000000e+00 : f32
    %14 = vector.broadcast %cst_8 : f32 to vector<128x128xf32>
    %15 = arith.maximumf %13, %14 : vector<128x128xf32>
    %c2_i32 = arith.constant 2 : i32
    %16 = vector.broadcast %c2_i32 : i32 to vector<128x1xi32>
    %17 = arith.cmpi sge, %8, %16 : vector<128x1xi32>
    %c2_i32_9 = arith.constant 2 : i32
    %18 = tpu.dynamic_rotate %15 by %c2_i32_9 dim 0 : vector<128x128xf32>, i32 -> vector<128x128xf32>
    %cst_10 = arith.constant 0.000000e+00 : f32
    %19 = vector.shape_cast %17 : vector<128x1xi1> to vector<128x1xi1>
    %20 = vector.broadcast %19 : vector<128x1xi1> to vector<128x128xi1>
    %21 = vector.broadcast %cst_10 : f32 to vector<128x128xf32>
    %22 = arith.select %20, %18, %21 : vector<128x128xi1>, vector<128x128xf32>
    %c62_i32 = arith.constant 62 : i32
    %23 = vector.broadcast %c62_i32 : i32 to vector<128x1xi32>
    %24 = arith.cmpi slt, %8, %23 : vector<128x1xi32>
    %c126_i32 = arith.constant 126 : i32
    %25 = tpu.dynamic_rotate %15 by %c126_i32 dim 0 : vector<128x128xf32>, i32 -> vector<128x128xf32>
    %cst_11 = arith.constant 0.000000e+00 : f32
    %26 = vector.shape_cast %24 : vector<128x1xi1> to vector<128x1xi1>
    %27 = vector.broadcast %26 : vector<128x1xi1> to vector<128x128xi1>
    %28 = vector.broadcast %cst_11 : f32 to vector<128x128xf32>
    %29 = arith.select %27, %25, %28 : vector<128x128xi1>, vector<128x128xf32>
    %c0_12 = arith.constant 0 : index
    %c0_13 = arith.constant 0 : index
    %30 = vector.load %arg6[%c0_12, %c0_13] : memref<128x384xf32, #tpu.memory_space<vmem>>, vector<128x128xf32>
    tpu.vector_store %arg6[%c0_12, %c0_13], %22 {strides = array<i32>} : memref<128x384xf32, #tpu.memory_space<vmem>>, vector<128x128xf32>,
    %c0_14 = arith.constant 0 : index
    %c128 = arith.constant 128 : index
    %31 = vector.load %arg6[%c0_14, %c128] : memref<128x384xf32, #tpu.memory_space<vmem>>, vector<128x128xf32>
    tpu.vector_store %arg6[%c0_14, %c128], %15 {strides = array<i32>} : memref<128x384xf32, #tpu.memory_space<vmem>>, vector<128x128xf32>,
    %c0_15 = arith.constant 0 : index
    %c256 = arith.constant 256 : index
    %32 = vector.load %arg6[%c0_15, %c256] : memref<128x384xf32, #tpu.memory_space<vmem>>, vector<128x128xf32>
    tpu.vector_store %arg6[%c0_15, %c256], %29 {strides = array<i32>} : memref<128x384xf32, #tpu.memory_space<vmem>>, vector<128x128xf32>,
    %c0_16 = arith.constant 0 : index
    %c0_17 = arith.constant 0 : index
    %33 = vector.load %arg6[%c0_16, %c0_17] : memref<128x384xf32, #tpu.memory_space<vmem>>, vector<128x384xf32>
    %c0_18 = arith.constant 0 : index
    %c0_19 = arith.constant 0 : index
    %c0_20 = arith.constant 0 : index
    %34 = vector.load %arg3[%c0_18, %c0_19, %c0_20] : memref<8x384x128xf32, #tpu.memory_space<vmem>>, vector<1x384x128xf32>
    %35 = vector.shape_cast %34 : vector<1x384x128xf32> to vector<384x128xf32>
    %cst_21 = arith.constant dense<0.000000e+00> : vector<128x128xf32>
    %36 = tpu.matmul %33, %35, %cst_21 {dimension_numbers = #tpu.dot_dimension_numbers<[1], [0], [0], [1], [0, 0, 1, 1], [], []>} : vector<128x384xf32>, vector<384x128xf32>, vector<128x128xf32> -> vector<128x128xf32>
    %c0_22 = arith.constant 0 : index
    %c0_23 = arith.constant 0 : index
    %c0_24 = arith.constant 0 : index
    %37 = vector.load %arg4[%c0_22, %c0_23, %c0_24] : memref<8x1x128xf32, #tpu.memory_space<vmem>>, vector<1x1x128xf32>
    %38 = vector.shape_cast %37 : vector<1x1x128xf32> to vector<1x128xf32>
    %39 = vector.broadcast %38 : vector<1x128xf32> to vector<128x128xf32>
    %40 = arith.addf %36, %39 : vector<128x128xf32>
    %cst_25 = arith.constant 0.000000e+00 : f32
    %41 = vector.broadcast %cst_25 : f32 to vector<128x128xf32>
    %42 = arith.maximumf %40, %41 : vector<128x128xf32>
    %c2_i32_26 = arith.constant 2 : i32
    %43 = vector.broadcast %c2_i32_26 : i32 to vector<128x1xi32>
    %44 = arith.cmpi sge, %8, %43 : vector<128x1xi32>
    %c2_i32_27 = arith.constant 2 : i32
    %45 = tpu.dynamic_rotate %42 by %c2_i32_27 dim 0 : vector<128x128xf32>, i32 -> vector<128x128xf32>
    %cst_28 = arith.constant 0.000000e+00 : f32
    %46 = vector.shape_cast %44 : vector<128x1xi1> to vector<128x1xi1>
    %47 = vector.broadcast %46 : vector<128x1xi1> to vector<128x128xi1>
    %48 = vector.broadcast %cst_28 : f32 to vector<128x128xf32>
    %49 = arith.select %47, %45, %48 : vector<128x128xi1>, vector<128x128xf32>
    %c62_i32_29 = arith.constant 62 : i32
    %50 = vector.broadcast %c62_i32_29 : i32 to vector<128x1xi32>
    %51 = arith.cmpi slt, %8, %50 : vector<128x1xi32>
    %c126_i32_30 = arith.constant 126 : i32
    %52 = tpu.dynamic_rotate %42 by %c126_i32_30 dim 0 : vector<128x128xf32>, i32 -> vector<128x128xf32>
    %cst_31 = arith.constant 0.000000e+00 : f32
    %53 = vector.shape_cast %51 : vector<128x1xi1> to vector<128x1xi1>
    %54 = vector.broadcast %53 : vector<128x1xi1> to vector<128x128xi1>
    %55 = vector.broadcast %cst_31 : f32 to vector<128x128xf32>
    %56 = arith.select %54, %52, %55 : vector<128x128xi1>, vector<128x128xf32>
    %c0_32 = arith.constant 0 : index
    %c0_33 = arith.constant 0 : index
    %57 = vector.load %arg6[%c0_32, %c0_33] : memref<128x384xf32, #tpu.memory_space<vmem>>, vector<128x128xf32>
    tpu.vector_store %arg6[%c0_32, %c0_33], %49 {strides = array<i32>} : memref<128x384xf32, #tpu.memory_space<vmem>>, vector<128x128xf32>,
    %c0_34 = arith.constant 0 : index
    %c128_35 = arith.constant 128 : index
    %58 = vector.load %arg6[%c0_34, %c128_35] : memref<128x384xf32, #tpu.memory_space<vmem>>, vector<128x128xf32>
    tpu.vector_store %arg6[%c0_34, %c128_35], %42 {strides = array<i32>} : memref<128x384xf32, #tpu.memory_space<vmem>>, vector<128x128xf32>,
    %c0_36 = arith.constant 0 : index
    %c256_37 = arith.constant 256 : index
    %59 = vector.load %arg6[%c0_36, %c256_37] : memref<128x384xf32, #tpu.memory_space<vmem>>, vector<128x128xf32>
    tpu.vector_store %arg6[%c0_36, %c256_37], %56 {strides = array<i32>} : memref<128x384xf32, #tpu.memory_space<vmem>>, vector<128x128xf32>,
    %c0_38 = arith.constant 0 : index
    %c0_39 = arith.constant 0 : index
    %60 = vector.load %arg6[%c0_38, %c0_39] : memref<128x384xf32, #tpu.memory_space<vmem>>, vector<128x384xf32>
    %c1_40 = arith.constant 1 : index
    %c0_41 = arith.constant 0 : index
    %c0_42 = arith.constant 0 : index
    %61 = vector.load %arg3[%c1_40, %c0_41, %c0_42] : memref<8x384x128xf32, #tpu.memory_space<vmem>>, vector<1x384x128xf32>
    %62 = vector.shape_cast %61 : vector<1x384x128xf32> to vector<384x128xf32>
    %cst_43 = arith.constant dense<0.000000e+00> : vector<128x128xf32>
    %63 = tpu.matmul %60, %62, %cst_43 {dimension_numbers = #tpu.dot_dimension_numbers<[1], [0], [0], [1], [0, 0, 1, 1], [], []>} : vector<128x384xf32>, vector<384x128xf32>, vector<128x128xf32> -> vector<128x128xf32>
    %c1_44 = arith.constant 1 : index
    %c0_45 = arith.constant 0 : index
    %c0_46 = arith.constant 0 : index
    %64 = vector.load %arg4[%c1_44, %c0_45, %c0_46] : memref<8x1x128xf32, #tpu.memory_space<vmem>>, vector<1x1x128xf32>
    %65 = vector.shape_cast %64 : vector<1x1x128xf32> to vector<1x128xf32>
    %66 = vector.broadcast %65 : vector<1x128xf32> to vector<128x128xf32>
    %67 = arith.addf %63, %66 : vector<128x128xf32>
    %68 = arith.addf %67, %15 : vector<128x128xf32>
    %cst_47 = arith.constant 0.000000e+00 : f32
    %69 = vector.broadcast %cst_47 : f32 to vector<128x128xf32>
    %70 = arith.maximumf %68, %69 : vector<128x128xf32>
    %c4_i32 = arith.constant 4 : i32
    %71 = vector.broadcast %c4_i32 : i32 to vector<128x1xi32>
    %72 = arith.cmpi sge, %8, %71 : vector<128x1xi32>
    %c4_i32_48 = arith.constant 4 : i32
    %73 = tpu.dynamic_rotate %70 by %c4_i32_48 dim 0 : vector<128x128xf32>, i32 -> vector<128x128xf32>
    %cst_49 = arith.constant 0.000000e+00 : f32
    %74 = vector.shape_cast %72 : vector<128x1xi1> to vector<128x1xi1>
    %75 = vector.broadcast %74 : vector<128x1xi1> to vector<128x128xi1>
    %76 = vector.broadcast %cst_49 : f32 to vector<128x128xf32>
    %77 = arith.select %75, %73, %76 : vector<128x128xi1>, vector<128x128xf32>
    %c60_i32 = arith.constant 60 : i32
    %78 = vector.broadcast %c60_i32 : i32 to vector<128x1xi32>
    %79 = arith.cmpi slt, %8, %78 : vector<128x1xi32>
    %c124_i32 = arith.constant 124 : i32
    %80 = tpu.dynamic_rotate %70 by %c124_i32 dim 0 : vector<128x128xf32>, i32 -> vector<128x128xf32>
    %cst_50 = arith.constant 0.000000e+00 : f32
    %81 = vector.shape_cast %79 : vector<128x1xi1> to vector<128x1xi1>
    %82 = vector.broadcast %81 : vector<128x1xi1> to vector<128x128xi1>
    %83 = vector.broadcast %cst_50 : f32 to vector<128x128xf32>
    %84 = arith.select %82, %80, %83 : vector<128x128xi1>, vector<128x128xf32>
    %c0_51 = arith.constant 0 : index
    %c0_52 = arith.constant 0 : index
    %85 = vector.load %arg6[%c0_51, %c0_52] : memref<128x384xf32, #tpu.memory_space<vmem>>, vector<128x128xf32>
    tpu.vector_store %arg6[%c0_51, %c0_52], %77 {strides = array<i32>} : memref<128x384xf32, #tpu.memory_space<vmem>>, vector<128x128xf32>,
    %c0_53 = arith.constant 0 : index
    %c128_54 = arith.constant 128 : index
    %86 = vector.load %arg6[%c0_53, %c128_54] : memref<128x384xf32, #tpu.memory_space<vmem>>, vector<128x128xf32>
    tpu.vector_store %arg6[%c0_53, %c128_54], %70 {strides = array<i32>} : memref<128x384xf32, #tpu.memory_space<vmem>>, vector<128x128xf32>,
    %c0_55 = arith.constant 0 : index
    %c256_56 = arith.constant 256 : index
    %87 = vector.load %arg6[%c0_55, %c256_56] : memref<128x384xf32, #tpu.memory_space<vmem>>, vector<128x128xf32>
    tpu.vector_store %arg6[%c0_55, %c256_56], %84 {strides = array<i32>} : memref<128x384xf32, #tpu.memory_space<vmem>>, vector<128x128xf32>,
    %c0_57 = arith.constant 0 : index
    %c0_58 = arith.constant 0 : index
    %88 = vector.load %arg6[%c0_57, %c0_58] : memref<128x384xf32, #tpu.memory_space<vmem>>, vector<128x384xf32>
    %c2 = arith.constant 2 : index
    %c0_59 = arith.constant 0 : index
    %c0_60 = arith.constant 0 : index
    %89 = vector.load %arg3[%c2, %c0_59, %c0_60] : memref<8x384x128xf32, #tpu.memory_space<vmem>>, vector<1x384x128xf32>
    %90 = vector.shape_cast %89 : vector<1x384x128xf32> to vector<384x128xf32>
    %cst_61 = arith.constant dense<0.000000e+00> : vector<128x128xf32>
    %91 = tpu.matmul %88, %90, %cst_61 {dimension_numbers = #tpu.dot_dimension_numbers<[1], [0], [0], [1], [0, 0, 1, 1], [], []>} : vector<128x384xf32>, vector<384x128xf32>, vector<128x128xf32> -> vector<128x128xf32>
    %c2_62 = arith.constant 2 : index
    %c0_63 = arith.constant 0 : index
    %c0_64 = arith.constant 0 : index
    %92 = vector.load %arg4[%c2_62, %c0_63, %c0_64] : memref<8x1x128xf32, #tpu.memory_space<vmem>>, vector<1x1x128xf32>
    %93 = vector.shape_cast %92 : vector<1x1x128xf32> to vector<1x128xf32>
    %94 = vector.broadcast %93 : vector<1x128xf32> to vector<128x128xf32>
    %95 = arith.addf %91, %94 : vector<128x128xf32>
    %cst_65 = arith.constant 0.000000e+00 : f32
    %96 = vector.broadcast %cst_65 : f32 to vector<128x128xf32>
    %97 = arith.maximumf %95, %96 : vector<128x128xf32>
    %c4_i32_66 = arith.constant 4 : i32
    %98 = vector.broadcast %c4_i32_66 : i32 to vector<128x1xi32>
    %99 = arith.cmpi sge, %8, %98 : vector<128x1xi32>
    %c4_i32_67 = arith.constant 4 : i32
    %100 = tpu.dynamic_rotate %97 by %c4_i32_67 dim 0 : vector<128x128xf32>, i32 -> vector<128x128xf32>
    %cst_68 = arith.constant 0.000000e+00 : f32
    %101 = vector.shape_cast %99 : vector<128x1xi1> to vector<128x1xi1>
    %102 = vector.broadcast %101 : vector<128x1xi1> to vector<128x128xi1>
    %103 = vector.broadcast %cst_68 : f32 to vector<128x128xf32>
    %104 = arith.select %102, %100, %103 : vector<128x128xi1>, vector<128x128xf32>
    %c60_i32_69 = arith.constant 60 : i32
    %105 = vector.broadcast %c60_i32_69 : i32 to vector<128x1xi32>
    %106 = arith.cmpi slt, %8, %105 : vector<128x1xi32>
    %c124_i32_70 = arith.constant 124 : i32
    %107 = tpu.dynamic_rotate %97 by %c124_i32_70 dim 0 : vector<128x128xf32>, i32 -> vector<128x128xf32>
    %cst_71 = arith.constant 0.000000e+00 : f32
    %108 = vector.shape_cast %106 : vector<128x1xi1> to vector<128x1xi1>
    %109 = vector.broadcast %108 : vector<128x1xi1> to vector<128x128xi1>
    %110 = vector.broadcast %cst_71 : f32 to vector<128x128xf32>
    %111 = arith.select %109, %107, %110 : vector<128x128xi1>, vector<128x128xf32>
    %c0_72 = arith.constant 0 : index
    %c0_73 = arith.constant 0 : index
    %112 = vector.load %arg6[%c0_72, %c0_73] : memref<128x384xf32, #tpu.memory_space<vmem>>, vector<128x128xf32>
    tpu.vector_store %arg6[%c0_72, %c0_73], %104 {strides = array<i32>} : memref<128x384xf32, #tpu.memory_space<vmem>>, vector<128x128xf32>,
    %c0_74 = arith.constant 0 : index
    %c128_75 = arith.constant 128 : index
    %113 = vector.load %arg6[%c0_74, %c128_75] : memref<128x384xf32, #tpu.memory_space<vmem>>, vector<128x128xf32>
    tpu.vector_store %arg6[%c0_74, %c128_75], %97 {strides = array<i32>} : memref<128x384xf32, #tpu.memory_space<vmem>>, vector<128x128xf32>,
    %c0_76 = arith.constant 0 : index
    %c256_77 = arith.constant 256 : index
    %114 = vector.load %arg6[%c0_76, %c256_77] : memref<128x384xf32, #tpu.memory_space<vmem>>, vector<128x128xf32>
    tpu.vector_store %arg6[%c0_76, %c256_77], %111 {strides = array<i32>} : memref<128x384xf32, #tpu.memory_space<vmem>>, vector<128x128xf32>,
    %c0_78 = arith.constant 0 : index
    %c0_79 = arith.constant 0 : index
    %115 = vector.load %arg6[%c0_78, %c0_79] : memref<128x384xf32, #tpu.memory_space<vmem>>, vector<128x384xf32>
    %c3 = arith.constant 3 : index
    %c0_80 = arith.constant 0 : index
    %c0_81 = arith.constant 0 : index
    %116 = vector.load %arg3[%c3, %c0_80, %c0_81] : memref<8x384x128xf32, #tpu.memory_space<vmem>>, vector<1x384x128xf32>
    %117 = vector.shape_cast %116 : vector<1x384x128xf32> to vector<384x128xf32>
    %cst_82 = arith.constant dense<0.000000e+00> : vector<128x128xf32>
    %118 = tpu.matmul %115, %117, %cst_82 {dimension_numbers = #tpu.dot_dimension_numbers<[1], [0], [0], [1], [0, 0, 1, 1], [], []>} : vector<128x384xf32>, vector<384x128xf32>, vector<128x128xf32> -> vector<128x128xf32>
    %c3_83 = arith.constant 3 : index
    %c0_84 = arith.constant 0 : index
    %c0_85 = arith.constant 0 : index
    %119 = vector.load %arg4[%c3_83, %c0_84, %c0_85] : memref<8x1x128xf32, #tpu.memory_space<vmem>>, vector<1x1x128xf32>
    %120 = vector.shape_cast %119 : vector<1x1x128xf32> to vector<1x128xf32>
    %121 = vector.broadcast %120 : vector<1x128xf32> to vector<128x128xf32>
    %122 = arith.addf %118, %121 : vector<128x128xf32>
    %123 = arith.addf %122, %70 : vector<128x128xf32>
    %cst_86 = arith.constant 0.000000e+00 : f32
    %124 = vector.broadcast %cst_86 : f32 to vector<128x128xf32>
    %125 = arith.maximumf %123, %124 : vector<128x128xf32>
    %c8_i32 = arith.constant 8 : i32
    %126 = vector.broadcast %c8_i32 : i32 to vector<128x1xi32>
    %127 = arith.cmpi sge, %8, %126 : vector<128x1xi32>
    %c8_i32_87 = arith.constant 8 : i32
    %128 = tpu.dynamic_rotate %125 by %c8_i32_87 dim 0 : vector<128x128xf32>, i32 -> vector<128x128xf32>
    %cst_88 = arith.constant 0.000000e+00 : f32
    %129 = vector.shape_cast %127 : vector<128x1xi1> to vector<128x1xi1>
    %130 = vector.broadcast %129 : vector<128x1xi1> to vector<128x128xi1>
    %131 = vector.broadcast %cst_88 : f32 to vector<128x128xf32>
    %132 = arith.select %130, %128, %131 : vector<128x128xi1>, vector<128x128xf32>
    %c56_i32 = arith.constant 56 : i32
    %133 = vector.broadcast %c56_i32 : i32 to vector<128x1xi32>
    %134 = arith.cmpi slt, %8, %133 : vector<128x1xi32>
    %c120_i32 = arith.constant 120 : i32
    %135 = tpu.dynamic_rotate %125 by %c120_i32 dim 0 : vector<128x128xf32>, i32 -> vector<128x128xf32>
    %cst_89 = arith.constant 0.000000e+00 : f32
    %136 = vector.shape_cast %134 : vector<128x1xi1> to vector<128x1xi1>
    %137 = vector.broadcast %136 : vector<128x1xi1> to vector<128x128xi1>
    %138 = vector.broadcast %cst_89 : f32 to vector<128x128xf32>
    %139 = arith.select %137, %135, %138 : vector<128x128xi1>, vector<128x128xf32>
    %c0_90 = arith.constant 0 : index
    %c0_91 = arith.constant 0 : index
    %140 = vector.load %arg6[%c0_90, %c0_91] : memref<128x384xf32, #tpu.memory_space<vmem>>, vector<128x128xf32>
    tpu.vector_store %arg6[%c0_90, %c0_91], %132 {strides = array<i32>} : memref<128x384xf32, #tpu.memory_space<vmem>>, vector<128x128xf32>,
    %c0_92 = arith.constant 0 : index
    %c128_93 = arith.constant 128 : index
    %141 = vector.load %arg6[%c0_92, %c128_93] : memref<128x384xf32, #tpu.memory_space<vmem>>, vector<128x128xf32>
    tpu.vector_store %arg6[%c0_92, %c128_93], %125 {strides = array<i32>} : memref<128x384xf32, #tpu.memory_space<vmem>>, vector<128x128xf32>,
    %c0_94 = arith.constant 0 : index
    %c256_95 = arith.constant 256 : index
    %142 = vector.load %arg6[%c0_94, %c256_95] : memref<128x384xf32, #tpu.memory_space<vmem>>, vector<128x128xf32>
    tpu.vector_store %arg6[%c0_94, %c256_95], %139 {strides = array<i32>} : memref<128x384xf32, #tpu.memory_space<vmem>>, vector<128x128xf32>,
    %c0_96 = arith.constant 0 : index
    %c0_97 = arith.constant 0 : index
    %143 = vector.load %arg6[%c0_96, %c0_97] : memref<128x384xf32, #tpu.memory_space<vmem>>, vector<128x384xf32>
    %c4 = arith.constant 4 : index
    %c0_98 = arith.constant 0 : index
    %c0_99 = arith.constant 0 : index
    %144 = vector.load %arg3[%c4, %c0_98, %c0_99] : memref<8x384x128xf32, #tpu.memory_space<vmem>>, vector<1x384x128xf32>
    %145 = vector.shape_cast %144 : vector<1x384x128xf32> to vector<384x128xf32>
    %cst_100 = arith.constant dense<0.000000e+00> : vector<128x128xf32>
    %146 = tpu.matmul %143, %145, %cst_100 {dimension_numbers = #tpu.dot_dimension_numbers<[1], [0], [0], [1], [0, 0, 1, 1], [], []>} : vector<128x384xf32>, vector<384x128xf32>, vector<128x128xf32> -> vector<128x128xf32>
    %c4_101 = arith.constant 4 : index
    %c0_102 = arith.constant 0 : index
    %c0_103 = arith.constant 0 : index
    %147 = vector.load %arg4[%c4_101, %c0_102, %c0_103] : memref<8x1x128xf32, #tpu.memory_space<vmem>>, vector<1x1x128xf32>
    %148 = vector.shape_cast %147 : vector<1x1x128xf32> to vector<1x128xf32>
    %149 = vector.broadcast %148 : vector<1x128xf32> to vector<128x128xf32>
    %150 = arith.addf %146, %149 : vector<128x128xf32>
    %cst_104 = arith.constant 0.000000e+00 : f32
    %151 = vector.broadcast %cst_104 : f32 to vector<128x128xf32>
    %152 = arith.maximumf %150, %151 : vector<128x128xf32>
    %c8_i32_105 = arith.constant 8 : i32
    %153 = vector.broadcast %c8_i32_105 : i32 to vector<128x1xi32>
    %154 = arith.cmpi sge, %8, %153 : vector<128x1xi32>
    %c8_i32_106 = arith.constant 8 : i32
    %155 = tpu.dynamic_rotate %152 by %c8_i32_106 dim 0 : vector<128x128xf32>, i32 -> vector<128x128xf32>
    %cst_107 = arith.constant 0.000000e+00 : f32
    %156 = vector.shape_cast %154 : vector<128x1xi1> to vector<128x1xi1>
    %157 = vector.broadcast %156 : vector<128x1xi1> to vector<128x128xi1>
    %158 = vector.broadcast %cst_107 : f32 to vector<128x128xf32>
    %159 = arith.select %157, %155, %158 : vector<128x128xi1>, vector<128x128xf32>
    %c56_i32_108 = arith.constant 56 : i32
    %160 = vector.broadcast %c56_i32_108 : i32 to vector<128x1xi32>
    %161 = arith.cmpi slt, %8, %160 : vector<128x1xi32>
    %c120_i32_109 = arith.constant 120 : i32
    %162 = tpu.dynamic_rotate %152 by %c120_i32_109 dim 0 : vector<128x128xf32>, i32 -> vector<128x128xf32>
    %cst_110 = arith.constant 0.000000e+00 : f32
    %163 = vector.shape_cast %161 : vector<128x1xi1> to vector<128x1xi1>
    %164 = vector.broadcast %163 : vector<128x1xi1> to vector<128x128xi1>
    %165 = vector.broadcast %cst_110 : f32 to vector<128x128xf32>
    %166 = arith.select %164, %162, %165 : vector<128x128xi1>, vector<128x128xf32>
    %c0_111 = arith.constant 0 : index
    %c0_112 = arith.constant 0 : index
    %167 = vector.load %arg6[%c0_111, %c0_112] : memref<128x384xf32, #tpu.memory_space<vmem>>, vector<128x128xf32>
    tpu.vector_store %arg6[%c0_111, %c0_112], %159 {strides = array<i32>} : memref<128x384xf32, #tpu.memory_space<vmem>>, vector<128x128xf32>,
    %c0_113 = arith.constant 0 : index
    %c128_114 = arith.constant 128 : index
    %168 = vector.load %arg6[%c0_113, %c128_114] : memref<128x384xf32, #tpu.memory_space<vmem>>, vector<128x128xf32>
    tpu.vector_store %arg6[%c0_113, %c128_114], %152 {strides = array<i32>} : memref<128x384xf32, #tpu.memory_space<vmem>>, vector<128x128xf32>,
    %c0_115 = arith.constant 0 : index
    %c256_116 = arith.constant 256 : index
    %169 = vector.load %arg6[%c0_115, %c256_116] : memref<128x384xf32, #tpu.memory_space<vmem>>, vector<128x128xf32>
    tpu.vector_store %arg6[%c0_115, %c256_116], %166 {strides = array<i32>} : memref<128x384xf32, #tpu.memory_space<vmem>>, vector<128x128xf32>,
    %c0_117 = arith.constant 0 : index
    %c0_118 = arith.constant 0 : index
    %170 = vector.load %arg6[%c0_117, %c0_118] : memref<128x384xf32, #tpu.memory_space<vmem>>, vector<128x384xf32>
    %c5 = arith.constant 5 : index
    %c0_119 = arith.constant 0 : index
    %c0_120 = arith.constant 0 : index
    %171 = vector.load %arg3[%c5, %c0_119, %c0_120] : memref<8x384x128xf32, #tpu.memory_space<vmem>>, vector<1x384x128xf32>
    %172 = vector.shape_cast %171 : vector<1x384x128xf32> to vector<384x128xf32>
    %cst_121 = arith.constant dense<0.000000e+00> : vector<128x128xf32>
    %173 = tpu.matmul %170, %172, %cst_121 {dimension_numbers = #tpu.dot_dimension_numbers<[1], [0], [0], [1], [0, 0, 1, 1], [], []>} : vector<128x384xf32>, vector<384x128xf32>, vector<128x128xf32> -> vector<128x128xf32>
    %c5_122 = arith.constant 5 : index
    %c0_123 = arith.constant 0 : index
    %c0_124 = arith.constant 0 : index
    %174 = vector.load %arg4[%c5_122, %c0_123, %c0_124] : memref<8x1x128xf32, #tpu.memory_space<vmem>>, vector<1x1x128xf32>
    %175 = vector.shape_cast %174 : vector<1x1x128xf32> to vector<1x128xf32>
    %176 = vector.broadcast %175 : vector<1x128xf32> to vector<128x128xf32>
    %177 = arith.addf %173, %176 : vector<128x128xf32>
    %178 = arith.addf %177, %125 : vector<128x128xf32>
    %cst_125 = arith.constant 0.000000e+00 : f32
    %179 = vector.broadcast %cst_125 : f32 to vector<128x128xf32>
    %180 = arith.maximumf %178, %179 : vector<128x128xf32>
    %c16_i32 = arith.constant 16 : i32
    %181 = vector.broadcast %c16_i32 : i32 to vector<128x1xi32>
    %182 = arith.cmpi sge, %8, %181 : vector<128x1xi32>
    %c16_i32_126 = arith.constant 16 : i32
    %183 = tpu.dynamic_rotate %180 by %c16_i32_126 dim 0 : vector<128x128xf32>, i32 -> vector<128x128xf32>
    %cst_127 = arith.constant 0.000000e+00 : f32
    %184 = vector.shape_cast %182 : vector<128x1xi1> to vector<128x1xi1>
    %185 = vector.broadcast %184 : vector<128x1xi1> to vector<128x128xi1>
    %186 = vector.broadcast %cst_127 : f32 to vector<128x128xf32>
    %187 = arith.select %185, %183, %186 : vector<128x128xi1>, vector<128x128xf32>
    %c48_i32 = arith.constant 48 : i32
    %188 = vector.broadcast %c48_i32 : i32 to vector<128x1xi32>
    %189 = arith.cmpi slt, %8, %188 : vector<128x1xi32>
    %c112_i32 = arith.constant 112 : i32
    %190 = tpu.dynamic_rotate %180 by %c112_i32 dim 0 : vector<128x128xf32>, i32 -> vector<128x128xf32>
    %cst_128 = arith.constant 0.000000e+00 : f32
    %191 = vector.shape_cast %189 : vector<128x1xi1> to vector<128x1xi1>
    %192 = vector.broadcast %191 : vector<128x1xi1> to vector<128x128xi1>
    %193 = vector.broadcast %cst_128 : f32 to vector<128x128xf32>
    %194 = arith.select %192, %190, %193 : vector<128x128xi1>, vector<128x128xf32>
    %c0_129 = arith.constant 0 : index
    %c0_130 = arith.constant 0 : index
    %195 = vector.load %arg6[%c0_129, %c0_130] : memref<128x384xf32, #tpu.memory_space<vmem>>, vector<128x128xf32>
    tpu.vector_store %arg6[%c0_129, %c0_130], %187 {strides = array<i32>} : memref<128x384xf32, #tpu.memory_space<vmem>>, vector<128x128xf32>,
    %c0_131 = arith.constant 0 : index
    %c128_132 = arith.constant 128 : index
    %196 = vector.load %arg6[%c0_131, %c128_132] : memref<128x384xf32, #tpu.memory_space<vmem>>, vector<128x128xf32>
    tpu.vector_store %arg6[%c0_131, %c128_132], %180 {strides = array<i32>} : memref<128x384xf32, #tpu.memory_space<vmem>>, vector<128x128xf32>,
    %c0_133 = arith.constant 0 : index
    %c256_134 = arith.constant 256 : index
    %197 = vector.load %arg6[%c0_133, %c256_134] : memref<128x384xf32, #tpu.memory_space<vmem>>, vector<128x128xf32>
    tpu.vector_store %arg6[%c0_133, %c256_134], %194 {strides = array<i32>} : memref<128x384xf32, #tpu.memory_space<vmem>>, vector<128x128xf32>,
    %c0_135 = arith.constant 0 : index
    %c0_136 = arith.constant 0 : index
    %198 = vector.load %arg6[%c0_135, %c0_136] : memref<128x384xf32, #tpu.memory_space<vmem>>, vector<128x384xf32>
    %c6 = arith.constant 6 : index
    %c0_137 = arith.constant 0 : index
    %c0_138 = arith.constant 0 : index
    %199 = vector.load %arg3[%c6, %c0_137, %c0_138] : memref<8x384x128xf32, #tpu.memory_space<vmem>>, vector<1x384x128xf32>
    %200 = vector.shape_cast %199 : vector<1x384x128xf32> to vector<384x128xf32>
    %cst_139 = arith.constant dense<0.000000e+00> : vector<128x128xf32>
    %201 = tpu.matmul %198, %200, %cst_139 {dimension_numbers = #tpu.dot_dimension_numbers<[1], [0], [0], [1], [0, 0, 1, 1], [], []>} : vector<128x384xf32>, vector<384x128xf32>, vector<128x128xf32> -> vector<128x128xf32>
    %c6_140 = arith.constant 6 : index
    %c0_141 = arith.constant 0 : index
    %c0_142 = arith.constant 0 : index
    %202 = vector.load %arg4[%c6_140, %c0_141, %c0_142] : memref<8x1x128xf32, #tpu.memory_space<vmem>>, vector<1x1x128xf32>
    %203 = vector.shape_cast %202 : vector<1x1x128xf32> to vector<1x128xf32>
    %204 = vector.broadcast %203 : vector<1x128xf32> to vector<128x128xf32>
    %205 = arith.addf %201, %204 : vector<128x128xf32>
    %cst_143 = arith.constant 0.000000e+00 : f32
    %206 = vector.broadcast %cst_143 : f32 to vector<128x128xf32>
    %207 = arith.maximumf %205, %206 : vector<128x128xf32>
    %c16_i32_144 = arith.constant 16 : i32
    %208 = vector.broadcast %c16_i32_144 : i32 to vector<128x1xi32>
    %209 = arith.cmpi sge, %8, %208 : vector<128x1xi32>
    %c16_i32_145 = arith.constant 16 : i32
    %210 = tpu.dynamic_rotate %207 by %c16_i32_145 dim 0 : vector<128x128xf32>, i32 -> vector<128x128xf32>
    %cst_146 = arith.constant 0.000000e+00 : f32
    %211 = vector.shape_cast %209 : vector<128x1xi1> to vector<128x1xi1>
    %212 = vector.broadcast %211 : vector<128x1xi1> to vector<128x128xi1>
    %213 = vector.broadcast %cst_146 : f32 to vector<128x128xf32>
    %214 = arith.select %212, %210, %213 : vector<128x128xi1>, vector<128x128xf32>
    %c48_i32_147 = arith.constant 48 : i32
    %215 = vector.broadcast %c48_i32_147 : i32 to vector<128x1xi32>
    %216 = arith.cmpi slt, %8, %215 : vector<128x1xi32>
    %c112_i32_148 = arith.constant 112 : i32
    %217 = tpu.dynamic_rotate %207 by %c112_i32_148 dim 0 : vector<128x128xf32>, i32 -> vector<128x128xf32>
    %cst_149 = arith.constant 0.000000e+00 : f32
    %218 = vector.shape_cast %216 : vector<128x1xi1> to vector<128x1xi1>
    %219 = vector.broadcast %218 : vector<128x1xi1> to vector<128x128xi1>
    %220 = vector.broadcast %cst_149 : f32 to vector<128x128xf32>
    %221 = arith.select %219, %217, %220 : vector<128x128xi1>, vector<128x128xf32>
    %c0_150 = arith.constant 0 : index
    %c0_151 = arith.constant 0 : index
    %222 = vector.load %arg6[%c0_150, %c0_151] : memref<128x384xf32, #tpu.memory_space<vmem>>, vector<128x128xf32>
    tpu.vector_store %arg6[%c0_150, %c0_151], %214 {strides = array<i32>} : memref<128x384xf32, #tpu.memory_space<vmem>>, vector<128x128xf32>,
    %c0_152 = arith.constant 0 : index
    %c128_153 = arith.constant 128 : index
    %223 = vector.load %arg6[%c0_152, %c128_153] : memref<128x384xf32, #tpu.memory_space<vmem>>, vector<128x128xf32>
    tpu.vector_store %arg6[%c0_152, %c128_153], %207 {strides = array<i32>} : memref<128x384xf32, #tpu.memory_space<vmem>>, vector<128x128xf32>,
    %c0_154 = arith.constant 0 : index
    %c256_155 = arith.constant 256 : index
    %224 = vector.load %arg6[%c0_154, %c256_155] : memref<128x384xf32, #tpu.memory_space<vmem>>, vector<128x128xf32>
    tpu.vector_store %arg6[%c0_154, %c256_155], %221 {strides = array<i32>} : memref<128x384xf32, #tpu.memory_space<vmem>>, vector<128x128xf32>,
    %c0_156 = arith.constant 0 : index
    %c0_157 = arith.constant 0 : index
    %225 = vector.load %arg6[%c0_156, %c0_157] : memref<128x384xf32, #tpu.memory_space<vmem>>, vector<128x384xf32>
    %c7 = arith.constant 7 : index
    %c0_158 = arith.constant 0 : index
    %c0_159 = arith.constant 0 : index
    %226 = vector.load %arg3[%c7, %c0_158, %c0_159] : memref<8x384x128xf32, #tpu.memory_space<vmem>>, vector<1x384x128xf32>
    %227 = vector.shape_cast %226 : vector<1x384x128xf32> to vector<384x128xf32>
    %cst_160 = arith.constant dense<0.000000e+00> : vector<128x128xf32>
    %228 = tpu.matmul %225, %227, %cst_160 {dimension_numbers = #tpu.dot_dimension_numbers<[1], [0], [0], [1], [0, 0, 1, 1], [], []>} : vector<128x384xf32>, vector<384x128xf32>, vector<128x128xf32> -> vector<128x128xf32>
    %c7_161 = arith.constant 7 : index
    %c0_162 = arith.constant 0 : index
    %c0_163 = arith.constant 0 : index
    %229 = vector.load %arg4[%c7_161, %c0_162, %c0_163] : memref<8x1x128xf32, #tpu.memory_space<vmem>>, vector<1x1x128xf32>
    %230 = vector.shape_cast %229 : vector<1x1x128xf32> to vector<1x128xf32>
    %231 = vector.broadcast %230 : vector<1x128xf32> to vector<128x128xf32>
    %232 = arith.addf %228, %231 : vector<128x128xf32>
    %233 = arith.addf %232, %180 : vector<128x128xf32>
    %cst_164 = arith.constant 0.000000e+00 : f32
    %234 = vector.broadcast %cst_164 : f32 to vector<128x128xf32>
    %235 = arith.maximumf %233, %234 : vector<128x128xf32>
    %236 = vector.extract_strided_slice %235 {offsets = [0, 0], sizes = [64, 128], strides = [1, 1]} : vector<128x128xf32> to vector<64x128xf32>
    %237 = tpu.transpose %236, [1, 0] : vector<64x128xf32> -> vector<128x64xf32>
    %c0_165 = arith.constant 0 : index
    %c0_166 = arith.constant 0 : index
    %c0_167 = arith.constant 0 : index
    %238 = vector.load %arg5[%c0_165, %c0_166, %c0_167] : memref<2x128x64xf32, #tpu.memory_space<vmem>>, vector<1x128x64xf32>
    %239 = vector.shape_cast %238 : vector<1x128x64xf32> to vector<128x64xf32>
    %240 = vector.shape_cast %237 : vector<128x64xf32> to vector<1x128x64xf32>
    tpu.vector_store %arg5[%c0_165, %c0_166, %c0_167], %240 {strides = array<i32>} : memref<2x128x64xf32, #tpu.memory_space<vmem>>, vector<1x128x64xf32>,
    %241 = vector.extract_strided_slice %235 {offsets = [64, 0], sizes = [64, 128], strides = [1, 1]} : vector<128x128xf32> to vector<64x128xf32>
    %242 = tpu.transpose %241, [1, 0] : vector<64x128xf32> -> vector<128x64xf32>
    %c1_168 = arith.constant 1 : index
    %c0_169 = arith.constant 0 : index
    %c0_170 = arith.constant 0 : index
    %243 = vector.load %arg5[%c1_168, %c0_169, %c0_170] : memref<2x128x64xf32, #tpu.memory_space<vmem>>, vector<1x128x64xf32>
    %244 = vector.shape_cast %243 : vector<1x128x64xf32> to vector<128x64xf32>
    %245 = vector.shape_cast %242 : vector<128x64xf32> to vector<1x128x64xf32>
    tpu.vector_store %arg5[%c1_168, %c0_169, %c0_170], %245 {strides = array<i32>} : memref<2x128x64xf32, #tpu.memory_space<vmem>>, vector<1x128x64xf32>,
    return
  }
}

</mosaic_0001>

<llo_original>
// kernel: forward.1
$region0: #{forward.1}
  #allocation0 [shape = 'u32[]', space=smem, size = 0x4, offset = 0x4, fixed_abs, tag = 'smem constant byte address 0x4 - core index']
  #allocation1 [shape = 'u32[144,128]{1,0:T(1,128)}', space=vmem, size = 0x12000, scoped, tag = 'internal scratch']
  #allocation2 [shape = 'f32[128,384]{1,0:T(8,128)}', space=vmem, size = 0x30000, scoped, tag = 'scratch operand']
  %s0 = inlined_call_operand.vmem [shape: f32[2,128,64], index: 0, kind: input, shape index: {}]
  %s1 = inlined_call_operand.hbm [shape: f32[128,128], index: 1, kind: input, shape index: {}]
  %s2 = inlined_call_operand.hbm [shape: f32[1,128], index: 2, kind: input, shape index: {}]
  %s3 = inlined_call_operand.hbm [shape: f32[8,384,128], index: 3, kind: input, shape index: {}]
  %s4 = inlined_call_operand.hbm [shape: f32[8,1,128], index: 4, kind: input, shape index: {}]
  %s5 = inlined_call_operand.vmem [shape: f32[2,128,64], index: 5, kind: output, shape index: {}]
  %s6 = sld [smem:[#allocation0]]
  $region46: #{forward.1} parent=0
    _
  %s8 = ssub.s32 1, %s6
  %s9 = scalar_select 0, %s8, %s6
  $region1: #{forward.1} parent=0
    #allocation3 [shape = 'u8[65536]{0}', space=vmem, size = 0x10000, scoped, tag = 'input window, operand 1, single buffered']
    #allocation4 [shape = 's32[1]{0}', space=sflag, size = 0x4, scoped, tag = 'scoped memory for forward.1']
    #allocation5 [shape = 'u8[512]{0}', space=vmem, size = 0x400, scoped, tag = 'input window, operand 2, single buffered']
    #allocation6 [shape = 's32[1]{0}', space=sflag, size = 0x4, scoped, tag = 'scoped memory for forward.1']
    #allocation7 [shape = 'u8[1572864]{0}', space=vmem, size = 0x180000, scoped, tag = 'input window, operand 3, single buffered']
    #allocation8 [shape = 'u8[4096]{0}', space=vmem, size = 0x1000, scoped, tag = 'input window, operand 4, single buffered']
    #allocation9 [shape = 's32[1]{0}', space=sflag, size = 0x4, scoped, tag = 'scoped memory for forward.1']
    %10 = vsyncpa [#allocation4], 0
    %11 = vsyncpa [#allocation6], 0
    %12 = vsyncpa [#allocation9], 0
    // Predicated region
    $region2: #{forward.1} parent=1 // pred_check
      _
    $region3: #{forward.1} parent=1 // pred_check_branch
      %14 = sbr.rel (0) target = $region5
    $region4: #{forward.1} parent=1 // pred_region
      _
    $region5: #{forward.1} parent=1 // pred_fallthru
      _
    // Predicated region
    $region6: #{forward.1} parent=1 // pred_check
      _
    $region7: #{forward.1} parent=1 // pred_check_branch
      %16 = sbr.rel (0) target = $region9
    $region8: #{forward.1} parent=1 // pred_region
      %s18 = ssub.s32 2048, 2048
      %19 = vsyncadd [#allocation4], %s18
      %s20 = sshll.u32 [#allocation3], 4
      %s21 = int_to_ptr.vmem [resolvable:$true] %s20
      %26 = dma.hbm_to_vmem [thread:$0]  %s1, 2048, %s21, [#allocation4], 128, 128, 8
    $region9: #{forward.1} parent=1 // pred_fallthru
      _
    // Predicated region
    $region10: #{forward.1} parent=1 // pred_check
      _
    $region11: #{forward.1} parent=1 // pred_check_branch
      %28 = sbr.rel (0) target = $region13
    $region12: #{forward.1} parent=1 // pred_region
      %s30 = ssub.s32 16, 16
      %31 = vsyncadd [#allocation6], %s30
      %s33 = sshll.u32 [#allocation5], 4
      %s34 = int_to_ptr.vmem [resolvable:$true] %s33
      %36 = dma.hbm_to_vmem [thread:$0]  %s2, 16, %s34, [#allocation6]
    $region13: #{forward.1} parent=1 // pred_fallthru
      _
    // Predicated region
    $region14: #{forward.1} parent=1 // pred_check
      _
    $region15: #{forward.1} parent=1 // pred_check_branch
      %38 = sbr.rel (0) target = $region17
    $region16: #{forward.1} parent=1 // pred_region
      %s40 = ssub.s32 49152, 49152
      %41 = vsyncadd [#allocation6], %s40
      %s42 = sshll.u32 [#allocation7], 4
      %s43 = int_to_ptr.vmem [resolvable:$true] %s42
      %48 = dma.hbm_to_vmem [thread:$0]  %s3, 49152, %s43, [#allocation6], 128, 128, 8
    $region17: #{forward.1} parent=1 // pred_fallthru
      _
    // Predicated region
    $region18: #{forward.1} parent=1 // pred_check
      _
    $region19: #{forward.1} parent=1 // pred_check_branch
      %50 = sbr.rel (0) target = $region21
    $region20: #{forward.1} parent=1 // pred_region
      %s52 = ssub.s32 128, 128
      %53 = vsyncadd [#allocation9], %s52
      %s54 = sshll.u32 [#allocation8], 4
      %s55 = int_to_ptr.vmem [resolvable:$true] %s54
      %60 = dma.hbm_to_vmem [thread:$0]  %s4, 128, %s55, [#allocation9], 16, 16, 1
    $region21: #{forward.1} parent=1 // pred_fallthru
      _
    // Predicated region
    $region22: #{forward.1} parent=1 // pred_check
      _
    $region23: #{forward.1} parent=1 // pred_check_branch
      %62 = sbr.rel (0) target = $region25
    $region24: #{forward.1} parent=1 // pred_region
      %63 = dma.done [#allocation4], 2048
    $region25: #{forward.1} parent=1 // pred_fallthru
      _
    // Predicated region
    $region26: #{forward.1} parent=1 // pred_check
      _
    $region27: #{forward.1} parent=1 // pred_check_branch
      %65 = sbr.rel (0) target = $region29
    $region28: #{forward.1} parent=1 // pred_region
      %66 = dma.done [#allocation6], 16
    $region29: #{forward.1} parent=1 // pred_fallthru
      _
    // Predicated region
    $region30: #{forward.1} parent=1 // pred_check
      _
    $region31: #{forward.1} parent=1 // pred_check_branch
      %68 = sbr.rel (0) target = $region33
    $region32: #{forward.1} parent=1 // pred_region
      %69 = dma.done [#allocation6], 49152
    $region33: #{forward.1} parent=1 // pred_fallthru
      _
    // Predicated region
    $region34: #{forward.1} parent=1 // pred_check
      _
    $region35: #{forward.1} parent=1 // pred_check_branch
      %71 = sbr.rel (0) target = $region37
    $region36: #{forward.1} parent=1 // pred_region
      %72 = dma.done [#allocation9], 128
    $region37: #{forward.1} parent=1 // pred_fallthru
      _
    %v73 = vld [vmem:[%s0] sm:$0xff]
    %v74 = vld [vmem:[%s0 + $0x8] sm:$0xff]
    %v75 = vld [vmem:[%s0 + $0x10] sm:$0xff]
    %v76 = vld [vmem:[%s0 + $0x18] sm:$0xff]
    %v77 = vld [vmem:[%s0 + $0x20] sm:$0xff]
    %v78 = vld [vmem:[%s0 + $0x28] sm:$0xff]
    %v79 = vld [vmem:[%s0 + $0x30] sm:$0xff]
    %v80 = vld [vmem:[%s0 + $0x38] sm:$0xff]
    %v81 = vld [vmem:[%s0 + $0x40] sm:$0xff]
    %v82 = vld [vmem:[%s0 + $0x48] sm:$0xff]
    %v83 = vld [vmem:[%s0 + $0x50] sm:$0xff]
    %v84 = vld [vmem:[%s0 + $0x58] sm:$0xff]
    %v85 = vld [vmem:[%s0 + $0x60] sm:$0xff]
    %v86 = vld [vmem:[%s0 + $0x68] sm:$0xff]
    %v87 = vld [vmem:[%s0 + $0x70] sm:$0xff]
    %v88 = vld [vmem:[%s0 + $0x78] sm:$0xff]
    %89 = vxpose.xlu0.b32.start [1/16] %v73, 128
    %90 = vxpose.xlu0.b32.cont [2/16] %v74, 128
    %91 = vxpose.xlu0.b32.cont [3/16] %v75, 128
    %92 = vxpose.xlu0.b32.cont [4/16] %v76, 128
    %93 = vxpose.xlu0.b32.cont [5/16] %v77, 128
    %94 = vxpose.xlu0.b32.cont [6/16] %v78, 128
    %95 = vxpose.xlu0.b32.cont [7/16] %v79, 128
    %96 = vxpose.xlu0.b32.cont [8/16] %v80, 128
    %97 = vxpose.xlu0.b32.cont [9/16] %v81, 128
    %98 = vxpose.xlu0.b32.cont [10/16] %v82, 128
    %99 = vxpose.xlu0.b32.cont [11/16] %v83, 128
    %100 = vxpose.xlu0.b32.cont [12/16] %v84, 128
    %101 = vxpose.xlu0.b32.cont [13/16] %v85, 128
    %102 = vxpose.xlu0.b32.cont [14/16] %v86, 128
    %103 = vxpose.xlu0.b32.cont [15/16] %v87, 128
    %104 = vxpose.xlu0.b32.end [16/16] %v88, 128
    %v105 = vpop.trf.xlu0
    %v106 = vpop.trf.xlu0
    %v107 = vpop.trf.xlu0
    %v108 = vpop.trf.xlu0
    %v109 = vpop.trf.xlu0
    %v110 = vpop.trf.xlu0
    %v111 = vpop.trf.xlu0
    %v112 = vpop.trf.xlu0
    %v113 = vpop.trf.xlu0
    %v114 = vpop.trf.xlu0
    %v115 = vpop.trf.xlu0
    %v116 = vpop.trf.xlu0
    %v117 = vpop.trf.xlu0
    %v118 = vpop.trf.xlu0
    %v119 = vpop.trf.xlu0
    %v120 = vpop.trf.xlu0
    %s121 = scalar_lea.vmem %s0, 128
    %v122 = vld [vmem:[%s121] sm:$0xff]
    %v123 = vld [vmem:[%s121 + $0x8] sm:$0xff]
    %v124 = vld [vmem:[%s121 + $0x10] sm:$0xff]
    %v125 = vld [vmem:[%s121 + $0x18] sm:$0xff]
    %v126 = vld [vmem:[%s121 + $0x20] sm:$0xff]
    %v127 = vld [vmem:[%s121 + $0x28] sm:$0xff]
    %v128 = vld [vmem:[%s121 + $0x30] sm:$0xff]
    %v129 = vld [vmem:[%s121 + $0x38] sm:$0xff]
    %v130 = vld [vmem:[%s121 + $0x40] sm:$0xff]
    %v131 = vld [vmem:[%s121 + $0x48] sm:$0xff]
    %v132 = vld [vmem:[%s121 + $0x50] sm:$0xff]
    %v133 = vld [vmem:[%s121 + $0x58] sm:$0xff]
    %v134 = vld [vmem:[%s121 + $0x60] sm:$0xff]
    %v135 = vld [vmem:[%s121 + $0x68] sm:$0xff]
    %v136 = vld [vmem:[%s121 + $0x70] sm:$0xff]
    %v137 = vld [vmem:[%s121 + $0x78] sm:$0xff]
    %138 = vxpose.xlu0.b32.start [1/16] %v122, 128
    %139 = vxpose.xlu0.b32.cont [2/16] %v123, 128
    %140 = vxpose.xlu0.b32.cont [3/16] %v124, 128
    %141 = vxpose.xlu0.b32.cont [4/16] %v125, 128
    %142 = vxpose.xlu0.b32.cont [5/16] %v126, 128
    %143 = vxpose.xlu0.b32.cont [6/16] %v127, 128
    %144 = vxpose.xlu0.b32.cont [7/16] %v128, 128
    %145 = vxpose.xlu0.b32.cont [8/16] %v129, 128
    %146 = vxpose.xlu0.b32.cont [9/16] %v130, 128
    %147 = vxpose.xlu0.b32.cont [10/16] %v131, 128
    %148 = vxpose.xlu0.b32.cont [11/16] %v132, 128
    %149 = vxpose.xlu0.b32.cont [12/16] %v133, 128
    %150 = vxpose.xlu0.b32.cont [13/16] %v134, 128
    %151 = vxpose.xlu0.b32.cont [14/16] %v135, 128
    %152 = vxpose.xlu0.b32.cont [15/16] %v136, 128
    %153 = vxpose.xlu0.b32.end [16/16] %v137, 128
    %v154 = vpop.trf.xlu0
    %v155 = vpop.trf.xlu0
    %v156 = vpop.trf.xlu0
    %v157 = vpop.trf.xlu0
    %v158 = vpop.trf.xlu0
    %v159 = vpop.trf.xlu0
    %v160 = vpop.trf.xlu0
    %v161 = vpop.trf.xlu0
    %v162 = vpop.trf.xlu0
    %v163 = vpop.trf.xlu0
    %v164 = vpop.trf.xlu0
    %v165 = vpop.trf.xlu0
    %v166 = vpop.trf.xlu0
    %v167 = vpop.trf.xlu0
    %v168 = vpop.trf.xlu0
    %v169 = vpop.trf.xlu0
    %v170 = vlaneseq
    %v171 = vshrl.u32 %v170, 7
    %v172 = vadd.s32 %v171, 8
    %v173 = vadd.s32 %v171, 16
    %v174 = vadd.s32 %v171, 24
    %v175 = vadd.s32 %v171, 32
    %v176 = vadd.s32 %v171, 40
    %v177 = vadd.s32 %v171, 48
    %v178 = vadd.s32 %v171, 56
    %v179 = vld [vmem:[#allocation3] sm:$0xff]
    %v180 = vld [vmem:[#allocation3 + $0x8] sm:$0xff]
    %v181 = vld [vmem:[#allocation3 + $0x10] sm:$0xff]
    %v182 = vld [vmem:[#allocation3 + $0x18] sm:$0xff]
    %v183 = vld [vmem:[#allocation3 + $0x20] sm:$0xff]
    %v184 = vld [vmem:[#allocation3 + $0x28] sm:$0xff]
    %v185 = vld [vmem:[#allocation3 + $0x30] sm:$0xff]
    %v186 = vld [vmem:[#allocation3 + $0x38] sm:$0xff]
    %v187 = vld [vmem:[#allocation3 + $0x40] sm:$0xff]
    %v188 = vld [vmem:[#allocation3 + $0x48] sm:$0xff]
    %v189 = vld [vmem:[#allocation3 + $0x50] sm:$0xff]
    %v190 = vld [vmem:[#allocation3 + $0x58] sm:$0xff]
    %v191 = vld [vmem:[#allocation3 + $0x60] sm:$0xff]
    %v192 = vld [vmem:[#allocation3 + $0x68] sm:$0xff]
    %v193 = vld [vmem:[#allocation3 + $0x70] sm:$0xff]
    %v194 = vld [vmem:[#allocation3 + $0x78] sm:$0xff]
    %v195 = vld [vmem:[#allocation5] sm:$0x1]
    %v197 = vlaneseq
    %v198 = vshrl.u32 %v197, 7
    %v199 = vsub.s32 0, %v198
    %v200 = vrot.slane %v195, %v199
    %202 = vmatprep.subr.mxu0 0.0
    %203 = vmatpush1.msra.mxu0 %v194
    %204 = vmatprep.subr.mxu0 0.0
    %205 = vmatpush1.msra.mxu0 %v193
    %206 = vmatprep.subr.mxu0 0.0
    %207 = vmatpush1.msra.mxu0 %v192
    %208 = vmatprep.subr.mxu0 0.0
    %209 = vmatpush1.msra.mxu0 %v191
    %210 = vmatprep.subr.mxu0 0.0
    %211 = vmatpush1.msra.mxu0 %v190
    %212 = vmatprep.subr.mxu0 0.0
    %213 = vmatpush1.msra.mxu0 %v189
    %214 = vmatprep.subr.mxu0 0.0
    %215 = vmatpush1.msra.mxu0 %v188
    %216 = vmatprep.subr.mxu0 0.0
    %217 = vmatpush1.msra.mxu0 %v187
    %218 = vmatprep.subr.mxu0 0.0
    %219 = vmatpush1.msra.mxu0 %v186
    %220 = vmatprep.subr.mxu0 0.0
    %221 = vmatpush1.msra.mxu0 %v185
    %222 = vmatprep.subr.mxu0 0.0
    %223 = vmatpush1.msra.mxu0 %v184
    %224 = vmatprep.subr.mxu0 0.0
    %225 = vmatpush1.msra.mxu0 %v183
    %226 = vmatprep.subr.mxu0 0.0
    %227 = vmatpush1.msra.mxu0 %v182
    %228 = vmatprep.subr.mxu0 0.0
    %229 = vmatpush1.msra.mxu0 %v181
    %230 = vmatprep.subr.mxu0 0.0
    %231 = vmatpush1.msra.mxu0 %v180
    %232 = vmatprep.subr.mxu0 0.0
    %233 = vmatpush1.msra.mxu0 %v179
    %234 = vmatprep.subr.mxu0 0.0
    %235 = vmatpush2.msra.mxu0 0.0
    %236 = vmatprep.subr.mxu0 0.0
    %237 = vmatpush2.msra.mxu0 0.0
    %238 = vmatprep.subr.mxu0 0.0
    %239 = vmatpush2.msra.mxu0 0.0
    %240 = vmatprep.subr.mxu0 0.0
    %241 = vmatpush2.msra.mxu0 0.0
    %242 = vmatprep.subr.mxu0 0.0
    %243 = vmatpush2.msra.mxu0 0.0
    %244 = vmatprep.subr.mxu0 0.0
    %245 = vmatpush2.msra.mxu0 0.0
    %246 = vmatprep.subr.mxu0 0.0
    %247 = vmatpush2.msra.mxu0 0.0
    %248 = vmatprep.subr.mxu0 0.0
    %249 = vmatpush2.msra.mxu0 0.0
    %250 = vmatprep.subr.mxu0 0.0
    %251 = vmatpush2.msra.mxu0 0.0
    %252 = vmatprep.subr.mxu0 0.0
    %253 = vmatpush2.msra.mxu0 0.0
    %254 = vmatprep.subr.mxu0 0.0
    %255 = vmatpush2.msra.mxu0 0.0
    %256 = vmatprep.subr.mxu0 0.0
    %257 = vmatpush2.msra.mxu0 0.0
    %258 = vmatprep.subr.mxu0 0.0
    %259 = vmatpush2.msra.mxu0 0.0
    %260 = vmatprep.subr.mxu0 0.0
    %261 = vmatpush2.msra.mxu0 0.0
    %262 = vmatprep.subr.mxu0 0.0
    %263 = vmatpush2.msra.mxu0 0.0
    %264 = vmatprep.subr.mxu0 0.0
    %265 = vmatpush2.msra.mxu0 0.0
    %266 = vmatprep.mubr.f32.mxu0 0.0
    %267 = vmatmul.mubr.f32.gmra.mxu0 %v105
    %v268 = vpop.f32.mrf.mxu0
    %v269 = vadd.f32 %v200, %v268
    %v270 = vpop.f32.mrf.mxu0
    %271 = vmatprep.mubr.f32.mxu0 0.0
    %272 = vmatmul.mubr.f32.gmra.mxu0 %v106
    %v273 = vpop.f32.mrf.mxu0
    %v274 = vadd.f32 %v200, %v273
    %v275 = vpop.f32.mrf.mxu0
    %276 = vmatprep.mubr.f32.mxu0 0.0
    %277 = vmatmul.mubr.f32.gmra.mxu0 %v107
    %v278 = vpop.f32.mrf.mxu0
    %v279 = vadd.f32 %v200, %v278
    %v280 = vpop.f32.mrf.mxu0
    %281 = vmatprep.mubr.f32.mxu0 0.0
    %282 = vmatmul.mubr.f32.gmra.mxu0 %v108
    %v283 = vpop.f32.mrf.mxu0
    %v284 = vadd.f32 %v200, %v283
    %v285 = vpop.f32.mrf.mxu0
    %286 = vmatprep.mubr.f32.mxu0 0.0
    %287 = vmatmul.mubr.f32.gmra.mxu0 %v109
    %v288 = vpop.f32.mrf.mxu0
    %v289 = vadd.f32 %v200, %v288
    %v290 = vpop.f32.mrf.mxu0
    %291 = vmatprep.mubr.f32.mxu0 0.0
    %292 = vmatmul.mubr.f32.gmra.mxu0 %v110
    %v293 = vpop.f32.mrf.mxu0
    %v294 = vadd.f32 %v200, %v293
    %v295 = vpop.f32.mrf.mxu0
    %296 = vmatprep.mubr.f32.mxu0 0.0
    %297 = vmatmul.mubr.f32.gmra.mxu0 %v111
    %v298 = vpop.f32.mrf.mxu0
    %v299 = vadd.f32 %v200, %v298
    %v300 = vpop.f32.mrf.mxu0
    %301 = vmatprep.mubr.f32.mxu0 0.0
    %302 = vmatmul.mubr.f32.gmra.mxu0 %v112
    %v303 = vpop.f32.mrf.mxu0
    %v304 = vadd.f32 %v200, %v303
    %v305 = vpop.f32.mrf.mxu0
    %306 = vmatprep.mubr.f32.mxu0 0.0
    %307 = vmatmul.mubr.f32.gmra.mxu0 %v154
    %v308 = vpop.f32.mrf.mxu0
    %v309 = vadd.f32 %v200, %v308
    %v310 = vpop.f32.mrf.mxu0
    %311 = vmatprep.mubr.f32.mxu0 0.0
    %312 = vmatmul.mubr.f32.gmra.mxu0 %v155
    %v313 = vpop.f32.mrf.mxu0
    %v314 = vadd.f32 %v200, %v313
    %v315 = vpop.f32.mrf.mxu0
    %316 = vmatprep.mubr.f32.mxu0 0.0
    %317 = vmatmul.mubr.f32.gmra.mxu0 %v156
    %v318 = vpop.f32.mrf.mxu0
    %v319 = vadd.f32 %v200, %v318
    %v320 = vpop.f32.mrf.mxu0
    %321 = vmatprep.mubr.f32.mxu0 0.0
    %322 = vmatmul.mubr.f32.gmra.mxu0 %v157
    %v323 = vpop.f32.mrf.mxu0
    %v324 = vadd.f32 %v200, %v323
    %v325 = vpop.f32.mrf.mxu0
    %326 = vmatprep.mubr.f32.mxu0 0.0
    %327 = vmatmul.mubr.f32.gmra.mxu0 %v158
    %v328 = vpop.f32.mrf.mxu0
    %v329 = vadd.f32 %v200, %v328
    %v330 = vpop.f32.mrf.mxu0
    %331 = vmatprep.mubr.f32.mxu0 0.0
    %332 = vmatmul.mubr.f32.gmra.mxu0 %v159
    %v333 = vpop.f32.mrf.mxu0
    %v334 = vadd.f32 %v200, %v333
    %v335 = vpop.f32.mrf.mxu0
    %336 = vmatprep.mubr.f32.mxu0 0.0
    %337 = vmatmul.mubr.f32.gmra.mxu0 %v160
    %v338 = vpop.f32.mrf.mxu0
    %v339 = vadd.f32 %v200, %v338
    %v340 = vpop.f32.mrf.mxu0
    %341 = vmatprep.mubr.f32.mxu0 0.0
    %342 = vmatmul.mubr.f32.gmra.mxu0 %v161
    %v343 = vpop.f32.mrf.mxu0
    %v344 = vadd.f32 %v200, %v343
    %v345 = vpop.f32.mrf.mxu0
    %346 = vdwg.mxu0
    %v347 = vmax.f32 %v269, 0.0
    %v348 = vmax.f32 %v274, 0.0
    %v349 = vmax.f32 %v279, 0.0
    %v350 = vmax.f32 %v284, 0.0
    %v351 = vmax.f32 %v289, 0.0
    %v352 = vmax.f32 %v294, 0.0
    %v353 = vmax.f32 %v299, 0.0
    %v354 = vmax.f32 %v304, 0.0
    %v355 = vmax.f32 %v309, 0.0
    %v356 = vmax.f32 %v314, 0.0
    %v357 = vmax.f32 %v319, 0.0
    %v358 = vmax.f32 %v324, 0.0
    %v359 = vmax.f32 %v329, 0.0
    %v360 = vmax.f32 %v334, 0.0
    %v361 = vmax.f32 %v339, 0.0
    %v362 = vmax.f32 %v344, 0.0
    %vm363 = vcmp.ge.s32.totalorder %v171, 2
    %vm364 = vcmp.ge.s32.totalorder %v172, 2
    %vm365 = vcmp.ge.s32.totalorder %v173, 2
    %vm366 = vcmp.ge.s32.totalorder %v174, 2
    %vm367 = vcmp.ge.s32.totalorder %v175, 2
    %vm368 = vcmp.ge.s32.totalorder %v176, 2
    %vm369 = vcmp.ge.s32.totalorder %v177, 2
    %vm370 = vcmp.ge.s32.totalorder %v178, 2
    %v371 = vrot.slane %v347, 6
    %v372 = vrot.slane %v348, 6
    %v373 = vrot.slane %v349, 6
    %v374 = vrot.slane %v350, 6
    %v375 = vrot.slane %v351, 6
    %v376 = vrot.slane %v352, 6
    %v377 = vrot.slane %v353, 6
    %v378 = vrot.slane %v354, 6
    %v379 = vrot.slane %v355, 6
    %v380 = vrot.slane %v356, 6
    %v381 = vrot.slane %v357, 6
    %v382 = vrot.slane %v358, 6
    %v383 = vrot.slane %v359, 6
    %v384 = vrot.slane %v360, 6
    %v385 = vrot.slane %v361, 6
    %v386 = vrot.slane %v362, 6
    %vm387 = vcmp.lt.s32.totalorder %v171, 2
    %v388 = vsel %vm387, %v385, %v386
    %v389 = vsel %vm387, %v384, %v385
    %v390 = vsel %vm387, %v383, %v384
    %v391 = vsel %vm387, %v382, %v383
    %v392 = vsel %vm387, %v381, %v382
    %v393 = vsel %vm387, %v380, %v381
    %v394 = vsel %vm387, %v379, %v380
    %v395 = vsel %vm387, %v378, %v379
    %v396 = vsel %vm387, %v377, %v378
    %v397 = vsel %vm387, %v376, %v377
    %v398 = vsel %vm387, %v375, %v376
    %v399 = vsel %vm387, %v374, %v375
    %v400 = vsel %vm387, %v373, %v374
    %v401 = vsel %vm387, %v372, %v373
    %v402 = vsel %vm387, %v371, %v372
    %v403 = vsel %vm387, %v386, %v371
    %v404 = vsel %vm363, 1, 0
    %v405 = vsel %vm364, 1, 0
    %v406 = vsel %vm365, 1, 0
    %v407 = vsel %vm366, 1, 0
    %v408 = vsel %vm367, 1, 0
    %v409 = vsel %vm368, 1, 0
    %v410 = vsel %vm369, 1, 0
    %v411 = vsel %vm370, 1, 0
    %412 = vset.pattern.permute.xlu0 0
    %413 = vperm.xlu0 %412, %v404
    %v414 = vpop.permute.xlu0 %413
    %415 = vset.pattern.permute.xlu0 0
    %416 = vperm.xlu0 %415, %v405
    %v417 = vpop.permute.xlu0 %416
    %418 = vset.pattern.permute.xlu0 0
    %419 = vperm.xlu0 %418, %v406
    %v420 = vpop.permute.xlu0 %419
    %421 = vset.pattern.permute.xlu0 0
    %422 = vperm.xlu0 %421, %v407
    %v423 = vpop.permute.xlu0 %422
    %424 = vset.pattern.permute.xlu0 0
    %425 = vperm.xlu0 %424, %v408
    %v426 = vpop.permute.xlu0 %425
    %427 = vset.pattern.permute.xlu0 0
    %428 = vperm.xlu0 %427, %v409
    %v429 = vpop.permute.xlu0 %428
    %430 = vset.pattern.permute.xlu0 0
    %431 = vperm.xlu0 %430, %v410
    %v432 = vpop.permute.xlu0 %431
    %433 = vset.pattern.permute.xlu0 0
    %434 = vperm.xlu0 %433, %v411
    %v435 = vpop.permute.xlu0 %434
    %vm436 = vcmp.eq.s32.totalorder %v414, 1
    %vm437 = vcmp.eq.s32.totalorder %v417, 1
    %vm438 = vcmp.eq.s32.totalorder %v420, 1
    %vm439 = vcmp.eq.s32.totalorder %v423, 1
    %vm440 = vcmp.eq.s32.totalorder %v426, 1
    %vm441 = vcmp.eq.s32.totalorder %v429, 1
    %vm442 = vcmp.eq.s32.totalorder %v432, 1
    %vm443 = vcmp.eq.s32.totalorder %v435, 1
    %v444 = vsel %vm436, %v403, 0.0
    %v445 = vsel %vm437, %v402, 0.0
    %v446 = vsel %vm438, %v401, 0.0
    %v447 = vsel %vm439, %v400, 0.0
    %v448 = vsel %vm440, %v399, 0.0
    %v449 = vsel %vm441, %v398, 0.0
    %v450 = vsel %vm442, %v397, 0.0
    %v451 = vsel %vm443, %v396, 0.0
    %v452 = vsel %vm436, %v395, 0.0
    %v453 = vsel %vm437, %v394, 0.0
    %v454 = vsel %vm438, %v393, 0.0
    %v455 = vsel %vm439, %v392, 0.0
    %v456 = vsel %vm440, %v391, 0.0
    %v457 = vsel %vm441, %v390, 0.0
    %v458 = vsel %vm442, %v389, 0.0
    %v459 = vsel %vm443, %v388, 0.0
    %vm460 = vcmp.lt.s32.totalorder %v171, 62
    %vm461 = vcmp.lt.s32.totalorder %v172, 62
    %vm462 = vcmp.lt.s32.totalorder %v173, 62
    %vm463 = vcmp.lt.s32.totalorder %v174, 62
    %vm464 = vcmp.lt.s32.totalorder %v175, 62
    %vm465 = vcmp.lt.s32.totalorder %v176, 62
    %vm466 = vcmp.lt.s32.totalorder %v177, 62
    %vm467 = vcmp.lt.s32.totalorder %v178, 62
    %v468 = vrot.slane %v347, 2
    %v469 = vrot.slane %v348, 2
    %v470 = vrot.slane %v349, 2
    %v471 = vrot.slane %v350, 2
    %v472 = vrot.slane %v351, 2
    %v473 = vrot.slane %v352, 2
    %v474 = vrot.slane %v353, 2
    %v475 = vrot.slane %v354, 2
    %v476 = vrot.slane %v355, 2
    %v477 = vrot.slane %v356, 2
    %v478 = vrot.slane %v357, 2
    %v479 = vrot.slane %v358, 2
    %v480 = vrot.slane %v359, 2
    %v481 = vrot.slane %v360, 2
    %v482 = vrot.slane %v361, 2
    %v483 = vrot.slane %v362, 2
    %vm484 = vcmp.lt.s32.totalorder %v171, 6
    %v485 = vsel %vm484, %v482, %v483
    %v486 = vsel %vm484, %v481, %v482
    %v487 = vsel %vm484, %v480, %v481
    %v488 = vsel %vm484, %v479, %v480
    %v489 = vsel %vm484, %v478, %v479
    %v490 = vsel %vm484, %v477, %v478
    %v491 = vsel %vm484, %v476, %v477
    %v492 = vsel %vm484, %v475, %v476
    %v493 = vsel %vm484, %v474, %v475
    %v494 = vsel %vm484, %v473, %v474
    %v495 = vsel %vm484, %v472, %v473
    %v496 = vsel %vm484, %v471, %v472
    %v497 = vsel %vm484, %v470, %v471
    %v498 = vsel %vm484, %v469, %v470
    %v499 = vsel %vm484, %v468, %v469
    %v500 = vsel %vm484, %v483, %v468
    %v501 = vsel %vm460, 1, 0
    %v502 = vsel %vm461, 1, 0
    %v503 = vsel %vm462, 1, 0
    %v504 = vsel %vm463, 1, 0
    %v505 = vsel %vm464, 1, 0
    %v506 = vsel %vm465, 1, 0
    %v507 = vsel %vm466, 1, 0
    %v508 = vsel %vm467, 1, 0
    %509 = vset.pattern.permute.xlu0 0
    %510 = vperm.xlu0 %509, %v501
    %v511 = vpop.permute.xlu0 %510
    %512 = vset.pattern.permute.xlu0 0
    %513 = vperm.xlu0 %512, %v502
    %v514 = vpop.permute.xlu0 %513
    %515 = vset.pattern.permute.xlu0 0
    %516 = vperm.xlu0 %515, %v503
    %v517 = vpop.permute.xlu0 %516
    %518 = vset.pattern.permute.xlu0 0
    %519 = vperm.xlu0 %518, %v504
    %v520 = vpop.permute.xlu0 %519
    %521 = vset.pattern.permute.xlu0 0
    %522 = vperm.xlu0 %521, %v505
    %v523 = vpop.permute.xlu0 %522
    %524 = vset.pattern.permute.xlu0 0
    %525 = vperm.xlu0 %524, %v506
    %v526 = vpop.permute.xlu0 %525
    %527 = vset.pattern.permute.xlu0 0
    %528 = vperm.xlu0 %527, %v507
    %v529 = vpop.permute.xlu0 %528
    %530 = vset.pattern.permute.xlu0 0
    %531 = vperm.xlu0 %530, %v508
    %v532 = vpop.permute.xlu0 %531
    %vm533 = vcmp.eq.s32.totalorder %v511, 1
    %vm534 = vcmp.eq.s32.totalorder %v514, 1
    %vm535 = vcmp.eq.s32.totalorder %v517, 1
    %vm536 = vcmp.eq.s32.totalorder %v520, 1
    %vm537 = vcmp.eq.s32.totalorder %v523, 1
    %vm538 = vcmp.eq.s32.totalorder %v526, 1
    %vm539 = vcmp.eq.s32.totalorder %v529, 1
    %vm540 = vcmp.eq.s32.totalorder %v532, 1
    %v541 = vsel %vm533, %v499, 0.0
    %v542 = vsel %vm534, %v498, 0.0
    %v543 = vsel %vm535, %v497, 0.0
    %v544 = vsel %vm536, %v496, 0.0
    %v545 = vsel %vm537, %v495, 0.0
    %v546 = vsel %vm538, %v494, 0.0
    %v547 = vsel %vm539, %v493, 0.0
    %v548 = vsel %vm540, %v492, 0.0
    %v549 = vsel %vm533, %v491, 0.0
    %v550 = vsel %vm534, %v490, 0.0
    %v551 = vsel %vm535, %v489, 0.0
    %v552 = vsel %vm536, %v488, 0.0
    %v553 = vsel %vm537, %v487, 0.0
    %v554 = vsel %vm538, %v486, 0.0
    %v555 = vsel %vm539, %v485, 0.0
    %v556 = vsel %vm540, %v500, 0.0
    %557 = vst [vmem:[#allocation2] sm:$0xff] %v444
    %558 = vst [vmem:[#allocation2 + $0x18] sm:$0xff] %v445
    %559 = vst [vmem:[#allocation2 + $0x30] sm:$0xff] %v446
    %560 = vst [vmem:[#allocation2 + $0x48] sm:$0xff] %v447
    %561 = vst [vmem:[#allocation2 + $0x60] sm:$0xff] %v448
    %562 = vst [vmem:[#allocation2 + $0x78] sm:$0xff] %v449
    %563 = vst [vmem:[#allocation2 + $0x90] sm:$0xff] %v450
    %564 = vst [vmem:[#allocation2 + $0xa8] sm:$0xff] %v451
    %565 = vst [vmem:[#allocation2 + $0xc0] sm:$0xff] %v452
    %566 = vst [vmem:[#allocation2 + $0xd8] sm:$0xff] %v453
    %567 = vst [vmem:[#allocation2 + $0xf0] sm:$0xff] %v454
    %568 = vst [vmem:[#allocation2 + $0x108] sm:$0xff] %v455
    %569 = vst [vmem:[#allocation2 + $0x120] sm:$0xff] %v456
    %570 = vst [vmem:[#allocation2 + $0x138] sm:$0xff] %v457
    %571 = vst [vmem:[#allocation2 + $0x150] sm:$0xff] %v458
    %572 = vst [vmem:[#allocation2 + $0x168] sm:$0xff] %v459
    %573 = vst [vmem:[#allocation2 + $0x8] sm:$0xff] %v347
    %574 = vst [vmem:[#allocation2 + $0x20] sm:$0xff] %v348
    %575 = vst [vmem:[#allocation2 + $0x38] sm:$0xff] %v349
    %576 = vst [vmem:[#allocation2 + $0x50] sm:$0xff] %v350
    %577 = vst [vmem:[#allocation2 + $0x68] sm:$0xff] %v351
    %578 = vst [vmem:[#allocation2 + $0x80] sm:$0xff] %v352
    %579 = vst [vmem:[#allocation2 + $0x98] sm:$0xff] %v353
    %580 = vst [vmem:[#allocation2 + $0xb0] sm:$0xff] %v354
    %581 = vst [vmem:[#allocation2 + $0xc8] sm:$0xff] %v355
    %582 = vst [vmem:[#allocation2 + $0xe0] sm:$0xff] %v356
    %583 = vst [vmem:[#allocation2 + $0xf8] sm:$0xff] %v357
    %584 = vst [vmem:[#allocation2 + $0x110] sm:$0xff] %v358
    %585 = vst [vmem:[#allocation2 + $0x128] sm:$0xff] %v359
    %586 = vst [vmem:[#allocation2 + $0x140] sm:$0xff] %v360
    %587 = vst [vmem:[#allocation2 + $0x158] sm:$0xff] %v361
    %588 = vst [vmem:[#allocation2 + $0x170] sm:$0xff] %v362
    %589 = vst [vmem:[#allocation2 + $0x10] sm:$0xff] %v541
    %590 = vst [vmem:[#allocation2 + $0x28] sm:$0xff] %v542
    %591 = vst [vmem:[#allocation2 + $0x40] sm:$0xff] %v543
    %592 = vst [vmem:[#allocation2 + $0x58] sm:$0xff] %v544
    %593 = vst [vmem:[#allocation2 + $0x70] sm:$0xff] %v545
    %594 = vst [vmem:[#allocation2 + $0x88] sm:$0xff] %v546
    %595 = vst [vmem:[#allocation2 + $0xa0] sm:$0xff] %v547
    %596 = vst [vmem:[#allocation2 + $0xb8] sm:$0xff] %v548
    %597 = vst [vmem:[#allocation2 + $0xd0] sm:$0xff] %v549
    %598 = vst [vmem:[#allocation2 + $0xe8] sm:$0xff] %v550
    %599 = vst [vmem:[#allocation2 + $0x100] sm:$0xff] %v551
    %600 = vst [vmem:[#allocation2 + $0x118] sm:$0xff] %v552
    %601 = vst [vmem:[#allocation2 + $0x130] sm:$0xff] %v553
    %602 = vst [vmem:[#allocation2 + $0x148] sm:$0xff] %v554
    %603 = vst [vmem:[#allocation2 + $0x160] sm:$0xff] %v555
    %604 = vst [vmem:[#allocation2 + $0x178] sm:$0xff] %v556
    %v605 = vld [vmem:[#allocation2] sm:$0xff]
    %v606 = vld [vmem:[#allocation2 + $0x8] sm:$0xff]
    %v607 = vld [vmem:[#allocation2 + $0x10] sm:$0xff]
    %v608 = vld [vmem:[#allocation2 + $0x18] sm:$0xff]
    %v609 = vld [vmem:[#allocation2 + $0x20] sm:$0xff]
    %v610 = vld [vmem:[#allocation2 + $0x28] sm:$0xff]
    %v611 = vld [vmem:[#allocation2 + $0x30] sm:$0xff]
    %v612 = vld [vmem:[#allocation2 + $0x38] sm:$0xff]
    %v613 = vld [vmem:[#allocation2 + $0x40] sm:$0xff]
    %v614 = vld [vmem:[#allocation2 + $0x48] sm:$0xff]
    %v615 = vld [vmem:[#allocation2 + $0x50] sm:$0xff]
    %v616 = vld [vmem:[#allocation2 + $0x58] sm:$0xff]
    %v617 = vld [vmem:[#allocation2 + $0x60] sm:$0xff]
    %v618 = vld [vmem:[#allocation2 + $0x68] sm:$0xff]
    %v619 = vld [vmem:[#allocation2 + $0x70] sm:$0xff]
    %v620 = vld [vmem:[#allocation2 + $0x78] sm:$0xff]
    %v621 = vld [vmem:[#allocation2 + $0x80] sm:$0xff]
    %v622 = vld [vmem:[#allocation2 + $0x88] sm:$0xff]
    %v623 = vld [vmem:[#allocation2 + $0x90] sm:$0xff]
    %v624 = vld [vmem:[#allocation2 + $0x98] sm:$0xff]
    %v625 = vld [vmem:[#allocation2 + $0xa0] sm:$0xff]
    %v626 = vld [vmem:[#allocation2 + $0xa8] sm:$0xff]
    %v627 = vld [vmem:[#allocation2 + $0xb0] sm:$0xff]
    %v628 = vld [vmem:[#allocation2 + $0xb8] sm:$0xff]
    %v629 = vld [vmem:[#allocation2 + $0xc0] sm:$0xff]
    %v630 = vld [vmem:[#allocation2 + $0xc8] sm:$0xff]
    %v631 = vld [vmem:[#allocation2 + $0xd0] sm:$0xff]
    %v632 = vld [vmem:[#allocation2 + $0xd8] sm:$0xff]
    %v633 = vld [vmem:[#allocation2 + $0xe0] sm:$0xff]
    %v634 = vld [vmem:[#allocation2 + $0xe8] sm:$0xff]
    %v635 = vld [vmem:[#allocation2 + $0xf0] sm:$0xff]
    %v636 = vld [vmem:[#allocation2 + $0xf8] sm:$0xff]
    %v637 = vld [vmem:[#allocation2 + $0x100] sm:$0xff]
    %v638 = vld [vmem:[#allocation2 + $0x108] sm:$0xff]
    %v639 = vld [vmem:[#allocation2 + $0x110] sm:$0xff]
    %v640 = vld [vmem:[#allocation2 + $0x118] sm:$0xff]
    %v641 = vld [vmem:[#allocation2 + $0x120] sm:$0xff]
    %v642 = vld [vmem:[#allocation2 + $0x128] sm:$0xff]
    %v643 = vld [vmem:[#allocation2 + $0x130] sm:$0xff]
    %v644 = vld [vmem:[#allocation2 + $0x138] sm:$0xff]
    %v645 = vld [vmem:[#allocation2 + $0x140] sm:$0xff]
    %v646 = vld [vmem:[#allocation2 + $0x148] sm:$0xff]
    %v647 = vld [vmem:[#allocation2 + $0x150] sm:$0xff]
    %v648 = vld [vmem:[#allocation2 + $0x158] sm:$0xff]
    %v649 = vld [vmem:[#allocation2 + $0x160] sm:$0xff]
    %v650 = vld [vmem:[#allocation2 + $0x168] sm:$0xff]
    %v651 = vld [vmem:[#allocation2 + $0x170] sm:$0xff]
    %v652 = vld [vmem:[#allocation2 + $0x178] sm:$0xff]
    %v653 = vld [vmem:[#allocation7] sm:$0xff]
    %v654 = vld [vmem:[#allocation7 + $0x8] sm:$0xff]
    %v655 = vld [vmem:[#allocation7 + $0x10] sm:$0xff]
    %v656 = vld [vmem:[#allocation7 + $0x18] sm:$0xff]
    %v657 = vld [vmem:[#allocation7 + $0x20] sm:$0xff]
    %v658 = vld [vmem:[#allocation7 + $0x28] sm:$0xff]
    %v659 = vld [vmem:[#allocation7 + $0x30] sm:$0xff]
    %v660 = vld [vmem:[#allocation7 + $0x38] sm:$0xff]
    %v661 = vld [vmem:[#allocation7 + $0x40] sm:$0xff]
    %v662 = vld [vmem:[#allocation7 + $0x48] sm:$0xff]
    %v663 = vld [vmem:[#allocation7 + $0x50] sm:$0xff]
    %v664 = vld [vmem:[#allocation7 + $0x58] sm:$0xff]
    %v665 = vld [vmem:[#allocation7 + $0x60] sm:$0xff]
    %v666 = vld [vmem:[#allocation7 + $0x68] sm:$0xff]
    %v667 = vld [vmem:[#allocation7 + $0x70] sm:$0xff]
    %v668 = vld [vmem:[#allocation7 + $0x78] sm:$0xff]
    %v669 = vld [vmem:[#allocation7 + $0x80] sm:$0xff]
    %v670 = vld [vmem:[#allocation7 + $0x88] sm:$0xff]
    %v671 = vld [vmem:[#allocation7 + $0x90] sm:$0xff]
    %v672 = vld [vmem:[#allocation7 + $0x98] sm:$0xff]
    %v673 = vld [vmem:[#allocation7 + $0xa0] sm:$0xff]
    %v674 = vld [vmem:[#allocation7 + $0xa8] sm:$0xff]
    %v675 = vld [vmem:[#allocation7 + $0xb0] sm:$0xff]
    %v676 = vld [vmem:[#allocation7 + $0xb8] sm:$0xff]
    %v677 = vld [vmem:[#allocation7 + $0xc0] sm:$0xff]
    %v678 = vld [vmem:[#allocation7 + $0xc8] sm:$0xff]
    %v679 = vld [vmem:[#allocation7 + $0xd0] sm:$0xff]
    %v680 = vld [vmem:[#allocation7 + $0xd8] sm:$0xff]
    %v681 = vld [vmem:[#allocation7 + $0xe0] sm:$0xff]
    %v682 = vld [vmem:[#allocation7 + $0xe8] sm:$0xff]
    %v683 = vld [vmem:[#allocation7 + $0xf0] sm:$0xff]
    %v684 = vld [vmem:[#allocation7 + $0xf8] sm:$0xff]
    %v685 = vld [vmem:[#allocation7 + $0x100] sm:$0xff]
    %v686 = vld [vmem:[#allocation7 + $0x108] sm:$0xff]
    %v687 = vld [vmem:[#allocation7 + $0x110] sm:$0xff]
    %v688 = vld [vmem:[#allocation7 + $0x118] sm:$0xff]
    %v689 = vld [vmem:[#allocation7 + $0x120] sm:$0xff]
    %v690 = vld [vmem:[#allocation7 + $0x128] sm:$0xff]
    %v691 = vld [vmem:[#allocation7 + $0x130] sm:$0xff]
    %v692 = vld [vmem:[#allocation7 + $0x138] sm:$0xff]
    %v693 = vld [vmem:[#allocation7 + $0x140] sm:$0xff]
    %v694 = vld [vmem:[#allocation7 + $0x148] sm:$0xff]
    %v695 = vld [vmem:[#allocation7 + $0x150] sm:$0xff]
    %v696 = vld [vmem:[#allocation7 + $0x158] sm:$0xff]
    %v697 = vld [vmem:[#allocation7 + $0x160] sm:$0xff]
    %v698 = vld [vmem:[#allocation7 + $0x168] sm:$0xff]
    %v699 = vld [vmem:[#allocation7 + $0x170] sm:$0xff]
    %v700 = vld [vmem:[#allocation7 + $0x178] sm:$0xff]
    %v701 = vld [vmem:[#allocation8] sm:$0x1]
    %v703 = vlaneseq
    %v704 = vshrl.u32 %v703, 7
    %v705 = vsub.s32 0, %v704
    %v706 = vrot.slane %v701, %v705
    %708 = vmatprep.subr.mxu0 0.0
    %709 = vmatpush1.msra.mxu0 %v668
    %710 = vmatprep.subr.mxu0 0.0
    %711 = vmatpush1.msra.mxu0 %v667
    %712 = vmatprep.subr.mxu0 0.0
    %713 = vmatpush1.msra.mxu0 %v666
    %714 = vmatprep.subr.mxu0 0.0
    %715 = vmatpush1.msra.mxu0 %v665
    %716 = vmatprep.subr.mxu0 0.0
    %717 = vmatpush1.msra.mxu0 %v664
    %718 = vmatprep.subr.mxu0 0.0
    %719 = vmatpush1.msra.mxu0 %v663
    %720 = vmatprep.subr.mxu0 0.0
    %721 = vmatpush1.msra.mxu0 %v662
    %722 = vmatprep.subr.mxu0 0.0
    %723 = vmatpush1.msra.mxu0 %v661
    %724 = vmatprep.subr.mxu0 0.0
    %725 = vmatpush1.msra.mxu0 %v660
    %726 = vmatprep.subr.mxu0 0.0
    %727 = vmatpush1.msra.mxu0 %v659
    %728 = vmatprep.subr.mxu0 0.0
    %729 = vmatpush1.msra.mxu0 %v658
    %730 = vmatprep.subr.mxu0 0.0
    %731 = vmatpush1.msra.mxu0 %v657
    %732 = vmatprep.subr.mxu0 0.0
    %733 = vmatpush1.msra.mxu0 %v656
    %734 = vmatprep.subr.mxu0 0.0
    %735 = vmatpush1.msra.mxu0 %v655
    %736 = vmatprep.subr.mxu0 0.0
    %737 = vmatpush1.msra.mxu0 %v654
    %738 = vmatprep.subr.mxu0 0.0
    %739 = vmatpush1.msra.mxu0 %v653
    %740 = vmatprep.subr.mxu0 0.0
    %741 = vmatpush2.msra.mxu0 %v684
    %742 = vmatprep.subr.mxu0 0.0
    %743 = vmatpush2.msra.mxu0 %v683
    %744 = vmatprep.subr.mxu0 0.0
    %745 = vmatpush2.msra.mxu0 %v682
    %746 = vmatprep.subr.mxu0 0.0
    %747 = vmatpush2.msra.mxu0 %v681
    %748 = vmatprep.subr.mxu0 0.0
    %749 = vmatpush2.msra.mxu0 %v680
    %750 = vmatprep.subr.mxu0 0.0
    %751 = vmatpush2.msra.mxu0 %v679
    %752 = vmatprep.subr.mxu0 0.0
    %753 = vmatpush2.msra.mxu0 %v678
    %754 = vmatprep.subr.mxu0 0.0
    %755 = vmatpush2.msra.mxu0 %v677
    %756 = vmatprep.subr.mxu0 0.0
    %757 = vmatpush2.msra.mxu0 %v676
    %758 = vmatprep.subr.mxu0 0.0
    %759 = vmatpush2.msra.mxu0 %v675
    %760 = vmatprep.subr.mxu0 0.0
    %761 = vmatpush2.msra.mxu0 %v674
    %762 = vmatprep.subr.mxu0 0.0
    %763 = vmatpush2.msra.mxu0 %v673
    %764 = vmatprep.subr.mxu0 0.0
    %765 = vmatpush2.msra.mxu0 %v672
    %766 = vmatprep.subr.mxu0 0.0
    %767 = vmatpush2.msra.mxu0 %v671
    %768 = vmatprep.subr.mxu0 0.0
    %769 = vmatpush2.msra.mxu0 %v670
    %770 = vmatprep.subr.mxu0 0.0
    %771 = vmatpush2.msra.mxu0 %v669
    %772 = vmatprep.mubr.f32.mxu0 %v606
    %773 = vmatmul.mubr.f32.gmra.mxu0 %v605
    %v774 = vpop.f32.mrf.mxu0
    %v775 = vadd.f32 %v706, %v774
    %v776 = vpop.f32.mrf.mxu0
    %777 = vmatprep.mubr.f32.mxu0 %v609
    %778 = vmatmul.mubr.f32.gmra.mxu0 %v608
    %v779 = vpop.f32.mrf.mxu0
    %v780 = vadd.f32 %v706, %v779
    %v781 = vpop.f32.mrf.mxu0
    %782 = vmatprep.mubr.f32.mxu0 %v612
    %783 = vmatmul.mubr.f32.gmra.mxu0 %v611
    %v784 = vpop.f32.mrf.mxu0
    %v785 = vadd.f32 %v706, %v784
    %v786 = vpop.f32.mrf.mxu0
    %787 = vmatprep.mubr.f32.mxu0 %v615
    %788 = vmatmul.mubr.f32.gmra.mxu0 %v614
    %v789 = vpop.f32.mrf.mxu0
    %v790 = vadd.f32 %v706, %v789
    %v791 = vpop.f32.mrf.mxu0
    %792 = vmatprep.mubr.f32.mxu0 %v618
    %793 = vmatmul.mubr.f32.gmra.mxu0 %v617
    %v794 = vpop.f32.mrf.mxu0
    %v795 = vadd.f32 %v706, %v794
    %v796 = vpop.f32.mrf.mxu0
    %797 = vmatprep.mubr.f32.mxu0 %v621
    %798 = vmatmul.mubr.f32.gmra.mxu0 %v620
    %v799 = vpop.f32.mrf.mxu0
    %v800 = vadd.f32 %v706, %v799
    %v801 = vpop.f32.mrf.mxu0
    %802 = vmatprep.mubr.f32.mxu0 %v624
    %803 = vmatmul.mubr.f32.gmra.mxu0 %v623
    %v804 = vpop.f32.mrf.mxu0
    %v805 = vadd.f32 %v706, %v804
    %v806 = vpop.f32.mrf.mxu0
    %807 = vmatprep.mubr.f32.mxu0 %v627
    %808 = vmatmul.mubr.f32.gmra.mxu0 %v626
    %v809 = vpop.f32.mrf.mxu0
    %v810 = vadd.f32 %v706, %v809
    %v811 = vpop.f32.mrf.mxu0
    %812 = vmatprep.mubr.f32.mxu0 %v630
    %813 = vmatmul.mubr.f32.gmra.mxu0 %v629
    %v814 = vpop.f32.mrf.mxu0
    %v815 = vadd.f32 %v706, %v814
    %v816 = vpop.f32.mrf.mxu0
    %817 = vmatprep.mubr.f32.mxu0 %v633
    %818 = vmatmul.mubr.f32.gmra.mxu0 %v632
    %v819 = vpop.f32.mrf.mxu0
    %v820 = vadd.f32 %v706, %v819
    %v821 = vpop.f32.mrf.mxu0
    %822 = vmatprep.mubr.f32.mxu0 %v636
    %823 = vmatmul.mubr.f32.gmra.mxu0 %v635
    %v824 = vpop.f32.mrf.mxu0
    %v825 = vadd.f32 %v706, %v824
    %v826 = vpop.f32.mrf.mxu0
    %827 = vmatprep.mubr.f32.mxu0 %v639
    %828 = vmatmul.mubr.f32.gmra.mxu0 %v638
    %v829 = vpop.f32.mrf.mxu0
    %v830 = vadd.f32 %v706, %v829
    %v831 = vpop.f32.mrf.mxu0
    %832 = vmatprep.mubr.f32.mxu0 %v642
    %833 = vmatmul.mubr.f32.gmra.mxu0 %v641
    %v834 = vpop.f32.mrf.mxu0
    %v835 = vadd.f32 %v706, %v834
    %v836 = vpop.f32.mrf.mxu0
    %837 = vmatprep.mubr.f32.mxu0 %v645
    %838 = vmatmul.mubr.f32.gmra.mxu0 %v644
    %v839 = vpop.f32.mrf.mxu0
    %v840 = vadd.f32 %v706, %v839
    %v841 = vpop.f32.mrf.mxu0
    %842 = vmatprep.mubr.f32.mxu0 %v648
    %843 = vmatmul.mubr.f32.gmra.mxu0 %v647
    %v844 = vpop.f32.mrf.mxu0
    %v845 = vadd.f32 %v706, %v844
    %v846 = vpop.f32.mrf.mxu0
    %847 = vmatprep.mubr.f32.mxu0 %v651
    %848 = vmatmul.mubr.f32.gmra.mxu0 %v650
    %v849 = vpop.f32.mrf.mxu0
    %v850 = vadd.f32 %v706, %v849
    %v851 = vpop.f32.mrf.mxu0
    %852 = vdwg.mxu0
    %853 = vmatprep.subr.mxu0 0.0
    %854 = vmatpush1.msra.mxu0 %v700
    %855 = vmatprep.subr.mxu0 0.0
    %856 = vmatpush1.msra.mxu0 %v699
    %857 = vmatprep.subr.mxu0 0.0
    %858 = vmatpush1.msra.mxu0 %v698
    %859 = vmatprep.subr.mxu0 0.0
    %860 = vmatpush1.msra.mxu0 %v697
    %861 = vmatprep.subr.mxu0 0.0
    %862 = vmatpush1.msra.mxu0 %v696
    %863 = vmatprep.subr.mxu0 0.0
    %864 = vmatpush1.msra.mxu0 %v695
    %865 = vmatprep.subr.mxu0 0.0
    %866 = vmatpush1.msra.mxu0 %v694
    %867 = vmatprep.subr.mxu0 0.0
    %868 = vmatpush1.msra.mxu0 %v693
    %869 = vmatprep.subr.mxu0 0.0
    %870 = vmatpush1.msra.mxu0 %v692
    %871 = vmatprep.subr.mxu0 0.0
    %872 = vmatpush1.msra.mxu0 %v691
    %873 = vmatprep.subr.mxu0 0.0
    %874 = vmatpush1.msra.mxu0 %v690
    %875 = vmatprep.subr.mxu0 0.0
    %876 = vmatpush1.msra.mxu0 %v689
    %877 = vmatprep.subr.mxu0 0.0
    %878 = vmatpush1.msra.mxu0 %v688
    %879 = vmatprep.subr.mxu0 0.0
    %880 = vmatpush1.msra.mxu0 %v687
    %881 = vmatprep.subr.mxu0 0.0
    %882 = vmatpush1.msra.mxu0 %v686
    %883 = vmatprep.subr.mxu0 0.0
    %884 = vmatpush1.msra.mxu0 %v685
    %885 = vmatprep.subr.mxu0 0.0
    %886 = vmatpush2.msra.mxu0 0.0
    %887 = vmatprep.subr.mxu0 0.0
    %888 = vmatpush2.msra.mxu0 0.0
    %889 = vmatprep.subr.mxu0 0.0
    %890 = vmatpush2.msra.mxu0 0.0
    %891 = vmatprep.subr.mxu0 0.0
    %892 = vmatpush2.msra.mxu0 0.0
    %893 = vmatprep.subr.mxu0 0.0
    %894 = vmatpush2.msra.mxu0 0.0
    %895 = vmatprep.subr.mxu0 0.0
    %896 = vmatpush2.msra.mxu0 0.0
    %897 = vmatprep.subr.mxu0 0.0
    %898 = vmatpush2.msra.mxu0 0.0
    %899 = vmatprep.subr.mxu0 0.0
    %900 = vmatpush2.msra.mxu0 0.0
    %901 = vmatprep.subr.mxu0 0.0
    %902 = vmatpush2.msra.mxu0 0.0
    %903 = vmatprep.subr.mxu0 0.0
    %904 = vmatpush2.msra.mxu0 0.0
    %905 = vmatprep.subr.mxu0 0.0
    %906 = vmatpush2.msra.mxu0 0.0
    %907 = vmatprep.subr.mxu0 0.0
    %908 = vmatpush2.msra.mxu0 0.0
    %909 = vmatprep.subr.mxu0 0.0
    %910 = vmatpush2.msra.mxu0 0.0
    %911 = vmatprep.subr.mxu0 0.0
    %912 = vmatpush2.msra.mxu0 0.0
    %913 = vmatprep.subr.mxu0 0.0
    %914 = vmatpush2.msra.mxu0 0.0
    %915 = vmatprep.subr.mxu0 0.0
    %916 = vmatpush2.msra.mxu0 0.0
    %917 = vmatprep.mubr.f32.mxu0 0.0
    %918 = vmatmul.mubr.f32.gmra.mxu0 %v607
    %v919 = vpop.f32.mrf.mxu0
    %v920 = vadd.f32 %v775, %v919
    %v921 = vpop.f32.mrf.mxu0
    %922 = vmatprep.mubr.f32.mxu0 0.0
    %923 = vmatmul.mubr.f32.gmra.mxu0 %v610
    %v924 = vpop.f32.mrf.mxu0
    %v925 = vadd.f32 %v780, %v924
    %v926 = vpop.f32.mrf.mxu0
    %927 = vmatprep.mubr.f32.mxu0 0.0
    %928 = vmatmul.mubr.f32.gmra.mxu0 %v613
    %v929 = vpop.f32.mrf.mxu0
    %v930 = vadd.f32 %v785, %v929
    %v931 = vpop.f32.mrf.mxu0
    %932 = vmatprep.mubr.f32.mxu0 0.0
    %933 = vmatmul.mubr.f32.gmra.mxu0 %v616
    %v934 = vpop.f32.mrf.mxu0
    %v935 = vadd.f32 %v790, %v934
    %v936 = vpop.f32.mrf.mxu0
    %937 = vmatprep.mubr.f32.mxu0 0.0
    %938 = vmatmul.mubr.f32.gmra.mxu0 %v619
    %v939 = vpop.f32.mrf.mxu0
    %v940 = vadd.f32 %v795, %v939
    %v941 = vpop.f32.mrf.mxu0
    %942 = vmatprep.mubr.f32.mxu0 0.0
    %943 = vmatmul.mubr.f32.gmra.mxu0 %v622
    %v944 = vpop.f32.mrf.mxu0
    %v945 = vadd.f32 %v800, %v944
    %v946 = vpop.f32.mrf.mxu0
    %947 = vmatprep.mubr.f32.mxu0 0.0
    %948 = vmatmul.mubr.f32.gmra.mxu0 %v625
    %v949 = vpop.f32.mrf.mxu0
    %v950 = vadd.f32 %v805, %v949
    %v951 = vpop.f32.mrf.mxu0
    %952 = vmatprep.mubr.f32.mxu0 0.0
    %953 = vmatmul.mubr.f32.gmra.mxu0 %v628
    %v954 = vpop.f32.mrf.mxu0
    %v955 = vadd.f32 %v810, %v954
    %v956 = vpop.f32.mrf.mxu0
    %957 = vmatprep.mubr.f32.mxu0 0.0
    %958 = vmatmul.mubr.f32.gmra.mxu0 %v631
    %v959 = vpop.f32.mrf.mxu0
    %v960 = vadd.f32 %v815, %v959
    %v961 = vpop.f32.mrf.mxu0
    %962 = vmatprep.mubr.f32.mxu0 0.0
    %963 = vmatmul.mubr.f32.gmra.mxu0 %v634
    %v964 = vpop.f32.mrf.mxu0
    %v965 = vadd.f32 %v820, %v964
    %v966 = vpop.f32.mrf.mxu0
    %967 = vmatprep.mubr.f32.mxu0 0.0
    %968 = vmatmul.mubr.f32.gmra.mxu0 %v637
    %v969 = vpop.f32.mrf.mxu0
    %v970 = vadd.f32 %v825, %v969
    %v971 = vpop.f32.mrf.mxu0
    %972 = vmatprep.mubr.f32.mxu0 0.0
    %973 = vmatmul.mubr.f32.gmra.mxu0 %v640
    %v974 = vpop.f32.mrf.mxu0
    %v975 = vadd.f32 %v830, %v974
    %v976 = vpop.f32.mrf.mxu0
    %977 = vmatprep.mubr.f32.mxu0 0.0
    %978 = vmatmul.mubr.f32.gmra.mxu0 %v643
    %v979 = vpop.f32.mrf.mxu0
    %v980 = vadd.f32 %v835, %v979
    %v981 = vpop.f32.mrf.mxu0
    %982 = vmatprep.mubr.f32.mxu0 0.0
    %983 = vmatmul.mubr.f32.gmra.mxu0 %v646
    %v984 = vpop.f32.mrf.mxu0
    %v985 = vadd.f32 %v840, %v984
    %v986 = vpop.f32.mrf.mxu0
    %987 = vmatprep.mubr.f32.mxu0 0.0
    %988 = vmatmul.mubr.f32.gmra.mxu0 %v649
    %v989 = vpop.f32.mrf.mxu0
    %v990 = vadd.f32 %v845, %v989
    %v991 = vpop.f32.mrf.mxu0
    %992 = vmatprep.mubr.f32.mxu0 0.0
    %993 = vmatmul.mubr.f32.gmra.mxu0 %v652
    %v994 = vpop.f32.mrf.mxu0
    %v995 = vadd.f32 %v850, %v994
    %v996 = vpop.f32.mrf.mxu0
    %997 = vdwg.mxu0
    %v998 = vmax.f32 %v920, 0.0
    %v999 = vmax.f32 %v925, 0.0
    %v1000 = vmax.f32 %v930, 0.0
    %v1001 = vmax.f32 %v935, 0.0
    %v1002 = vmax.f32 %v940, 0.0
    %v1003 = vmax.f32 %v945, 0.0
    %v1004 = vmax.f32 %v950, 0.0
    %v1005 = vmax.f32 %v955, 0.0
    %v1006 = vmax.f32 %v960, 0.0
    %v1007 = vmax.f32 %v965, 0.0
    %v1008 = vmax.f32 %v970, 0.0
    %v1009 = vmax.f32 %v975, 0.0
    %v1010 = vmax.f32 %v980, 0.0
    %v1011 = vmax.f32 %v985, 0.0
    %v1012 = vmax.f32 %v990, 0.0
    %v1013 = vmax.f32 %v995, 0.0
    %v1014 = vrot.slane %v998, 6
    %v1015 = vrot.slane %v999, 6
    %v1016 = vrot.slane %v1000, 6
    %v1017 = vrot.slane %v1001, 6
    %v1018 = vrot.slane %v1002, 6
    %v1019 = vrot.slane %v1003, 6
    %v1020 = vrot.slane %v1004, 6
    %v1021 = vrot.slane %v1005, 6
    %v1022 = vrot.slane %v1006, 6
    %v1023 = vrot.slane %v1007, 6
    %v1024 = vrot.slane %v1008, 6
    %v1025 = vrot.slane %v1009, 6
    %v1026 = vrot.slane %v1010, 6
    %v1027 = vrot.slane %v1011, 6
    %v1028 = vrot.slane %v1012, 6
    %v1029 = vrot.slane %v1013, 6
    %v1030 = vsel %vm387, %v1028, %v1029
    %v1031 = vsel %vm387, %v1027, %v1028
    %v1032 = vsel %vm387, %v1026, %v1027
    %v1033 = vsel %vm387, %v1025, %v1026
    %v1034 = vsel %vm387, %v1024, %v1025
    %v1035 = vsel %vm387, %v1023, %v1024
    %v1036 = vsel %vm387, %v1022, %v1023
    %v1037 = vsel %vm387, %v1021, %v1022
    %v1038 = vsel %vm387, %v1020, %v1021
    %v1039 = vsel %vm387, %v1019, %v1020
    %v1040 = vsel %vm387, %v1018, %v1019
    %v1041 = vsel %vm387, %v1017, %v1018
    %v1042 = vsel %vm387, %v1016, %v1017
    %v1043 = vsel %vm387, %v1015, %v1016
    %v1044 = vsel %vm387, %v1014, %v1015
    %v1045 = vsel %vm387, %v1029, %v1014
    %v1046 = vsel %vm436, %v1045, 0.0
    %v1047 = vsel %vm437, %v1044, 0.0
    %v1048 = vsel %vm438, %v1043, 0.0
    %v1049 = vsel %vm439, %v1042, 0.0
    %v1050 = vsel %vm440, %v1041, 0.0
    %v1051 = vsel %vm441, %v1040, 0.0
    %v1052 = vsel %vm442, %v1039, 0.0
    %v1053 = vsel %vm443, %v1038, 0.0
    %v1054 = vsel %vm436, %v1037, 0.0
    %v1055 = vsel %vm437, %v1036, 0.0
    %v1056 = vsel %vm438, %v1035, 0.0
    %v1057 = vsel %vm439, %v1034, 0.0
    %v1058 = vsel %vm440, %v1033, 0.0
    %v1059 = vsel %vm441, %v1032, 0.0
    %v1060 = vsel %vm442, %v1031, 0.0
    %v1061 = vsel %vm443, %v1030, 0.0
    %v1062 = vrot.slane %v998, 2
    %v1063 = vrot.slane %v999, 2
    %v1064 = vrot.slane %v1000, 2
    %v1065 = vrot.slane %v1001, 2
    %v1066 = vrot.slane %v1002, 2
    %v1067 = vrot.slane %v1003, 2
    %v1068 = vrot.slane %v1004, 2
    %v1069 = vrot.slane %v1005, 2
    %v1070 = vrot.slane %v1006, 2
    %v1071 = vrot.slane %v1007, 2
    %v1072 = vrot.slane %v1008, 2
    %v1073 = vrot.slane %v1009, 2
    %v1074 = vrot.slane %v1010, 2
    %v1075 = vrot.slane %v1011, 2
    %v1076 = vrot.slane %v1012, 2
    %v1077 = vrot.slane %v1013, 2
    %v1078 = vsel %vm484, %v1076, %v1077
    %v1079 = vsel %vm484, %v1075, %v1076
    %v1080 = vsel %vm484, %v1074, %v1075
    %v1081 = vsel %vm484, %v1073, %v1074
    %v1082 = vsel %vm484, %v1072, %v1073
    %v1083 = vsel %vm484, %v1071, %v1072
    %v1084 = vsel %vm484, %v1070, %v1071
    %v1085 = vsel %vm484, %v1069, %v1070
    %v1086 = vsel %vm484, %v1068, %v1069
    %v1087 = vsel %vm484, %v1067, %v1068
    %v1088 = vsel %vm484, %v1066, %v1067
    %v1089 = vsel %vm484, %v1065, %v1066
    %v1090 = vsel %vm484, %v1064, %v1065
    %v1091 = vsel %vm484, %v1063, %v1064
    %v1092 = vsel %vm484, %v1062, %v1063
    %v1093 = vsel %vm484, %v1077, %v1062
    %v1094 = vsel %vm533, %v1092, 0.0
    %v1095 = vsel %vm534, %v1091, 0.0
    %v1096 = vsel %vm535, %v1090, 0.0
    %v1097 = vsel %vm536, %v1089, 0.0
    %v1098 = vsel %vm537, %v1088, 0.0
    %v1099 = vsel %vm538, %v1087, 0.0
    %v1100 = vsel %vm539, %v1086, 0.0
    %v1101 = vsel %vm540, %v1085, 0.0
    %v1102 = vsel %vm533, %v1084, 0.0
    %v1103 = vsel %vm534, %v1083, 0.0
    %v1104 = vsel %vm535, %v1082, 0.0
    %v1105 = vsel %vm536, %v1081, 0.0
    %v1106 = vsel %vm537, %v1080, 0.0
    %v1107 = vsel %vm538, %v1079, 0.0
    %v1108 = vsel %vm539, %v1078, 0.0
    %v1109 = vsel %vm540, %v1093, 0.0
    %1110 = vst [vmem:[#allocation2] sm:$0xff] %v1046
    %1111 = vst [vmem:[#allocation2 + $0x18] sm:$0xff] %v1047
    %1112 = vst [vmem:[#allocation2 + $0x30] sm:$0xff] %v1048
    %1113 = vst [vmem:[#allocation2 + $0x48] sm:$0xff] %v1049
    %1114 = vst [vmem:[#allocation2 + $0x60] sm:$0xff] %v1050
    %1115 = vst [vmem:[#allocation2 + $0x78] sm:$0xff] %v1051
    %1116 = vst [vmem:[#allocation2 + $0x90] sm:$0xff] %v1052
    %1117 = vst [vmem:[#allocation2 + $0xa8] sm:$0xff] %v1053
    %1118 = vst [vmem:[#allocation2 + $0xc0] sm:$0xff] %v1054
    %1119 = vst [vmem:[#allocation2 + $0xd8] sm:$0xff] %v1055
    %1120 = vst [vmem:[#allocation2 + $0xf0] sm:$0xff] %v1056
    %1121 = vst [vmem:[#allocation2 + $0x108] sm:$0xff] %v1057
    %1122 = vst [vmem:[#allocation2 + $0x120] sm:$0xff] %v1058
    %1123 = vst [vmem:[#allocation2 + $0x138] sm:$0xff] %v1059
    %1124 = vst [vmem:[#allocation2 + $0x150] sm:$0xff] %v1060
    %1125 = vst [vmem:[#allocation2 + $0x168] sm:$0xff] %v1061
    %1126 = vst [vmem:[#allocation2 + $0x8] sm:$0xff] %v998
    %1127 = vst [vmem:[#allocation2 + $0x20] sm:$0xff] %v999
    %1128 = vst [vmem:[#allocation2 + $0x38] sm:$0xff] %v1000
    %1129 = vst [vmem:[#allocation2 + $0x50] sm:$0xff] %v1001
    %1130 = vst [vmem:[#allocation2 + $0x68] sm:$0xff] %v1002
    %1131 = vst [vmem:[#allocation2 + $0x80] sm:$0xff] %v1003
    %1132 = vst [vmem:[#allocation2 + $0x98] sm:$0xff] %v1004
    %1133 = vst [vmem:[#allocation2 + $0xb0] sm:$0xff] %v1005
    %1134 = vst [vmem:[#allocation2 + $0xc8] sm:$0xff] %v1006
    %1135 = vst [vmem:[#allocation2 + $0xe0] sm:$0xff] %v1007
    %1136 = vst [vmem:[#allocation2 + $0xf8] sm:$0xff] %v1008
    %1137 = vst [vmem:[#allocation2 + $0x110] sm:$0xff] %v1009
    %1138 = vst [vmem:[#allocation2 + $0x128] sm:$0xff] %v1010
    %1139 = vst [vmem:[#allocation2 + $0x140] sm:$0xff] %v1011
    %1140 = vst [vmem:[#allocation2 + $0x158] sm:$0xff] %v1012
    %1141 = vst [vmem:[#allocation2 + $0x170] sm:$0xff] %v1013
    %1142 = vst [vmem:[#allocation2 + $0x10] sm:$0xff] %v1094
    %1143 = vst [vmem:[#allocation2 + $0x28] sm:$0xff] %v1095
    %1144 = vst [vmem:[#allocation2 + $0x40] sm:$0xff] %v1096
    %1145 = vst [vmem:[#allocation2 + $0x58] sm:$0xff] %v1097
    %1146 = vst [vmem:[#allocation2 + $0x70] sm:$0xff] %v1098
    %1147 = vst [vmem:[#allocation2 + $0x88] sm:$0xff] %v1099
    %1148 = vst [vmem:[#allocation2 + $0xa0] sm:$0xff] %v1100
    %1149 = vst [vmem:[#allocation2 + $0xb8] sm:$0xff] %v1101
    %1150 = vst [vmem:[#allocation2 + $0xd0] sm:$0xff] %v1102
    %1151 = vst [vmem:[#allocation2 + $0xe8] sm:$0xff] %v1103
    %1152 = vst [vmem:[#allocation2 + $0x100] sm:$0xff] %v1104
    %1153 = vst [vmem:[#allocation2 + $0x118] sm:$0xff] %v1105
    %1154 = vst [vmem:[#allocation2 + $0x130] sm:$0xff] %v1106
    %1155 = vst [vmem:[#allocation2 + $0x148] sm:$0xff] %v1107
    %1156 = vst [vmem:[#allocation2 + $0x160] sm:$0xff] %v1108
    %1157 = vst [vmem:[#allocation2 + $0x178] sm:$0xff] %v1109
    %v1158 = vld [vmem:[#allocation2] sm:$0xff]
    %v1159 = vld [vmem:[#allocation2 + $0x8] sm:$0xff]
    %v1160 = vld [vmem:[#allocation2 + $0x10] sm:$0xff]
    %v1161 = vld [vmem:[#allocation2 + $0x18] sm:$0xff]
    %v1162 = vld [vmem:[#allocation2 + $0x20] sm:$0xff]
    %v1163 = vld [vmem:[#allocation2 + $0x28] sm:$0xff]
    %v1164 = vld [vmem:[#allocation2 + $0x30] sm:$0xff]
    %v1165 = vld [vmem:[#allocation2 + $0x38] sm:$0xff]
    %v1166 = vld [vmem:[#allocation2 + $0x40] sm:$0xff]
    %v1167 = vld [vmem:[#allocation2 + $0x48] sm:$0xff]
    %v1168 = vld [vmem:[#allocation2 + $0x50] sm:$0xff]
    %v1169 = vld [vmem:[#allocation2 + $0x58] sm:$0xff]
    %v1170 = vld [vmem:[#allocation2 + $0x60] sm:$0xff]
    %v1171 = vld [vmem:[#allocation2 + $0x68] sm:$0xff]
    %v1172 = vld [vmem:[#allocation2 + $0x70] sm:$0xff]
    %v1173 = vld [vmem:[#allocation2 + $0x78] sm:$0xff]
    %v1174 = vld [vmem:[#allocation2 + $0x80] sm:$0xff]
    %v1175 = vld [vmem:[#allocation2 + $0x88] sm:$0xff]
    %v1176 = vld [vmem:[#allocation2 + $0x90] sm:$0xff]
    %v1177 = vld [vmem:[#allocation2 + $0x98] sm:$0xff]
    %v1178 = vld [vmem:[#allocation2 + $0xa0] sm:$0xff]
    %v1179 = vld [vmem:[#allocation2 + $0xa8] sm:$0xff]
    %v1180 = vld [vmem:[#allocation2 + $0xb0] sm:$0xff]
    %v1181 = vld [vmem:[#allocation2 + $0xb8] sm:$0xff]
    %v1182 = vld [vmem:[#allocation2 + $0xc0] sm:$0xff]
    %v1183 = vld [vmem:[#allocation2 + $0xc8] sm:$0xff]
    %v1184 = vld [vmem:[#allocation2 + $0xd0] sm:$0xff]
    %v1185 = vld [vmem:[#allocation2 + $0xd8] sm:$0xff]
    %v1186 = vld [vmem:[#allocation2 + $0xe0] sm:$0xff]
    %v1187 = vld [vmem:[#allocation2 + $0xe8] sm:$0xff]
    %v1188 = vld [vmem:[#allocation2 + $0xf0] sm:$0xff]
    %v1189 = vld [vmem:[#allocation2 + $0xf8] sm:$0xff]
    %v1190 = vld [vmem:[#allocation2 + $0x100] sm:$0xff]
    %v1191 = vld [vmem:[#allocation2 + $0x108] sm:$0xff]
    %v1192 = vld [vmem:[#allocation2 + $0x110] sm:$0xff]
    %v1193 = vld [vmem:[#allocation2 + $0x118] sm:$0xff]
    %v1194 = vld [vmem:[#allocation2 + $0x120] sm:$0xff]
    %v1195 = vld [vmem:[#allocation2 + $0x128] sm:$0xff]
    %v1196 = vld [vmem:[#allocation2 + $0x130] sm:$0xff]
    %v1197 = vld [vmem:[#allocation2 + $0x138] sm:$0xff]
    %v1198 = vld [vmem:[#allocation2 + $0x140] sm:$0xff]
    %v1199 = vld [vmem:[#allocation2 + $0x148] sm:$0xff]
    %v1200 = vld [vmem:[#allocation2 + $0x150] sm:$0xff]
    %v1201 = vld [vmem:[#allocation2 + $0x158] sm:$0xff]
    %v1202 = vld [vmem:[#allocation2 + $0x160] sm:$0xff]
    %v1203 = vld [vmem:[#allocation2 + $0x168] sm:$0xff]
    %v1204 = vld [vmem:[#allocation2 + $0x170] sm:$0xff]
    %v1205 = vld [vmem:[#allocation2 + $0x178] sm:$0xff]
    %s1206 = scalar_lea.vmem [#allocation7], 384
    %v1207 = vld [vmem:[%s1206] sm:$0xff]
    %v1208 = vld [vmem:[%s1206 + $0x8] sm:$0xff]
    %v1209 = vld [vmem:[%s1206 + $0x10] sm:$0xff]
    %v1210 = vld [vmem:[%s1206 + $0x18] sm:$0xff]
    %v1211 = vld [vmem:[%s1206 + $0x20] sm:$0xff]
    %v1212 = vld [vmem:[%s1206 + $0x28] sm:$0xff]
    %v1213 = vld [vmem:[%s1206 + $0x30] sm:$0xff]
    %v1214 = vld [vmem:[%s1206 + $0x38] sm:$0xff]
    %v1215 = vld [vmem:[%s1206 + $0x40] sm:$0xff]
    %v1216 = vld [vmem:[%s1206 + $0x48] sm:$0xff]
    %v1217 = vld [vmem:[%s1206 + $0x50] sm:$0xff]
    %v1218 = vld [vmem:[%s1206 + $0x58] sm:$0xff]
    %v1219 = vld [vmem:[%s1206 + $0x60] sm:$0xff]
    %v1220 = vld [vmem:[%s1206 + $0x68] sm:$0xff]
    %v1221 = vld [vmem:[%s1206 + $0x70] sm:$0xff]
    %v1222 = vld [vmem:[%s1206 + $0x78] sm:$0xff]
    %v1223 = vld [vmem:[%s1206 + $0x80] sm:$0xff]
    %v1224 = vld [vmem:[%s1206 + $0x88] sm:$0xff]
    %v1225 = vld [vmem:[%s1206 + $0x90] sm:$0xff]
    %v1226 = vld [vmem:[%s1206 + $0x98] sm:$0xff]
    %v1227 = vld [vmem:[%s1206 + $0xa0] sm:$0xff]
    %v1228 = vld [vmem:[%s1206 + $0xa8] sm:$0xff]
    %v1229 = vld [vmem:[%s1206 + $0xb0] sm:$0xff]
    %v1230 = vld [vmem:[%s1206 + $0xb8] sm:$0xff]
    %v1231 = vld [vmem:[%s1206 + $0xc0] sm:$0xff]
    %v1232 = vld [vmem:[%s1206 + $0xc8] sm:$0xff]
    %v1233 = vld [vmem:[%s1206 + $0xd0] sm:$0xff]
    %v1234 = vld [vmem:[%s1206 + $0xd8] sm:$0xff]
    %v1235 = vld [vmem:[%s1206 + $0xe0] sm:$0xff]
    %v1236 = vld [vmem:[%s1206 + $0xe8] sm:$0xff]
    %v1237 = vld [vmem:[%s1206 + $0xf0] sm:$0xff]
    %v1238 = vld [vmem:[%s1206 + $0xf8] sm:$0xff]
    %v1239 = vld [vmem:[%s1206 + $0x100] sm:$0xff]
    %v1240 = vld [vmem:[%s1206 + $0x108] sm:$0xff]
    %v1241 = vld [vmem:[%s1206 + $0x110] sm:$0xff]
    %v1242 = vld [vmem:[%s1206 + $0x118] sm:$0xff]
    %v1243 = vld [vmem:[%s1206 + $0x120] sm:$0xff]
    %v1244 = vld [vmem:[%s1206 + $0x128] sm:$0xff]
    %v1245 = vld [vmem:[%s1206 + $0x130] sm:$0xff]
    %v1246 = vld [vmem:[%s1206 + $0x138] sm:$0xff]
    %v1247 = vld [vmem:[%s1206 + $0x140] sm:$0xff]
    %v1248 = vld [vmem:[%s1206 + $0x148] sm:$0xff]
    %v1249 = vld [vmem:[%s1206 + $0x150] sm:$0xff]
    %v1250 = vld [vmem:[%s1206 + $0x158] sm:$0xff]
    %v1251 = vld [vmem:[%s1206 + $0x160] sm:$0xff]
    %v1252 = vld [vmem:[%s1206 + $0x168] sm:$0xff]
    %v1253 = vld [vmem:[%s1206 + $0x170] sm:$0xff]
    %v1254 = vld [vmem:[%s1206 + $0x178] sm:$0xff]
    %s1255 = scalar_lea.vmem [#allocation8], 1
    %v1256 = vld [vmem:[%s1255] sm:$0x1]
    %v1258 = vlaneseq
    %v1259 = vshrl.u32 %v1258, 7
    %v1260 = vsub.s32 0, %v1259
    %v1261 = vrot.slane %v1256, %v1260
    %1263 = vmatprep.subr.mxu0 0.0
    %1264 = vmatpush1.msra.mxu0 %v1222
    %1265 = vmatprep.subr.mxu0 0.0
    %1266 = vmatpush1.msra.mxu0 %v1221
    %1267 = vmatprep.subr.mxu0 0.0
    %1268 = vmatpush1.msra.mxu0 %v1220
    %1269 = vmatprep.subr.mxu0 0.0
    %1270 = vmatpush1.msra.mxu0 %v1219
    %1271 = vmatprep.subr.mxu0 0.0
    %1272 = vmatpush1.msra.mxu0 %v1218
    %1273 = vmatprep.subr.mxu0 0.0
    %1274 = vmatpush1.msra.mxu0 %v1217
    %1275 = vmatprep.subr.mxu0 0.0
    %1276 = vmatpush1.msra.mxu0 %v1216
    %1277 = vmatprep.subr.mxu0 0.0
    %1278 = vmatpush1.msra.mxu0 %v1215
    %1279 = vmatprep.subr.mxu0 0.0
    %1280 = vmatpush1.msra.mxu0 %v1214
    %1281 = vmatprep.subr.mxu0 0.0
    %1282 = vmatpush1.msra.mxu0 %v1213
    %1283 = vmatprep.subr.mxu0 0.0
    %1284 = vmatpush1.msra.mxu0 %v1212
    %1285 = vmatprep.subr.mxu0 0.0
    %1286 = vmatpush1.msra.mxu0 %v1211
    %1287 = vmatprep.subr.mxu0 0.0
    %1288 = vmatpush1.msra.mxu0 %v1210
    %1289 = vmatprep.subr.mxu0 0.0
    %1290 = vmatpush1.msra.mxu0 %v1209
    %1291 = vmatprep.subr.mxu0 0.0
    %1292 = vmatpush1.msra.mxu0 %v1208
    %1293 = vmatprep.subr.mxu0 0.0
    %1294 = vmatpush1.msra.mxu0 %v1207
    %1295 = vmatprep.subr.mxu0 0.0
    %1296 = vmatpush2.msra.mxu0 %v1238
    %1297 = vmatprep.subr.mxu0 0.0
    %1298 = vmatpush2.msra.mxu0 %v1237
    %1299 = vmatprep.subr.mxu0 0.0
    %1300 = vmatpush2.msra.mxu0 %v1236
    %1301 = vmatprep.subr.mxu0 0.0
    %1302 = vmatpush2.msra.mxu0 %v1235
    %1303 = vmatprep.subr.mxu0 0.0
    %1304 = vmatpush2.msra.mxu0 %v1234
    %1305 = vmatprep.subr.mxu0 0.0
    %1306 = vmatpush2.msra.mxu0 %v1233
    %1307 = vmatprep.subr.mxu0 0.0
    %1308 = vmatpush2.msra.mxu0 %v1232
    %1309 = vmatprep.subr.mxu0 0.0
    %1310 = vmatpush2.msra.mxu0 %v1231
    %1311 = vmatprep.subr.mxu0 0.0
    %1312 = vmatpush2.msra.mxu0 %v1230
    %1313 = vmatprep.subr.mxu0 0.0
    %1314 = vmatpush2.msra.mxu0 %v1229
    %1315 = vmatprep.subr.mxu0 0.0
    %1316 = vmatpush2.msra.mxu0 %v1228
    %1317 = vmatprep.subr.mxu0 0.0
    %1318 = vmatpush2.msra.mxu0 %v1227
    %1319 = vmatprep.subr.mxu0 0.0
    %1320 = vmatpush2.msra.mxu0 %v1226
    %1321 = vmatprep.subr.mxu0 0.0
    %1322 = vmatpush2.msra.mxu0 %v1225
    %1323 = vmatprep.subr.mxu0 0.0
    %1324 = vmatpush2.msra.mxu0 %v1224
    %1325 = vmatprep.subr.mxu0 0.0
    %1326 = vmatpush2.msra.mxu0 %v1223
    %1327 = vmatprep.mubr.f32.mxu0 %v1159
    %1328 = vmatmul.mubr.f32.gmra.mxu0 %v1158
    %v1329 = vpop.f32.mrf.mxu0
    %v1330 = vadd.f32 %v1261, %v1329
    %v1331 = vpop.f32.mrf.mxu0
    %1332 = vmatprep.mubr.f32.mxu0 %v1162
    %1333 = vmatmul.mubr.f32.gmra.mxu0 %v1161
    %v1334 = vpop.f32.mrf.mxu0
    %v1335 = vadd.f32 %v1261, %v1334
    %v1336 = vpop.f32.mrf.mxu0
    %1337 = vmatprep.mubr.f32.mxu0 %v1165
    %1338 = vmatmul.mubr.f32.gmra.mxu0 %v1164
    %v1339 = vpop.f32.mrf.mxu0
    %v1340 = vadd.f32 %v1261, %v1339
    %v1341 = vpop.f32.mrf.mxu0
    %1342 = vmatprep.mubr.f32.mxu0 %v1168
    %1343 = vmatmul.mubr.f32.gmra.mxu0 %v1167
    %v1344 = vpop.f32.mrf.mxu0
    %v1345 = vadd.f32 %v1261, %v1344
    %v1346 = vpop.f32.mrf.mxu0
    %1347 = vmatprep.mubr.f32.mxu0 %v1171
    %1348 = vmatmul.mubr.f32.gmra.mxu0 %v1170
    %v1349 = vpop.f32.mrf.mxu0
    %v1350 = vadd.f32 %v1261, %v1349
    %v1351 = vpop.f32.mrf.mxu0
    %1352 = vmatprep.mubr.f32.mxu0 %v1174
    %1353 = vmatmul.mubr.f32.gmra.mxu0 %v1173
    %v1354 = vpop.f32.mrf.mxu0
    %v1355 = vadd.f32 %v1261, %v1354
    %v1356 = vpop.f32.mrf.mxu0
    %1357 = vmatprep.mubr.f32.mxu0 %v1177
    %1358 = vmatmul.mubr.f32.gmra.mxu0 %v1176
    %v1359 = vpop.f32.mrf.mxu0
    %v1360 = vadd.f32 %v1261, %v1359
    %v1361 = vpop.f32.mrf.mxu0
    %1362 = vmatprep.mubr.f32.mxu0 %v1180
    %1363 = vmatmul.mubr.f32.gmra.mxu0 %v1179
    %v1364 = vpop.f32.mrf.mxu0
    %v1365 = vadd.f32 %v1261, %v1364
    %v1366 = vpop.f32.mrf.mxu0
    %1367 = vmatprep.mubr.f32.mxu0 %v1183
    %1368 = vmatmul.mubr.f32.gmra.mxu0 %v1182
    %v1369 = vpop.f32.mrf.mxu0
    %v1370 = vadd.f32 %v1261, %v1369
    %v1371 = vpop.f32.mrf.mxu0
    %1372 = vmatprep.mubr.f32.mxu0 %v1186
    %1373 = vmatmul.mubr.f32.gmra.mxu0 %v1185
    %v1374 = vpop.f32.mrf.mxu0
    %v1375 = vadd.f32 %v1261, %v1374
    %v1376 = vpop.f32.mrf.mxu0
    %1377 = vmatprep.mubr.f32.mxu0 %v1189
    %1378 = vmatmul.mubr.f32.gmra.mxu0 %v1188
    %v1379 = vpop.f32.mrf.mxu0
    %v1380 = vadd.f32 %v1261, %v1379
    %v1381 = vpop.f32.mrf.mxu0
    %1382 = vmatprep.mubr.f32.mxu0 %v1192
    %1383 = vmatmul.mubr.f32.gmra.mxu0 %v1191
    %v1384 = vpop.f32.mrf.mxu0
    %v1385 = vadd.f32 %v1261, %v1384
    %v1386 = vpop.f32.mrf.mxu0
    %1387 = vmatprep.mubr.f32.mxu0 %v1195
    %1388 = vmatmul.mubr.f32.gmra.mxu0 %v1194
    %v1389 = vpop.f32.mrf.mxu0
    %v1390 = vadd.f32 %v1261, %v1389
    %v1391 = vpop.f32.mrf.mxu0
    %1392 = vmatprep.mubr.f32.mxu0 %v1198
    %1393 = vmatmul.mubr.f32.gmra.mxu0 %v1197
    %v1394 = vpop.f32.mrf.mxu0
    %v1395 = vadd.f32 %v1261, %v1394
    %v1396 = vpop.f32.mrf.mxu0
    %1397 = vmatprep.mubr.f32.mxu0 %v1201
    %1398 = vmatmul.mubr.f32.gmra.mxu0 %v1200
    %v1399 = vpop.f32.mrf.mxu0
    %v1400 = vadd.f32 %v1261, %v1399
    %v1401 = vpop.f32.mrf.mxu0
    %1402 = vmatprep.mubr.f32.mxu0 %v1204
    %1403 = vmatmul.mubr.f32.gmra.mxu0 %v1203
    %v1404 = vpop.f32.mrf.mxu0
    %v1405 = vadd.f32 %v1261, %v1404
    %v1406 = vpop.f32.mrf.mxu0
    %1407 = vdwg.mxu0
    %1408 = vmatprep.subr.mxu0 0.0
    %1409 = vmatpush1.msra.mxu0 %v1254
    %1410 = vmatprep.subr.mxu0 0.0
    %1411 = vmatpush1.msra.mxu0 %v1253
    %1412 = vmatprep.subr.mxu0 0.0
    %1413 = vmatpush1.msra.mxu0 %v1252
    %1414 = vmatprep.subr.mxu0 0.0
    %1415 = vmatpush1.msra.mxu0 %v1251
    %1416 = vmatprep.subr.mxu0 0.0
    %1417 = vmatpush1.msra.mxu0 %v1250
    %1418 = vmatprep.subr.mxu0 0.0
    %1419 = vmatpush1.msra.mxu0 %v1249
    %1420 = vmatprep.subr.mxu0 0.0
    %1421 = vmatpush1.msra.mxu0 %v1248
    %1422 = vmatprep.subr.mxu0 0.0
    %1423 = vmatpush1.msra.mxu0 %v1247
    %1424 = vmatprep.subr.mxu0 0.0
    %1425 = vmatpush1.msra.mxu0 %v1246
    %1426 = vmatprep.subr.mxu0 0.0
    %1427 = vmatpush1.msra.mxu0 %v1245
    %1428 = vmatprep.subr.mxu0 0.0
    %1429 = vmatpush1.msra.mxu0 %v1244
    %1430 = vmatprep.subr.mxu0 0.0
    %1431 = vmatpush1.msra.mxu0 %v1243
    %1432 = vmatprep.subr.mxu0 0.0
    %1433 = vmatpush1.msra.mxu0 %v1242
    %1434 = vmatprep.subr.mxu0 0.0
    %1435 = vmatpush1.msra.mxu0 %v1241
    %1436 = vmatprep.subr.mxu0 0.0
    %1437 = vmatpush1.msra.mxu0 %v1240
    %1438 = vmatprep.subr.mxu0 0.0
    %1439 = vmatpush1.msra.mxu0 %v1239
    %1440 = vmatprep.subr.mxu0 0.0
    %1441 = vmatpush2.msra.mxu0 0.0
    %1442 = vmatprep.subr.mxu0 0.0
    %1443 = vmatpush2.msra.mxu0 0.0
    %1444 = vmatprep.subr.mxu0 0.0
    %1445 = vmatpush2.msra.mxu0 0.0
    %1446 = vmatprep.subr.mxu0 0.0
    %1447 = vmatpush2.msra.mxu0 0.0
    %1448 = vmatprep.subr.mxu0 0.0
    %1449 = vmatpush2.msra.mxu0 0.0
    %1450 = vmatprep.subr.mxu0 0.0
    %1451 = vmatpush2.msra.mxu0 0.0
    %1452 = vmatprep.subr.mxu0 0.0
    %1453 = vmatpush2.msra.mxu0 0.0
    %1454 = vmatprep.subr.mxu0 0.0
    %1455 = vmatpush2.msra.mxu0 0.0
    %1456 = vmatprep.subr.mxu0 0.0
    %1457 = vmatpush2.msra.mxu0 0.0
    %1458 = vmatprep.subr.mxu0 0.0
    %1459 = vmatpush2.msra.mxu0 0.0
    %1460 = vmatprep.subr.mxu0 0.0
    %1461 = vmatpush2.msra.mxu0 0.0
    %1462 = vmatprep.subr.mxu0 0.0
    %1463 = vmatpush2.msra.mxu0 0.0
    %1464 = vmatprep.subr.mxu0 0.0
    %1465 = vmatpush2.msra.mxu0 0.0
    %1466 = vmatprep.subr.mxu0 0.0
    %1467 = vmatpush2.msra.mxu0 0.0
    %1468 = vmatprep.subr.mxu0 0.0
    %1469 = vmatpush2.msra.mxu0 0.0
    %1470 = vmatprep.subr.mxu0 0.0
    %1471 = vmatpush2.msra.mxu0 0.0
    %1472 = vmatprep.mubr.f32.mxu0 0.0
    %1473 = vmatmul.mubr.f32.gmra.mxu0 %v1160
    %v1474 = vpop.f32.mrf.mxu0
    %v1475 = vadd.f32 %v1330, %v1474
    %v1476 = vpop.f32.mrf.mxu0
    %1477 = vmatprep.mubr.f32.mxu0 0.0
    %1478 = vmatmul.mubr.f32.gmra.mxu0 %v1163
    %v1479 = vpop.f32.mrf.mxu0
    %v1480 = vadd.f32 %v1335, %v1479
    %v1481 = vpop.f32.mrf.mxu0
    %1482 = vmatprep.mubr.f32.mxu0 0.0
    %1483 = vmatmul.mubr.f32.gmra.mxu0 %v1166
    %v1484 = vpop.f32.mrf.mxu0
    %v1485 = vadd.f32 %v1340, %v1484
    %v1486 = vpop.f32.mrf.mxu0
    %1487 = vmatprep.mubr.f32.mxu0 0.0
    %1488 = vmatmul.mubr.f32.gmra.mxu0 %v1169
    %v1489 = vpop.f32.mrf.mxu0
    %v1490 = vadd.f32 %v1345, %v1489
    %v1491 = vpop.f32.mrf.mxu0
    %1492 = vmatprep.mubr.f32.mxu0 0.0
    %1493 = vmatmul.mubr.f32.gmra.mxu0 %v1172
    %v1494 = vpop.f32.mrf.mxu0
    %v1495 = vadd.f32 %v1350, %v1494
    %v1496 = vpop.f32.mrf.mxu0
    %1497 = vmatprep.mubr.f32.mxu0 0.0
    %1498 = vmatmul.mubr.f32.gmra.mxu0 %v1175
    %v1499 = vpop.f32.mrf.mxu0
    %v1500 = vadd.f32 %v1355, %v1499
    %v1501 = vpop.f32.mrf.mxu0
    %1502 = vmatprep.mubr.f32.mxu0 0.0
    %1503 = vmatmul.mubr.f32.gmra.mxu0 %v1178
    %v1504 = vpop.f32.mrf.mxu0
    %v1505 = vadd.f32 %v1360, %v1504
    %v1506 = vpop.f32.mrf.mxu0
    %1507 = vmatprep.mubr.f32.mxu0 0.0
    %1508 = vmatmul.mubr.f32.gmra.mxu0 %v1181
    %v1509 = vpop.f32.mrf.mxu0
    %v1510 = vadd.f32 %v1365, %v1509
    %v1511 = vpop.f32.mrf.mxu0
    %1512 = vmatprep.mubr.f32.mxu0 0.0
    %1513 = vmatmul.mubr.f32.gmra.mxu0 %v1184
    %v1514 = vpop.f32.mrf.mxu0
    %v1515 = vadd.f32 %v1370, %v1514
    %v1516 = vpop.f32.mrf.mxu0
    %1517 = vmatprep.mubr.f32.mxu0 0.0
    %1518 = vmatmul.mubr.f32.gmra.mxu0 %v1187
    %v1519 = vpop.f32.mrf.mxu0
    %v1520 = vadd.f32 %v1375, %v1519
    %v1521 = vpop.f32.mrf.mxu0
    %1522 = vmatprep.mubr.f32.mxu0 0.0
    %1523 = vmatmul.mubr.f32.gmra.mxu0 %v1190
    %v1524 = vpop.f32.mrf.mxu0
    %v1525 = vadd.f32 %v1380, %v1524
    %v1526 = vpop.f32.mrf.mxu0
    %1527 = vmatprep.mubr.f32.mxu0 0.0
    %1528 = vmatmul.mubr.f32.gmra.mxu0 %v1193
    %v1529 = vpop.f32.mrf.mxu0
    %v1530 = vadd.f32 %v1385, %v1529
    %v1531 = vpop.f32.mrf.mxu0
    %1532 = vmatprep.mubr.f32.mxu0 0.0
    %1533 = vmatmul.mubr.f32.gmra.mxu0 %v1196
    %v1534 = vpop.f32.mrf.mxu0
    %v1535 = vadd.f32 %v1390, %v1534
    %v1536 = vpop.f32.mrf.mxu0
    %1537 = vmatprep.mubr.f32.mxu0 0.0
    %1538 = vmatmul.mubr.f32.gmra.mxu0 %v1199
    %v1539 = vpop.f32.mrf.mxu0
    %v1540 = vadd.f32 %v1395, %v1539
    %v1541 = vpop.f32.mrf.mxu0
    %1542 = vmatprep.mubr.f32.mxu0 0.0
    %1543 = vmatmul.mubr.f32.gmra.mxu0 %v1202
    %v1544 = vpop.f32.mrf.mxu0
    %v1545 = vadd.f32 %v1400, %v1544
    %v1546 = vpop.f32.mrf.mxu0
    %1547 = vmatprep.mubr.f32.mxu0 0.0
    %1548 = vmatmul.mubr.f32.gmra.mxu0 %v1205
    %v1549 = vpop.f32.mrf.mxu0
    %v1550 = vadd.f32 %v1405, %v1549
    %v1551 = vpop.f32.mrf.mxu0
    %1552 = vdwg.mxu0
    %v1553 = vadd.f32 %v1475, %v347
    %v1554 = vadd.f32 %v1480, %v348
    %v1555 = vadd.f32 %v1485, %v349
    %v1556 = vadd.f32 %v1490, %v350
    %v1557 = vadd.f32 %v1495, %v351
    %v1558 = vadd.f32 %v1500, %v352
    %v1559 = vadd.f32 %v1505, %v353
    %v1560 = vadd.f32 %v1510, %v354
    %v1561 = vadd.f32 %v1515, %v355
    %v1562 = vadd.f32 %v1520, %v356
    %v1563 = vadd.f32 %v1525, %v357
    %v1564 = vadd.f32 %v1530, %v358
    %v1565 = vadd.f32 %v1535, %v359
    %v1566 = vadd.f32 %v1540, %v360
    %v1567 = vadd.f32 %v1545, %v361
    %v1568 = vadd.f32 %v1550, %v362
    %v1569 = vmax.f32 %v1553, 0.0
    %v1570 = vmax.f32 %v1554, 0.0
    %v1571 = vmax.f32 %v1555, 0.0
    %v1572 = vmax.f32 %v1556, 0.0
    %v1573 = vmax.f32 %v1557, 0.0
    %v1574 = vmax.f32 %v1558, 0.0
    %v1575 = vmax.f32 %v1559, 0.0
    %v1576 = vmax.f32 %v1560, 0.0
    %v1577 = vmax.f32 %v1561, 0.0
    %v1578 = vmax.f32 %v1562, 0.0
    %v1579 = vmax.f32 %v1563, 0.0
    %v1580 = vmax.f32 %v1564, 0.0
    %v1581 = vmax.f32 %v1565, 0.0
    %v1582 = vmax.f32 %v1566, 0.0
    %v1583 = vmax.f32 %v1567, 0.0
    %v1584 = vmax.f32 %v1568, 0.0
    %vm1585 = vcmp.ge.s32.totalorder %v171, 4
    %vm1586 = vcmp.ge.s32.totalorder %v172, 4
    %vm1587 = vcmp.ge.s32.totalorder %v173, 4
    %vm1588 = vcmp.ge.s32.totalorder %v174, 4
    %vm1589 = vcmp.ge.s32.totalorder %v175, 4
    %vm1590 = vcmp.ge.s32.totalorder %v176, 4
    %vm1591 = vcmp.ge.s32.totalorder %v177, 4
    %vm1592 = vcmp.ge.s32.totalorder %v178, 4
    %v1593 = vrot.slane %v1569, 4
    %v1594 = vrot.slane %v1570, 4
    %v1595 = vrot.slane %v1571, 4
    %v1596 = vrot.slane %v1572, 4
    %v1597 = vrot.slane %v1573, 4
    %v1598 = vrot.slane %v1574, 4
    %v1599 = vrot.slane %v1575, 4
    %v1600 = vrot.slane %v1576, 4
    %v1601 = vrot.slane %v1577, 4
    %v1602 = vrot.slane %v1578, 4
    %v1603 = vrot.slane %v1579, 4
    %v1604 = vrot.slane %v1580, 4
    %v1605 = vrot.slane %v1581, 4
    %v1606 = vrot.slane %v1582, 4
    %v1607 = vrot.slane %v1583, 4
    %v1608 = vrot.slane %v1584, 4
    %vm1609 = vcmp.lt.s32.totalorder %v171, 4
    %v1610 = vsel %vm1609, %v1607, %v1608
    %v1611 = vsel %vm1609, %v1606, %v1607
    %v1612 = vsel %vm1609, %v1605, %v1606
    %v1613 = vsel %vm1609, %v1604, %v1605
    %v1614 = vsel %vm1609, %v1603, %v1604
    %v1615 = vsel %vm1609, %v1602, %v1603
    %v1616 = vsel %vm1609, %v1601, %v1602
    %v1617 = vsel %vm1609, %v1600, %v1601
    %v1618 = vsel %vm1609, %v1599, %v1600
    %v1619 = vsel %vm1609, %v1598, %v1599
    %v1620 = vsel %vm1609, %v1597, %v1598
    %v1621 = vsel %vm1609, %v1596, %v1597
    %v1622 = vsel %vm1609, %v1595, %v1596
    %v1623 = vsel %vm1609, %v1594, %v1595
    %v1624 = vsel %vm1609, %v1593, %v1594
    %v1625 = vsel %vm1609, %v1608, %v1593
    %v1626 = vsel %vm1585, 1, 0
    %v1627 = vsel %vm1586, 1, 0
    %v1628 = vsel %vm1587, 1, 0
    %v1629 = vsel %vm1588, 1, 0
    %v1630 = vsel %vm1589, 1, 0
    %v1631 = vsel %vm1590, 1, 0
    %v1632 = vsel %vm1591, 1, 0
    %v1633 = vsel %vm1592, 1, 0
    %1634 = vset.pattern.permute.xlu0 0
    %1635 = vperm.xlu0 %1634, %v1626
    %v1636 = vpop.permute.xlu0 %1635
    %1637 = vset.pattern.permute.xlu0 0
    %1638 = vperm.xlu0 %1637, %v1627
    %v1639 = vpop.permute.xlu0 %1638
    %1640 = vset.pattern.permute.xlu0 0
    %1641 = vperm.xlu0 %1640, %v1628
    %v1642 = vpop.permute.xlu0 %1641
    %1643 = vset.pattern.permute.xlu0 0
    %1644 = vperm.xlu0 %1643, %v1629
    %v1645 = vpop.permute.xlu0 %1644
    %1646 = vset.pattern.permute.xlu0 0
    %1647 = vperm.xlu0 %1646, %v1630
    %v1648 = vpop.permute.xlu0 %1647
    %1649 = vset.pattern.permute.xlu0 0
    %1650 = vperm.xlu0 %1649, %v1631
    %v1651 = vpop.permute.xlu0 %1650
    %1652 = vset.pattern.permute.xlu0 0
    %1653 = vperm.xlu0 %1652, %v1632
    %v1654 = vpop.permute.xlu0 %1653
    %1655 = vset.pattern.permute.xlu0 0
    %1656 = vperm.xlu0 %1655, %v1633
    %v1657 = vpop.permute.xlu0 %1656
    %vm1658 = vcmp.eq.s32.totalorder %v1636, 1
    %vm1659 = vcmp.eq.s32.totalorder %v1639, 1
    %vm1660 = vcmp.eq.s32.totalorder %v1642, 1
    %vm1661 = vcmp.eq.s32.totalorder %v1645, 1
    %vm1662 = vcmp.eq.s32.totalorder %v1648, 1
    %vm1663 = vcmp.eq.s32.totalorder %v1651, 1
    %vm1664 = vcmp.eq.s32.totalorder %v1654, 1
    %vm1665 = vcmp.eq.s32.totalorder %v1657, 1
    %v1666 = vsel %vm1658, %v1625, 0.0
    %v1667 = vsel %vm1659, %v1624, 0.0
    %v1668 = vsel %vm1660, %v1623, 0.0
    %v1669 = vsel %vm1661, %v1622, 0.0
    %v1670 = vsel %vm1662, %v1621, 0.0
    %v1671 = vsel %vm1663, %v1620, 0.0
    %v1672 = vsel %vm1664, %v1619, 0.0
    %v1673 = vsel %vm1665, %v1618, 0.0
    %v1674 = vsel %vm1658, %v1617, 0.0
    %v1675 = vsel %vm1659, %v1616, 0.0
    %v1676 = vsel %vm1660, %v1615, 0.0
    %v1677 = vsel %vm1661, %v1614, 0.0
    %v1678 = vsel %vm1662, %v1613, 0.0
    %v1679 = vsel %vm1663, %v1612, 0.0
    %v1680 = vsel %vm1664, %v1611, 0.0
    %v1681 = vsel %vm1665, %v1610, 0.0
    %vm1682 = vcmp.lt.s32.totalorder %v171, 60
    %vm1683 = vcmp.lt.s32.totalorder %v172, 60
    %vm1684 = vcmp.lt.s32.totalorder %v173, 60
    %vm1685 = vcmp.lt.s32.totalorder %v174, 60
    %vm1686 = vcmp.lt.s32.totalorder %v175, 60
    %vm1687 = vcmp.lt.s32.totalorder %v176, 60
    %vm1688 = vcmp.lt.s32.totalorder %v177, 60
    %vm1689 = vcmp.lt.s32.totalorder %v178, 60
    %v1690 = vsel %vm1682, 1, 0
    %v1691 = vsel %vm1683, 1, 0
    %v1692 = vsel %vm1684, 1, 0
    %v1693 = vsel %vm1685, 1, 0
    %v1694 = vsel %vm1686, 1, 0
    %v1695 = vsel %vm1687, 1, 0
    %v1696 = vsel %vm1688, 1, 0
    %v1697 = vsel %vm1689, 1, 0
    %1698 = vset.pattern.permute.xlu0 0
    %1699 = vperm.xlu0 %1698, %v1690
    %v1700 = vpop.permute.xlu0 %1699
    %1701 = vset.pattern.permute.xlu0 0
    %1702 = vperm.xlu0 %1701, %v1691
    %v1703 = vpop.permute.xlu0 %1702
    %1704 = vset.pattern.permute.xlu0 0
    %1705 = vperm.xlu0 %1704, %v1692
    %v1706 = vpop.permute.xlu0 %1705
    %1707 = vset.pattern.permute.xlu0 0
    %1708 = vperm.xlu0 %1707, %v1693
    %v1709 = vpop.permute.xlu0 %1708
    %1710 = vset.pattern.permute.xlu0 0
    %1711 = vperm.xlu0 %1710, %v1694
    %v1712 = vpop.permute.xlu0 %1711
    %1713 = vset.pattern.permute.xlu0 0
    %1714 = vperm.xlu0 %1713, %v1695
    %v1715 = vpop.permute.xlu0 %1714
    %1716 = vset.pattern.permute.xlu0 0
    %1717 = vperm.xlu0 %1716, %v1696
    %v1718 = vpop.permute.xlu0 %1717
    %1719 = vset.pattern.permute.xlu0 0
    %1720 = vperm.xlu0 %1719, %v1697
    %v1721 = vpop.permute.xlu0 %1720
    %vm1722 = vcmp.eq.s32.totalorder %v1700, 1
    %vm1723 = vcmp.eq.s32.totalorder %v1703, 1
    %vm1724 = vcmp.eq.s32.totalorder %v1706, 1
    %vm1725 = vcmp.eq.s32.totalorder %v1709, 1
    %vm1726 = vcmp.eq.s32.totalorder %v1712, 1
    %vm1727 = vcmp.eq.s32.totalorder %v1715, 1
    %vm1728 = vcmp.eq.s32.totalorder %v1718, 1
    %vm1729 = vcmp.eq.s32.totalorder %v1721, 1
    %v1730 = vsel %vm1722, %v1624, 0.0
    %v1731 = vsel %vm1723, %v1623, 0.0
    %v1732 = vsel %vm1724, %v1622, 0.0
    %v1733 = vsel %vm1725, %v1621, 0.0
    %v1734 = vsel %vm1726, %v1620, 0.0
    %v1735 = vsel %vm1727, %v1619, 0.0
    %v1736 = vsel %vm1728, %v1618, 0.0
    %v1737 = vsel %vm1729, %v1617, 0.0
    %v1738 = vsel %vm1722, %v1616, 0.0
    %v1739 = vsel %vm1723, %v1615, 0.0
    %v1740 = vsel %vm1724, %v1614, 0.0
    %v1741 = vsel %vm1725, %v1613, 0.0
    %v1742 = vsel %vm1726, %v1612, 0.0
    %v1743 = vsel %vm1727, %v1611, 0.0
    %v1744 = vsel %vm1728, %v1610, 0.0
    %v1745 = vsel %vm1729, %v1625, 0.0
    %1746 = vst [vmem:[#allocation2] sm:$0xff] %v1666
    %1747 = vst [vmem:[#allocation2 + $0x18] sm:$0xff] %v1667
    %1748 = vst [vmem:[#allocation2 + $0x30] sm:$0xff] %v1668
    %1749 = vst [vmem:[#allocation2 + $0x48] sm:$0xff] %v1669
    %1750 = vst [vmem:[#allocation2 + $0x60] sm:$0xff] %v1670
    %1751 = vst [vmem:[#allocation2 + $0x78] sm:$0xff] %v1671
    %1752 = vst [vmem:[#allocation2 + $0x90] sm:$0xff] %v1672
    %1753 = vst [vmem:[#allocation2 + $0xa8] sm:$0xff] %v1673
    %1754 = vst [vmem:[#allocation2 + $0xc0] sm:$0xff] %v1674
    %1755 = vst [vmem:[#allocation2 + $0xd8] sm:$0xff] %v1675
    %1756 = vst [vmem:[#allocation2 + $0xf0] sm:$0xff] %v1676
    %1757 = vst [vmem:[#allocation2 + $0x108] sm:$0xff] %v1677
    %1758 = vst [vmem:[#allocation2 + $0x120] sm:$0xff] %v1678
    %1759 = vst [vmem:[#allocation2 + $0x138] sm:$0xff] %v1679
    %1760 = vst [vmem:[#allocation2 + $0x150] sm:$0xff] %v1680
    %1761 = vst [vmem:[#allocation2 + $0x168] sm:$0xff] %v1681
    %1762 = vst [vmem:[#allocation2 + $0x8] sm:$0xff] %v1569
    %1763 = vst [vmem:[#allocation2 + $0x20] sm:$0xff] %v1570
    %1764 = vst [vmem:[#allocation2 + $0x38] sm:$0xff] %v1571
    %1765 = vst [vmem:[#allocation2 + $0x50] sm:$0xff] %v1572
    %1766 = vst [vmem:[#allocation2 + $0x68] sm:$0xff] %v1573
    %1767 = vst [vmem:[#allocation2 + $0x80] sm:$0xff] %v1574
    %1768 = vst [vmem:[#allocation2 + $0x98] sm:$0xff] %v1575
    %1769 = vst [vmem:[#allocation2 + $0xb0] sm:$0xff] %v1576
    %1770 = vst [vmem:[#allocation2 + $0xc8] sm:$0xff] %v1577
    %1771 = vst [vmem:[#allocation2 + $0xe0] sm:$0xff] %v1578
    %1772 = vst [vmem:[#allocation2 + $0xf8] sm:$0xff] %v1579
    %1773 = vst [vmem:[#allocation2 + $0x110] sm:$0xff] %v1580
    %1774 = vst [vmem:[#allocation2 + $0x128] sm:$0xff] %v1581
    %1775 = vst [vmem:[#allocation2 + $0x140] sm:$0xff] %v1582
    %1776 = vst [vmem:[#allocation2 + $0x158] sm:$0xff] %v1583
    %1777 = vst [vmem:[#allocation2 + $0x170] sm:$0xff] %v1584
    %1778 = vst [vmem:[#allocation2 + $0x10] sm:$0xff] %v1730
    %1779 = vst [vmem:[#allocation2 + $0x28] sm:$0xff] %v1731
    %1780 = vst [vmem:[#allocation2 + $0x40] sm:$0xff] %v1732
    %1781 = vst [vmem:[#allocation2 + $0x58] sm:$0xff] %v1733
    %1782 = vst [vmem:[#allocation2 + $0x70] sm:$0xff] %v1734
    %1783 = vst [vmem:[#allocation2 + $0x88] sm:$0xff] %v1735
    %1784 = vst [vmem:[#allocation2 + $0xa0] sm:$0xff] %v1736
    %1785 = vst [vmem:[#allocation2 + $0xb8] sm:$0xff] %v1737
    %1786 = vst [vmem:[#allocation2 + $0xd0] sm:$0xff] %v1738
    %1787 = vst [vmem:[#allocation2 + $0xe8] sm:$0xff] %v1739
    %1788 = vst [vmem:[#allocation2 + $0x100] sm:$0xff] %v1740
    %1789 = vst [vmem:[#allocation2 + $0x118] sm:$0xff] %v1741
    %1790 = vst [vmem:[#allocation2 + $0x130] sm:$0xff] %v1742
    %1791 = vst [vmem:[#allocation2 + $0x148] sm:$0xff] %v1743
    %1792 = vst [vmem:[#allocation2 + $0x160] sm:$0xff] %v1744
    %1793 = vst [vmem:[#allocation2 + $0x178] sm:$0xff] %v1745
    %v1794 = vld [vmem:[#allocation2] sm:$0xff]
    %v1795 = vld [vmem:[#allocation2 + $0x8] sm:$0xff]
    %v1796 = vld [vmem:[#allocation2 + $0x10] sm:$0xff]
    %v1797 = vld [vmem:[#allocation2 + $0x18] sm:$0xff]
    %v1798 = vld [vmem:[#allocation2 + $0x20] sm:$0xff]
    %v1799 = vld [vmem:[#allocation2 + $0x28] sm:$0xff]
    %v1800 = vld [vmem:[#allocation2 + $0x30] sm:$0xff]
    %v1801 = vld [vmem:[#allocation2 + $0x38] sm:$0xff]
    %v1802 = vld [vmem:[#allocation2 + $0x40] sm:$0xff]
    %v1803 = vld [vmem:[#allocation2 + $0x48] sm:$0xff]
    %v1804 = vld [vmem:[#allocation2 + $0x50] sm:$0xff]
    %v1805 = vld [vmem:[#allocation2 + $0x58] sm:$0xff]
    %v1806 = vld [vmem:[#allocation2 + $0x60] sm:$0xff]
    %v1807 = vld [vmem:[#allocation2 + $0x68] sm:$0xff]
    %v1808 = vld [vmem:[#allocation2 + $0x70] sm:$0xff]
    %v1809 = vld [vmem:[#allocation2 + $0x78] sm:$0xff]
    %v1810 = vld [vmem:[#allocation2 + $0x80] sm:$0xff]
    %v1811 = vld [vmem:[#allocation2 + $0x88] sm:$0xff]
    %v1812 = vld [vmem:[#allocation2 + $0x90] sm:$0xff]
    %v1813 = vld [vmem:[#allocation2 + $0x98] sm:$0xff]
    %v1814 = vld [vmem:[#allocation2 + $0xa0] sm:$0xff]
    %v1815 = vld [vmem:[#allocation2 + $0xa8] sm:$0xff]
    %v1816 = vld [vmem:[#allocation2 + $0xb0] sm:$0xff]
    %v1817 = vld [vmem:[#allocation2 + $0xb8] sm:$0xff]
    %v1818 = vld [vmem:[#allocation2 + $0xc0] sm:$0xff]
    %v1819 = vld [vmem:[#allocation2 + $0xc8] sm:$0xff]
    %v1820 = vld [vmem:[#allocation2 + $0xd0] sm:$0xff]
    %v1821 = vld [vmem:[#allocation2 + $0xd8] sm:$0xff]
    %v1822 = vld [vmem:[#allocation2 + $0xe0] sm:$0xff]
    %v1823 = vld [vmem:[#allocation2 + $0xe8] sm:$0xff]
    %v1824 = vld [vmem:[#allocation2 + $0xf0] sm:$0xff]
    %v1825 = vld [vmem:[#allocation2 + $0xf8] sm:$0xff]
    %v1826 = vld [vmem:[#allocation2 + $0x100] sm:$0xff]
    %v1827 = vld [vmem:[#allocation2 + $0x108] sm:$0xff]
    %v1828 = vld [vmem:[#allocation2 + $0x110] sm:$0xff]
    %v1829 = vld [vmem:[#allocation2 + $0x118] sm:$0xff]
    %v1830 = vld [vmem:[#allocation2 + $0x120] sm:$0xff]
    %v1831 = vld [vmem:[#allocation2 + $0x128] sm:$0xff]
    %v1832 = vld [vmem:[#allocation2 + $0x130] sm:$0xff]
    %v1833 = vld [vmem:[#allocation2 + $0x138] sm:$0xff]
    %v1834 = vld [vmem:[#allocation2 + $0x140] sm:$0xff]
    %v1835 = vld [vmem:[#allocation2 + $0x148] sm:$0xff]
    %v1836 = vld [vmem:[#allocation2 + $0x150] sm:$0xff]
    %v1837 = vld [vmem:[#allocation2 + $0x158] sm:$0xff]
    %v1838 = vld [vmem:[#allocation2 + $0x160] sm:$0xff]
    %v1839 = vld [vmem:[#allocation2 + $0x168] sm:$0xff]
    %v1840 = vld [vmem:[#allocation2 + $0x170] sm:$0xff]
    %v1841 = vld [vmem:[#allocation2 + $0x178] sm:$0xff]
    %s1842 = scalar_lea.vmem [#allocation7], 768
    %v1843 = vld [vmem:[%s1842] sm:$0xff]
    %v1844 = vld [vmem:[%s1842 + $0x8] sm:$0xff]
    %v1845 = vld [vmem:[%s1842 + $0x10] sm:$0xff]
    %v1846 = vld [vmem:[%s1842 + $0x18] sm:$0xff]
    %v1847 = vld [vmem:[%s1842 + $0x20] sm:$0xff]
    %v1848 = vld [vmem:[%s1842 + $0x28] sm:$0xff]
    %v1849 = vld [vmem:[%s1842 + $0x30] sm:$0xff]
    %v1850 = vld [vmem:[%s1842 + $0x38] sm:$0xff]
    %v1851 = vld [vmem:[%s1842 + $0x40] sm:$0xff]
    %v1852 = vld [vmem:[%s1842 + $0x48] sm:$0xff]
    %v1853 = vld [vmem:[%s1842 + $0x50] sm:$0xff]
    %v1854 = vld [vmem:[%s1842 + $0x58] sm:$0xff]
    %v1855 = vld [vmem:[%s1842 + $0x60] sm:$0xff]
    %v1856 = vld [vmem:[%s1842 + $0x68] sm:$0xff]
    %v1857 = vld [vmem:[%s1842 + $0x70] sm:$0xff]
    %v1858 = vld [vmem:[%s1842 + $0x78] sm:$0xff]
    %v1859 = vld [vmem:[%s1842 + $0x80] sm:$0xff]
    %v1860 = vld [vmem:[%s1842 + $0x88] sm:$0xff]
    %v1861 = vld [vmem:[%s1842 + $0x90] sm:$0xff]
    %v1862 = vld [vmem:[%s1842 + $0x98] sm:$0xff]
    %v1863 = vld [vmem:[%s1842 + $0xa0] sm:$0xff]
    %v1864 = vld [vmem:[%s1842 + $0xa8] sm:$0xff]
    %v1865 = vld [vmem:[%s1842 + $0xb0] sm:$0xff]
    %v1866 = vld [vmem:[%s1842 + $0xb8] sm:$0xff]
    %v1867 = vld [vmem:[%s1842 + $0xc0] sm:$0xff]
    %v1868 = vld [vmem:[%s1842 + $0xc8] sm:$0xff]
    %v1869 = vld [vmem:[%s1842 + $0xd0] sm:$0xff]
    %v1870 = vld [vmem:[%s1842 + $0xd8] sm:$0xff]
    %v1871 = vld [vmem:[%s1842 + $0xe0] sm:$0xff]
    %v1872 = vld [vmem:[%s1842 + $0xe8] sm:$0xff]
    %v1873 = vld [vmem:[%s1842 + $0xf0] sm:$0xff]
    %v1874 = vld [vmem:[%s1842 + $0xf8] sm:$0xff]
    %v1875 = vld [vmem:[%s1842 + $0x100] sm:$0xff]
    %v1876 = vld [vmem:[%s1842 + $0x108] sm:$0xff]
    %v1877 = vld [vmem:[%s1842 + $0x110] sm:$0xff]
    %v1878 = vld [vmem:[%s1842 + $0x118] sm:$0xff]
    %v1879 = vld [vmem:[%s1842 + $0x120] sm:$0xff]
    %v1880 = vld [vmem:[%s1842 + $0x128] sm:$0xff]
    %v1881 = vld [vmem:[%s1842 + $0x130] sm:$0xff]
    %v1882 = vld [vmem:[%s1842 + $0x138] sm:$0xff]
    %v1883 = vld [vmem:[%s1842 + $0x140] sm:$0xff]
    %v1884 = vld [vmem:[%s1842 + $0x148] sm:$0xff]
    %v1885 = vld [vmem:[%s1842 + $0x150] sm:$0xff]
    %v1886 = vld [vmem:[%s1842 + $0x158] sm:$0xff]
    %v1887 = vld [vmem:[%s1842 + $0x160] sm:$0xff]
    %v1888 = vld [vmem:[%s1842 + $0x168] sm:$0xff]
    %v1889 = vld [vmem:[%s1842 + $0x170] sm:$0xff]
    %v1890 = vld [vmem:[%s1842 + $0x178] sm:$0xff]
    %s1891 = scalar_lea.vmem [#allocation8], 2
    %v1892 = vld [vmem:[%s1891] sm:$0x1]
    %v1894 = vlaneseq
    %v1895 = vshrl.u32 %v1894, 7
    %v1896 = vsub.s32 0, %v1895
    %v1897 = vrot.slane %v1892, %v1896
    %1899 = vmatprep.subr.mxu0 0.0
    %1900 = vmatpush1.msra.mxu0 %v1858
    %1901 = vmatprep.subr.mxu0 0.0
    %1902 = vmatpush1.msra.mxu0 %v1857
    %1903 = vmatprep.subr.mxu0 0.0
    %1904 = vmatpush1.msra.mxu0 %v1856
    %1905 = vmatprep.subr.mxu0 0.0
    %1906 = vmatpush1.msra.mxu0 %v1855
    %1907 = vmatprep.subr.mxu0 0.0
    %1908 = vmatpush1.msra.mxu0 %v1854
    %1909 = vmatprep.subr.mxu0 0.0
    %1910 = vmatpush1.msra.mxu0 %v1853
    %1911 = vmatprep.subr.mxu0 0.0
    %1912 = vmatpush1.msra.mxu0 %v1852
    %1913 = vmatprep.subr.mxu0 0.0
    %1914 = vmatpush1.msra.mxu0 %v1851
    %1915 = vmatprep.subr.mxu0 0.0
    %1916 = vmatpush1.msra.mxu0 %v1850
    %1917 = vmatprep.subr.mxu0 0.0
    %1918 = vmatpush1.msra.mxu0 %v1849
    %1919 = vmatprep.subr.mxu0 0.0
    %1920 = vmatpush1.msra.mxu0 %v1848
    %1921 = vmatprep.subr.mxu0 0.0
    %1922 = vmatpush1.msra.mxu0 %v1847
    %1923 = vmatprep.subr.mxu0 0.0
    %1924 = vmatpush1.msra.mxu0 %v1846
    %1925 = vmatprep.subr.mxu0 0.0
    %1926 = vmatpush1.msra.mxu0 %v1845
    %1927 = vmatprep.subr.mxu0 0.0
    %1928 = vmatpush1.msra.mxu0 %v1844
    %1929 = vmatprep.subr.mxu0 0.0
    %1930 = vmatpush1.msra.mxu0 %v1843
    %1931 = vmatprep.subr.mxu0 0.0
    %1932 = vmatpush2.msra.mxu0 %v1874
    %1933 = vmatprep.subr.mxu0 0.0
    %1934 = vmatpush2.msra.mxu0 %v1873
    %1935 = vmatprep.subr.mxu0 0.0
    %1936 = vmatpush2.msra.mxu0 %v1872
    %1937 = vmatprep.subr.mxu0 0.0
    %1938 = vmatpush2.msra.mxu0 %v1871
    %1939 = vmatprep.subr.mxu0 0.0
    %1940 = vmatpush2.msra.mxu0 %v1870
    %1941 = vmatprep.subr.mxu0 0.0
    %1942 = vmatpush2.msra.mxu0 %v1869
    %1943 = vmatprep.subr.mxu0 0.0
    %1944 = vmatpush2.msra.mxu0 %v1868
    %1945 = vmatprep.subr.mxu0 0.0
    %1946 = vmatpush2.msra.mxu0 %v1867
    %1947 = vmatprep.subr.mxu0 0.0
    %1948 = vmatpush2.msra.mxu0 %v1866
    %1949 = vmatprep.subr.mxu0 0.0
    %1950 = vmatpush2.msra.mxu0 %v1865
    %1951 = vmatprep.subr.mxu0 0.0
    %1952 = vmatpush2.msra.mxu0 %v1864
    %1953 = vmatprep.subr.mxu0 0.0
    %1954 = vmatpush2.msra.mxu0 %v1863
    %1955 = vmatprep.subr.mxu0 0.0
    %1956 = vmatpush2.msra.mxu0 %v1862
    %1957 = vmatprep.subr.mxu0 0.0
    %1958 = vmatpush2.msra.mxu0 %v1861
    %1959 = vmatprep.subr.mxu0 0.0
    %1960 = vmatpush2.msra.mxu0 %v1860
    %1961 = vmatprep.subr.mxu0 0.0
    %1962 = vmatpush2.msra.mxu0 %v1859
    %1963 = vmatprep.mubr.f32.mxu0 %v1795
    %1964 = vmatmul.mubr.f32.gmra.mxu0 %v1794
    %v1965 = vpop.f32.mrf.mxu0
    %v1966 = vadd.f32 %v1897, %v1965
    %v1967 = vpop.f32.mrf.mxu0
    %1968 = vmatprep.mubr.f32.mxu0 %v1798
    %1969 = vmatmul.mubr.f32.gmra.mxu0 %v1797
    %v1970 = vpop.f32.mrf.mxu0
    %v1971 = vadd.f32 %v1897, %v1970
    %v1972 = vpop.f32.mrf.mxu0
    %1973 = vmatprep.mubr.f32.mxu0 %v1801
    %1974 = vmatmul.mubr.f32.gmra.mxu0 %v1800
    %v1975 = vpop.f32.mrf.mxu0
    %v1976 = vadd.f32 %v1897, %v1975
    %v1977 = vpop.f32.mrf.mxu0
    %1978 = vmatprep.mubr.f32.mxu0 %v1804
    %1979 = vmatmul.mubr.f32.gmra.mxu0 %v1803
    %v1980 = vpop.f32.mrf.mxu0
    %v1981 = vadd.f32 %v1897, %v1980
    %v1982 = vpop.f32.mrf.mxu0
    %1983 = vmatprep.mubr.f32.mxu0 %v1807
    %1984 = vmatmul.mubr.f32.gmra.mxu0 %v1806
    %v1985 = vpop.f32.mrf.mxu0
    %v1986 = vadd.f32 %v1897, %v1985
    %v1987 = vpop.f32.mrf.mxu0
    %1988 = vmatprep.mubr.f32.mxu0 %v1810
    %1989 = vmatmul.mubr.f32.gmra.mxu0 %v1809
    %v1990 = vpop.f32.mrf.mxu0
    %v1991 = vadd.f32 %v1897, %v1990
    %v1992 = vpop.f32.mrf.mxu0
    %1993 = vmatprep.mubr.f32.mxu0 %v1813
    %1994 = vmatmul.mubr.f32.gmra.mxu0 %v1812
    %v1995 = vpop.f32.mrf.mxu0
    %v1996 = vadd.f32 %v1897, %v1995
    %v1997 = vpop.f32.mrf.mxu0
    %1998 = vmatprep.mubr.f32.mxu0 %v1816
    %1999 = vmatmul.mubr.f32.gmra.mxu0 %v1815
    %v2000 = vpop.f32.mrf.mxu0
    %v2001 = vadd.f32 %v1897, %v2000
    %v2002 = vpop.f32.mrf.mxu0
    %2003 = vmatprep.mubr.f32.mxu0 %v1819
    %2004 = vmatmul.mubr.f32.gmra.mxu0 %v1818
    %v2005 = vpop.f32.mrf.mxu0
    %v2006 = vadd.f32 %v1897, %v2005
    %v2007 = vpop.f32.mrf.mxu0
    %2008 = vmatprep.mubr.f32.mxu0 %v1822
    %2009 = vmatmul.mubr.f32.gmra.mxu0 %v1821
    %v2010 = vpop.f32.mrf.mxu0
    %v2011 = vadd.f32 %v1897, %v2010
    %v2012 = vpop.f32.mrf.mxu0
    %2013 = vmatprep.mubr.f32.mxu0 %v1825
    %2014 = vmatmul.mubr.f32.gmra.mxu0 %v1824
    %v2015 = vpop.f32.mrf.mxu0
    %v2016 = vadd.f32 %v1897, %v2015
    %v2017 = vpop.f32.mrf.mxu0
    %2018 = vmatprep.mubr.f32.mxu0 %v1828
    %2019 = vmatmul.mubr.f32.gmra.mxu0 %v1827
    %v2020 = vpop.f32.mrf.mxu0
    %v2021 = vadd.f32 %v1897, %v2020
    %v2022 = vpop.f32.mrf.mxu0
    %2023 = vmatprep.mubr.f32.mxu0 %v1831
    %2024 = vmatmul.mubr.f32.gmra.mxu0 %v1830
    %v2025 = vpop.f32.mrf.mxu0
    %v2026 = vadd.f32 %v1897, %v2025
    %v2027 = vpop.f32.mrf.mxu0
    %2028 = vmatprep.mubr.f32.mxu0 %v1834
    %2029 = vmatmul.mubr.f32.gmra.mxu0 %v1833
    %v2030 = vpop.f32.mrf.mxu0
    %v2031 = vadd.f32 %v1897, %v2030
    %v2032 = vpop.f32.mrf.mxu0
    %2033 = vmatprep.mubr.f32.mxu0 %v1837
    %2034 = vmatmul.mubr.f32.gmra.mxu0 %v1836
    %v2035 = vpop.f32.mrf.mxu0
    %v2036 = vadd.f32 %v1897, %v2035
    %v2037 = vpop.f32.mrf.mxu0
    %2038 = vmatprep.mubr.f32.mxu0 %v1840
    %2039 = vmatmul.mubr.f32.gmra.mxu0 %v1839
    %v2040 = vpop.f32.mrf.mxu0
    %v2041 = vadd.f32 %v1897, %v2040
    %v2042 = vpop.f32.mrf.mxu0
    %2043 = vdwg.mxu0
    %2044 = vmatprep.subr.mxu0 0.0
    %2045 = vmatpush1.msra.mxu0 %v1890
    %2046 = vmatprep.subr.mxu0 0.0
    %2047 = vmatpush1.msra.mxu0 %v1889
    %2048 = vmatprep.subr.mxu0 0.0
    %2049 = vmatpush1.msra.mxu0 %v1888
    %2050 = vmatprep.subr.mxu0 0.0
    %2051 = vmatpush1.msra.mxu0 %v1887
    %2052 = vmatprep.subr.mxu0 0.0
    %2053 = vmatpush1.msra.mxu0 %v1886
    %2054 = vmatprep.subr.mxu0 0.0
    %2055 = vmatpush1.msra.mxu0 %v1885
    %2056 = vmatprep.subr.mxu0 0.0
    %2057 = vmatpush1.msra.mxu0 %v1884
    %2058 = vmatprep.subr.mxu0 0.0
    %2059 = vmatpush1.msra.mxu0 %v1883
    %2060 = vmatprep.subr.mxu0 0.0
    %2061 = vmatpush1.msra.mxu0 %v1882
    %2062 = vmatprep.subr.mxu0 0.0
    %2063 = vmatpush1.msra.mxu0 %v1881
    %2064 = vmatprep.subr.mxu0 0.0
    %2065 = vmatpush1.msra.mxu0 %v1880
    %2066 = vmatprep.subr.mxu0 0.0
    %2067 = vmatpush1.msra.mxu0 %v1879
    %2068 = vmatprep.subr.mxu0 0.0
    %2069 = vmatpush1.msra.mxu0 %v1878
    %2070 = vmatprep.subr.mxu0 0.0
    %2071 = vmatpush1.msra.mxu0 %v1877
    %2072 = vmatprep.subr.mxu0 0.0
    %2073 = vmatpush1.msra.mxu0 %v1876
    %2074 = vmatprep.subr.mxu0 0.0
    %2075 = vmatpush1.msra.mxu0 %v1875
    %2076 = vmatprep.subr.mxu0 0.0
    %2077 = vmatpush2.msra.mxu0 0.0
    %2078 = vmatprep.subr.mxu0 0.0
    %2079 = vmatpush2.msra.mxu0 0.0
    %2080 = vmatprep.subr.mxu0 0.0
    %2081 = vmatpush2.msra.mxu0 0.0
    %2082 = vmatprep.subr.mxu0 0.0
    %2083 = vmatpush2.msra.mxu0 0.0
    %2084 = vmatprep.subr.mxu0 0.0
    %2085 = vmatpush2.msra.mxu0 0.0
    %2086 = vmatprep.subr.mxu0 0.0
    %2087 = vmatpush2.msra.mxu0 0.0
    %2088 = vmatprep.subr.mxu0 0.0
    %2089 = vmatpush2.msra.mxu0 0.0
    %2090 = vmatprep.subr.mxu0 0.0
    %2091 = vmatpush2.msra.mxu0 0.0
    %2092 = vmatprep.subr.mxu0 0.0
    %2093 = vmatpush2.msra.mxu0 0.0
    %2094 = vmatprep.subr.mxu0 0.0
    %2095 = vmatpush2.msra.mxu0 0.0
    %2096 = vmatprep.subr.mxu0 0.0
    %2097 = vmatpush2.msra.mxu0 0.0
    %2098 = vmatprep.subr.mxu0 0.0
    %2099 = vmatpush2.msra.mxu0 0.0
    %2100 = vmatprep.subr.mxu0 0.0
    %2101 = vmatpush2.msra.mxu0 0.0
    %2102 = vmatprep.subr.mxu0 0.0
    %2103 = vmatpush2.msra.mxu0 0.0
    %2104 = vmatprep.subr.mxu0 0.0
    %2105 = vmatpush2.msra.mxu0 0.0
    %2106 = vmatprep.subr.mxu0 0.0
    %2107 = vmatpush2.msra.mxu0 0.0
    %2108 = vmatprep.mubr.f32.mxu0 0.0
    %2109 = vmatmul.mubr.f32.gmra.mxu0 %v1796
    %v2110 = vpop.f32.mrf.mxu0
    %v2111 = vadd.f32 %v1966, %v2110
    %v2112 = vpop.f32.mrf.mxu0
    %2113 = vmatprep.mubr.f32.mxu0 0.0
    %2114 = vmatmul.mubr.f32.gmra.mxu0 %v1799
    %v2115 = vpop.f32.mrf.mxu0
    %v2116 = vadd.f32 %v1971, %v2115
    %v2117 = vpop.f32.mrf.mxu0
    %2118 = vmatprep.mubr.f32.mxu0 0.0
    %2119 = vmatmul.mubr.f32.gmra.mxu0 %v1802
    %v2120 = vpop.f32.mrf.mxu0
    %v2121 = vadd.f32 %v1976, %v2120
    %v2122 = vpop.f32.mrf.mxu0
    %2123 = vmatprep.mubr.f32.mxu0 0.0
    %2124 = vmatmul.mubr.f32.gmra.mxu0 %v1805
    %v2125 = vpop.f32.mrf.mxu0
    %v2126 = vadd.f32 %v1981, %v2125
    %v2127 = vpop.f32.mrf.mxu0
    %2128 = vmatprep.mubr.f32.mxu0 0.0
    %2129 = vmatmul.mubr.f32.gmra.mxu0 %v1808
    %v2130 = vpop.f32.mrf.mxu0
    %v2131 = vadd.f32 %v1986, %v2130
    %v2132 = vpop.f32.mrf.mxu0
    %2133 = vmatprep.mubr.f32.mxu0 0.0
    %2134 = vmatmul.mubr.f32.gmra.mxu0 %v1811
    %v2135 = vpop.f32.mrf.mxu0
    %v2136 = vadd.f32 %v1991, %v2135
    %v2137 = vpop.f32.mrf.mxu0
    %2138 = vmatprep.mubr.f32.mxu0 0.0
    %2139 = vmatmul.mubr.f32.gmra.mxu0 %v1814
    %v2140 = vpop.f32.mrf.mxu0
    %v2141 = vadd.f32 %v1996, %v2140
    %v2142 = vpop.f32.mrf.mxu0
    %2143 = vmatprep.mubr.f32.mxu0 0.0
    %2144 = vmatmul.mubr.f32.gmra.mxu0 %v1817
    %v2145 = vpop.f32.mrf.mxu0
    %v2146 = vadd.f32 %v2001, %v2145
    %v2147 = vpop.f32.mrf.mxu0
    %2148 = vmatprep.mubr.f32.mxu0 0.0
    %2149 = vmatmul.mubr.f32.gmra.mxu0 %v1820
    %v2150 = vpop.f32.mrf.mxu0
    %v2151 = vadd.f32 %v2006, %v2150
    %v2152 = vpop.f32.mrf.mxu0
    %2153 = vmatprep.mubr.f32.mxu0 0.0
    %2154 = vmatmul.mubr.f32.gmra.mxu0 %v1823
    %v2155 = vpop.f32.mrf.mxu0
    %v2156 = vadd.f32 %v2011, %v2155
    %v2157 = vpop.f32.mrf.mxu0
    %2158 = vmatprep.mubr.f32.mxu0 0.0
    %2159 = vmatmul.mubr.f32.gmra.mxu0 %v1826
    %v2160 = vpop.f32.mrf.mxu0
    %v2161 = vadd.f32 %v2016, %v2160
    %v2162 = vpop.f32.mrf.mxu0
    %2163 = vmatprep.mubr.f32.mxu0 0.0
    %2164 = vmatmul.mubr.f32.gmra.mxu0 %v1829
    %v2165 = vpop.f32.mrf.mxu0
    %v2166 = vadd.f32 %v2021, %v2165
    %v2167 = vpop.f32.mrf.mxu0
    %2168 = vmatprep.mubr.f32.mxu0 0.0
    %2169 = vmatmul.mubr.f32.gmra.mxu0 %v1832
    %v2170 = vpop.f32.mrf.mxu0
    %v2171 = vadd.f32 %v2026, %v2170
    %v2172 = vpop.f32.mrf.mxu0
    %2173 = vmatprep.mubr.f32.mxu0 0.0
    %2174 = vmatmul.mubr.f32.gmra.mxu0 %v1835
    %v2175 = vpop.f32.mrf.mxu0
    %v2176 = vadd.f32 %v2031, %v2175
    %v2177 = vpop.f32.mrf.mxu0
    %2178 = vmatprep.mubr.f32.mxu0 0.0
    %2179 = vmatmul.mubr.f32.gmra.mxu0 %v1838
    %v2180 = vpop.f32.mrf.mxu0
    %v2181 = vadd.f32 %v2036, %v2180
    %v2182 = vpop.f32.mrf.mxu0
    %2183 = vmatprep.mubr.f32.mxu0 0.0
    %2184 = vmatmul.mubr.f32.gmra.mxu0 %v1841
    %v2185 = vpop.f32.mrf.mxu0
    %v2186 = vadd.f32 %v2041, %v2185
    %v2187 = vpop.f32.mrf.mxu0
    %2188 = vdwg.mxu0
    %v2189 = vmax.f32 %v2111, 0.0
    %v2190 = vmax.f32 %v2116, 0.0
    %v2191 = vmax.f32 %v2121, 0.0
    %v2192 = vmax.f32 %v2126, 0.0
    %v2193 = vmax.f32 %v2131, 0.0
    %v2194 = vmax.f32 %v2136, 0.0
    %v2195 = vmax.f32 %v2141, 0.0
    %v2196 = vmax.f32 %v2146, 0.0
    %v2197 = vmax.f32 %v2151, 0.0
    %v2198 = vmax.f32 %v2156, 0.0
    %v2199 = vmax.f32 %v2161, 0.0
    %v2200 = vmax.f32 %v2166, 0.0
    %v2201 = vmax.f32 %v2171, 0.0
    %v2202 = vmax.f32 %v2176, 0.0
    %v2203 = vmax.f32 %v2181, 0.0
    %v2204 = vmax.f32 %v2186, 0.0
    %v2205 = vrot.slane %v2189, 4
    %v2206 = vrot.slane %v2190, 4
    %v2207 = vrot.slane %v2191, 4
    %v2208 = vrot.slane %v2192, 4
    %v2209 = vrot.slane %v2193, 4
    %v2210 = vrot.slane %v2194, 4
    %v2211 = vrot.slane %v2195, 4
    %v2212 = vrot.slane %v2196, 4
    %v2213 = vrot.slane %v2197, 4
    %v2214 = vrot.slane %v2198, 4
    %v2215 = vrot.slane %v2199, 4
    %v2216 = vrot.slane %v2200, 4
    %v2217 = vrot.slane %v2201, 4
    %v2218 = vrot.slane %v2202, 4
    %v2219 = vrot.slane %v2203, 4
    %v2220 = vrot.slane %v2204, 4
    %v2221 = vsel %vm1609, %v2219, %v2220
    %v2222 = vsel %vm1609, %v2218, %v2219
    %v2223 = vsel %vm1609, %v2217, %v2218
    %v2224 = vsel %vm1609, %v2216, %v2217
    %v2225 = vsel %vm1609, %v2215, %v2216
    %v2226 = vsel %vm1609, %v2214, %v2215
    %v2227 = vsel %vm1609, %v2213, %v2214
    %v2228 = vsel %vm1609, %v2212, %v2213
    %v2229 = vsel %vm1609, %v2211, %v2212
    %v2230 = vsel %vm1609, %v2210, %v2211
    %v2231 = vsel %vm1609, %v2209, %v2210
    %v2232 = vsel %vm1609, %v2208, %v2209
    %v2233 = vsel %vm1609, %v2207, %v2208
    %v2234 = vsel %vm1609, %v2206, %v2207
    %v2235 = vsel %vm1609, %v2205, %v2206
    %v2236 = vsel %vm1609, %v2220, %v2205
    %v2237 = vsel %vm1658, %v2236, 0.0
    %v2238 = vsel %vm1659, %v2235, 0.0
    %v2239 = vsel %vm1660, %v2234, 0.0
    %v2240 = vsel %vm1661, %v2233, 0.0
    %v2241 = vsel %vm1662, %v2232, 0.0
    %v2242 = vsel %vm1663, %v2231, 0.0
    %v2243 = vsel %vm1664, %v2230, 0.0
    %v2244 = vsel %vm1665, %v2229, 0.0
    %v2245 = vsel %vm1658, %v2228, 0.0
    %v2246 = vsel %vm1659, %v2227, 0.0
    %v2247 = vsel %vm1660, %v2226, 0.0
    %v2248 = vsel %vm1661, %v2225, 0.0
    %v2249 = vsel %vm1662, %v2224, 0.0
    %v2250 = vsel %vm1663, %v2223, 0.0
    %v2251 = vsel %vm1664, %v2222, 0.0
    %v2252 = vsel %vm1665, %v2221, 0.0
    %v2253 = vsel %vm1722, %v2235, 0.0
    %v2254 = vsel %vm1723, %v2234, 0.0
    %v2255 = vsel %vm1724, %v2233, 0.0
    %v2256 = vsel %vm1725, %v2232, 0.0
    %v2257 = vsel %vm1726, %v2231, 0.0
    %v2258 = vsel %vm1727, %v2230, 0.0
    %v2259 = vsel %vm1728, %v2229, 0.0
    %v2260 = vsel %vm1729, %v2228, 0.0
    %v2261 = vsel %vm1722, %v2227, 0.0
    %v2262 = vsel %vm1723, %v2226, 0.0
    %v2263 = vsel %vm1724, %v2225, 0.0
    %v2264 = vsel %vm1725, %v2224, 0.0
    %v2265 = vsel %vm1726, %v2223, 0.0
    %v2266 = vsel %vm1727, %v2222, 0.0
    %v2267 = vsel %vm1728, %v2221, 0.0
    %v2268 = vsel %vm1729, %v2236, 0.0
    %2269 = vst [vmem:[#allocation2] sm:$0xff] %v2237
    %2270 = vst [vmem:[#allocation2 + $0x18] sm:$0xff] %v2238
    %2271 = vst [vmem:[#allocation2 + $0x30] sm:$0xff] %v2239
    %2272 = vst [vmem:[#allocation2 + $0x48] sm:$0xff] %v2240
    %2273 = vst [vmem:[#allocation2 + $0x60] sm:$0xff] %v2241
    %2274 = vst [vmem:[#allocation2 + $0x78] sm:$0xff] %v2242
    %2275 = vst [vmem:[#allocation2 + $0x90] sm:$0xff] %v2243
    %2276 = vst [vmem:[#allocation2 + $0xa8] sm:$0xff] %v2244
    %2277 = vst [vmem:[#allocation2 + $0xc0] sm:$0xff] %v2245
    %2278 = vst [vmem:[#allocation2 + $0xd8] sm:$0xff] %v2246
    %2279 = vst [vmem:[#allocation2 + $0xf0] sm:$0xff] %v2247
    %2280 = vst [vmem:[#allocation2 + $0x108] sm:$0xff] %v2248
    %2281 = vst [vmem:[#allocation2 + $0x120] sm:$0xff] %v2249
    %2282 = vst [vmem:[#allocation2 + $0x138] sm:$0xff] %v2250
    %2283 = vst [vmem:[#allocation2 + $0x150] sm:$0xff] %v2251
    %2284 = vst [vmem:[#allocation2 + $0x168] sm:$0xff] %v2252
    %2285 = vst [vmem:[#allocation2 + $0x8] sm:$0xff] %v2189
    %2286 = vst [vmem:[#allocation2 + $0x20] sm:$0xff] %v2190
    %2287 = vst [vmem:[#allocation2 + $0x38] sm:$0xff] %v2191
    %2288 = vst [vmem:[#allocation2 + $0x50] sm:$0xff] %v2192
    %2289 = vst [vmem:[#allocation2 + $0x68] sm:$0xff] %v2193
    %2290 = vst [vmem:[#allocation2 + $0x80] sm:$0xff] %v2194
    %2291 = vst [vmem:[#allocation2 + $0x98] sm:$0xff] %v2195
    %2292 = vst [vmem:[#allocation2 + $0xb0] sm:$0xff] %v2196
    %2293 = vst [vmem:[#allocation2 + $0xc8] sm:$0xff] %v2197
    %2294 = vst [vmem:[#allocation2 + $0xe0] sm:$0xff] %v2198
    %2295 = vst [vmem:[#allocation2 + $0xf8] sm:$0xff] %v2199
    %2296 = vst [vmem:[#allocation2 + $0x110] sm:$0xff] %v2200
    %2297 = vst [vmem:[#allocation2 + $0x128] sm:$0xff] %v2201
    %2298 = vst [vmem:[#allocation2 + $0x140] sm:$0xff] %v2202
    %2299 = vst [vmem:[#allocation2 + $0x158] sm:$0xff] %v2203
    %2300 = vst [vmem:[#allocation2 + $0x170] sm:$0xff] %v2204
    %2301 = vst [vmem:[#allocation2 + $0x10] sm:$0xff] %v2253
    %2302 = vst [vmem:[#allocation2 + $0x28] sm:$0xff] %v2254
    %2303 = vst [vmem:[#allocation2 + $0x40] sm:$0xff] %v2255
    %2304 = vst [vmem:[#allocation2 + $0x58] sm:$0xff] %v2256
    %2305 = vst [vmem:[#allocation2 + $0x70] sm:$0xff] %v2257
    %2306 = vst [vmem:[#allocation2 + $0x88] sm:$0xff] %v2258
    %2307 = vst [vmem:[#allocation2 + $0xa0] sm:$0xff] %v2259
    %2308 = vst [vmem:[#allocation2 + $0xb8] sm:$0xff] %v2260
    %2309 = vst [vmem:[#allocation2 + $0xd0] sm:$0xff] %v2261
    %2310 = vst [vmem:[#allocation2 + $0xe8] sm:$0xff] %v2262
    %2311 = vst [vmem:[#allocation2 + $0x100] sm:$0xff] %v2263
    %2312 = vst [vmem:[#allocation2 + $0x118] sm:$0xff] %v2264
    %2313 = vst [vmem:[#allocation2 + $0x130] sm:$0xff] %v2265
    %2314 = vst [vmem:[#allocation2 + $0x148] sm:$0xff] %v2266
    %2315 = vst [vmem:[#allocation2 + $0x160] sm:$0xff] %v2267
    %2316 = vst [vmem:[#allocation2 + $0x178] sm:$0xff] %v2268
    %v2317 = vld [vmem:[#allocation2] sm:$0xff]
    %v2318 = vld [vmem:[#allocation2 + $0x8] sm:$0xff]
    %v2319 = vld [vmem:[#allocation2 + $0x10] sm:$0xff]
    %v2320 = vld [vmem:[#allocation2 + $0x18] sm:$0xff]
    %v2321 = vld [vmem:[#allocation2 + $0x20] sm:$0xff]
    %v2322 = vld [vmem:[#allocation2 + $0x28] sm:$0xff]
    %v2323 = vld [vmem:[#allocation2 + $0x30] sm:$0xff]
    %v2324 = vld [vmem:[#allocation2 + $0x38] sm:$0xff]
    %v2325 = vld [vmem:[#allocation2 + $0x40] sm:$0xff]
    %v2326 = vld [vmem:[#allocation2 + $0x48] sm:$0xff]
    %v2327 = vld [vmem:[#allocation2 + $0x50] sm:$0xff]
    %v2328 = vld [vmem:[#allocation2 + $0x58] sm:$0xff]
    %v2329 = vld [vmem:[#allocation2 + $0x60] sm:$0xff]
    %v2330 = vld [vmem:[#allocation2 + $0x68] sm:$0xff]
    %v2331 = vld [vmem:[#allocation2 + $0x70] sm:$0xff]
    %v2332 = vld [vmem:[#allocation2 + $0x78] sm:$0xff]
    %v2333 = vld [vmem:[#allocation2 + $0x80] sm:$0xff]
    %v2334 = vld [vmem:[#allocation2 + $0x88] sm:$0xff]
    %v2335 = vld [vmem:[#allocation2 + $0x90] sm:$0xff]
    %v2336 = vld [vmem:[#allocation2 + $0x98] sm:$0xff]
    %v2337 = vld [vmem:[#allocation2 + $0xa0] sm:$0xff]
    %v2338 = vld [vmem:[#allocation2 + $0xa8] sm:$0xff]
    %v2339 = vld [vmem:[#allocation2 + $0xb0] sm:$0xff]
    %v2340 = vld [vmem:[#allocation2 + $0xb8] sm:$0xff]
    %v2341 = vld [vmem:[#allocation2 + $0xc0] sm:$0xff]
    %v2342 = vld [vmem:[#allocation2 + $0xc8] sm:$0xff]
    %v2343 = vld [vmem:[#allocation2 + $0xd0] sm:$0xff]
    %v2344 = vld [vmem:[#allocation2 + $0xd8] sm:$0xff]
    %v2345 = vld [vmem:[#allocation2 + $0xe0] sm:$0xff]
    %v2346 = vld [vmem:[#allocation2 + $0xe8] sm:$0xff]
    %v2347 = vld [vmem:[#allocation2 + $0xf0] sm:$0xff]
    %v2348 = vld [vmem:[#allocation2 + $0xf8] sm:$0xff]
    %v2349 = vld [vmem:[#allocation2 + $0x100] sm:$0xff]
    %v2350 = vld [vmem:[#allocation2 + $0x108] sm:$0xff]
    %v2351 = vld [vmem:[#allocation2 + $0x110] sm:$0xff]
    %v2352 = vld [vmem:[#allocation2 + $0x118] sm:$0xff]
    %v2353 = vld [vmem:[#allocation2 + $0x120] sm:$0xff]
    %v2354 = vld [vmem:[#allocation2 + $0x128] sm:$0xff]
    %v2355 = vld [vmem:[#allocation2 + $0x130] sm:$0xff]
    %v2356 = vld [vmem:[#allocation2 + $0x138] sm:$0xff]
    %v2357 = vld [vmem:[#allocation2 + $0x140] sm:$0xff]
    %v2358 = vld [vmem:[#allocation2 + $0x148] sm:$0xff]
    %v2359 = vld [vmem:[#allocation2 + $0x150] sm:$0xff]
    %v2360 = vld [vmem:[#allocation2 + $0x158] sm:$0xff]
    %v2361 = vld [vmem:[#allocation2 + $0x160] sm:$0xff]
    %v2362 = vld [vmem:[#allocation2 + $0x168] sm:$0xff]
    %v2363 = vld [vmem:[#allocation2 + $0x170] sm:$0xff]
    %v2364 = vld [vmem:[#allocation2 + $0x178] sm:$0xff]
    %s2365 = scalar_lea.vmem [#allocation7], 1152
    %v2366 = vld [vmem:[%s2365] sm:$0xff]
    %v2367 = vld [vmem:[%s2365 + $0x8] sm:$0xff]
    %v2368 = vld [vmem:[%s2365 + $0x10] sm:$0xff]
    %v2369 = vld [vmem:[%s2365 + $0x18] sm:$0xff]
    %v2370 = vld [vmem:[%s2365 + $0x20] sm:$0xff]
    %v2371 = vld [vmem:[%s2365 + $0x28] sm:$0xff]
    %v2372 = vld [vmem:[%s2365 + $0x30] sm:$0xff]
    %v2373 = vld [vmem:[%s2365 + $0x38] sm:$0xff]
    %v2374 = vld [vmem:[%s2365 + $0x40] sm:$0xff]
    %v2375 = vld [vmem:[%s2365 + $0x48] sm:$0xff]
    %v2376 = vld [vmem:[%s2365 + $0x50] sm:$0xff]
    %v2377 = vld [vmem:[%s2365 + $0x58] sm:$0xff]
    %v2378 = vld [vmem:[%s2365 + $0x60] sm:$0xff]
    %v2379 = vld [vmem:[%s2365 + $0x68] sm:$0xff]
    %v2380 = vld [vmem:[%s2365 + $0x70] sm:$0xff]
    %v2381 = vld [vmem:[%s2365 + $0x78] sm:$0xff]
    %v2382 = vld [vmem:[%s2365 + $0x80] sm:$0xff]
    %v2383 = vld [vmem:[%s2365 + $0x88] sm:$0xff]
    %v2384 = vld [vmem:[%s2365 + $0x90] sm:$0xff]
    %v2385 = vld [vmem:[%s2365 + $0x98] sm:$0xff]
    %v2386 = vld [vmem:[%s2365 + $0xa0] sm:$0xff]
    %v2387 = vld [vmem:[%s2365 + $0xa8] sm:$0xff]
    %v2388 = vld [vmem:[%s2365 + $0xb0] sm:$0xff]
    %v2389 = vld [vmem:[%s2365 + $0xb8] sm:$0xff]
    %v2390 = vld [vmem:[%s2365 + $0xc0] sm:$0xff]
    %v2391 = vld [vmem:[%s2365 + $0xc8] sm:$0xff]
    %v2392 = vld [vmem:[%s2365 + $0xd0] sm:$0xff]
    %v2393 = vld [vmem:[%s2365 + $0xd8] sm:$0xff]
    %v2394 = vld [vmem:[%s2365 + $0xe0] sm:$0xff]
    %v2395 = vld [vmem:[%s2365 + $0xe8] sm:$0xff]
    %v2396 = vld [vmem:[%s2365 + $0xf0] sm:$0xff]
    %v2397 = vld [vmem:[%s2365 + $0xf8] sm:$0xff]
    %v2398 = vld [vmem:[%s2365 + $0x100] sm:$0xff]
    %v2399 = vld [vmem:[%s2365 + $0x108] sm:$0xff]
    %v2400 = vld [vmem:[%s2365 + $0x110] sm:$0xff]
    %v2401 = vld [vmem:[%s2365 + $0x118] sm:$0xff]
    %v2402 = vld [vmem:[%s2365 + $0x120] sm:$0xff]
    %v2403 = vld [vmem:[%s2365 + $0x128] sm:$0xff]
    %v2404 = vld [vmem:[%s2365 + $0x130] sm:$0xff]
    %v2405 = vld [vmem:[%s2365 + $0x138] sm:$0xff]
    %v2406 = vld [vmem:[%s2365 + $0x140] sm:$0xff]
    %v2407 = vld [vmem:[%s2365 + $0x148] sm:$0xff]
    %v2408 = vld [vmem:[%s2365 + $0x150] sm:$0xff]
    %v2409 = vld [vmem:[%s2365 + $0x158] sm:$0xff]
    %v2410 = vld [vmem:[%s2365 + $0x160] sm:$0xff]
    %v2411 = vld [vmem:[%s2365 + $0x168] sm:$0xff]
    %v2412 = vld [vmem:[%s2365 + $0x170] sm:$0xff]
    %v2413 = vld [vmem:[%s2365 + $0x178] sm:$0xff]
    %s2414 = scalar_lea.vmem [#allocation8], 3
    %v2415 = vld [vmem:[%s2414] sm:$0x1]
    %v2417 = vlaneseq
    %v2418 = vshrl.u32 %v2417, 7
    %v2419 = vsub.s32 0, %v2418
    %v2420 = vrot.slane %v2415, %v2419
    %2422 = vmatprep.subr.mxu0 0.0
    %2423 = vmatpush1.msra.mxu0 %v2381
    %2424 = vmatprep.subr.mxu0 0.0
    %2425 = vmatpush1.msra.mxu0 %v2380
    %2426 = vmatprep.subr.mxu0 0.0
    %2427 = vmatpush1.msra.mxu0 %v2379
    %2428 = vmatprep.subr.mxu0 0.0
    %2429 = vmatpush1.msra.mxu0 %v2378
    %2430 = vmatprep.subr.mxu0 0.0
    %2431 = vmatpush1.msra.mxu0 %v2377
    %2432 = vmatprep.subr.mxu0 0.0
    %2433 = vmatpush1.msra.mxu0 %v2376
    %2434 = vmatprep.subr.mxu0 0.0
    %2435 = vmatpush1.msra.mxu0 %v2375
    %2436 = vmatprep.subr.mxu0 0.0
    %2437 = vmatpush1.msra.mxu0 %v2374
    %2438 = vmatprep.subr.mxu0 0.0
    %2439 = vmatpush1.msra.mxu0 %v2373
    %2440 = vmatprep.subr.mxu0 0.0
    %2441 = vmatpush1.msra.mxu0 %v2372
    %2442 = vmatprep.subr.mxu0 0.0
    %2443 = vmatpush1.msra.mxu0 %v2371
    %2444 = vmatprep.subr.mxu0 0.0
    %2445 = vmatpush1.msra.mxu0 %v2370
    %2446 = vmatprep.subr.mxu0 0.0
    %2447 = vmatpush1.msra.mxu0 %v2369
    %2448 = vmatprep.subr.mxu0 0.0
    %2449 = vmatpush1.msra.mxu0 %v2368
    %2450 = vmatprep.subr.mxu0 0.0
    %2451 = vmatpush1.msra.mxu0 %v2367
    %2452 = vmatprep.subr.mxu0 0.0
    %2453 = vmatpush1.msra.mxu0 %v2366
    %2454 = vmatprep.subr.mxu0 0.0
    %2455 = vmatpush2.msra.mxu0 %v2397
    %2456 = vmatprep.subr.mxu0 0.0
    %2457 = vmatpush2.msra.mxu0 %v2396
    %2458 = vmatprep.subr.mxu0 0.0
    %2459 = vmatpush2.msra.mxu0 %v2395
    %2460 = vmatprep.subr.mxu0 0.0
    %2461 = vmatpush2.msra.mxu0 %v2394
    %2462 = vmatprep.subr.mxu0 0.0
    %2463 = vmatpush2.msra.mxu0 %v2393
    %2464 = vmatprep.subr.mxu0 0.0
    %2465 = vmatpush2.msra.mxu0 %v2392
    %2466 = vmatprep.subr.mxu0 0.0
    %2467 = vmatpush2.msra.mxu0 %v2391
    %2468 = vmatprep.subr.mxu0 0.0
    %2469 = vmatpush2.msra.mxu0 %v2390
    %2470 = vmatprep.subr.mxu0 0.0
    %2471 = vmatpush2.msra.mxu0 %v2389
    %2472 = vmatprep.subr.mxu0 0.0
    %2473 = vmatpush2.msra.mxu0 %v2388
    %2474 = vmatprep.subr.mxu0 0.0
    %2475 = vmatpush2.msra.mxu0 %v2387
    %2476 = vmatprep.subr.mxu0 0.0
    %2477 = vmatpush2.msra.mxu0 %v2386
    %2478 = vmatprep.subr.mxu0 0.0
    %2479 = vmatpush2.msra.mxu0 %v2385
    %2480 = vmatprep.subr.mxu0 0.0
    %2481 = vmatpush2.msra.mxu0 %v2384
    %2482 = vmatprep.subr.mxu0 0.0
    %2483 = vmatpush2.msra.mxu0 %v2383
    %2484 = vmatprep.subr.mxu0 0.0
    %2485 = vmatpush2.msra.mxu0 %v2382
    %2486 = vmatprep.mubr.f32.mxu0 %v2318
    %2487 = vmatmul.mubr.f32.gmra.mxu0 %v2317
    %v2488 = vpop.f32.mrf.mxu0
    %v2489 = vadd.f32 %v2420, %v2488
    %v2490 = vpop.f32.mrf.mxu0
    %2491 = vmatprep.mubr.f32.mxu0 %v2321
    %2492 = vmatmul.mubr.f32.gmra.mxu0 %v2320
    %v2493 = vpop.f32.mrf.mxu0
    %v2494 = vadd.f32 %v2420, %v2493
    %v2495 = vpop.f32.mrf.mxu0
    %2496 = vmatprep.mubr.f32.mxu0 %v2324
    %2497 = vmatmul.mubr.f32.gmra.mxu0 %v2323
    %v2498 = vpop.f32.mrf.mxu0
    %v2499 = vadd.f32 %v2420, %v2498
    %v2500 = vpop.f32.mrf.mxu0
    %2501 = vmatprep.mubr.f32.mxu0 %v2327
    %2502 = vmatmul.mubr.f32.gmra.mxu0 %v2326
    %v2503 = vpop.f32.mrf.mxu0
    %v2504 = vadd.f32 %v2420, %v2503
    %v2505 = vpop.f32.mrf.mxu0
    %2506 = vmatprep.mubr.f32.mxu0 %v2330
    %2507 = vmatmul.mubr.f32.gmra.mxu0 %v2329
    %v2508 = vpop.f32.mrf.mxu0
    %v2509 = vadd.f32 %v2420, %v2508
    %v2510 = vpop.f32.mrf.mxu0
    %2511 = vmatprep.mubr.f32.mxu0 %v2333
    %2512 = vmatmul.mubr.f32.gmra.mxu0 %v2332
    %v2513 = vpop.f32.mrf.mxu0
    %v2514 = vadd.f32 %v2420, %v2513
    %v2515 = vpop.f32.mrf.mxu0
    %2516 = vmatprep.mubr.f32.mxu0 %v2336
    %2517 = vmatmul.mubr.f32.gmra.mxu0 %v2335
    %v2518 = vpop.f32.mrf.mxu0
    %v2519 = vadd.f32 %v2420, %v2518
    %v2520 = vpop.f32.mrf.mxu0
    %2521 = vmatprep.mubr.f32.mxu0 %v2339
    %2522 = vmatmul.mubr.f32.gmra.mxu0 %v2338
    %v2523 = vpop.f32.mrf.mxu0
    %v2524 = vadd.f32 %v2420, %v2523
    %v2525 = vpop.f32.mrf.mxu0
    %2526 = vmatprep.mubr.f32.mxu0 %v2342
    %2527 = vmatmul.mubr.f32.gmra.mxu0 %v2341
    %v2528 = vpop.f32.mrf.mxu0
    %v2529 = vadd.f32 %v2420, %v2528
    %v2530 = vpop.f32.mrf.mxu0
    %2531 = vmatprep.mubr.f32.mxu0 %v2345
    %2532 = vmatmul.mubr.f32.gmra.mxu0 %v2344
    %v2533 = vpop.f32.mrf.mxu0
    %v2534 = vadd.f32 %v2420, %v2533
    %v2535 = vpop.f32.mrf.mxu0
    %2536 = vmatprep.mubr.f32.mxu0 %v2348
    %2537 = vmatmul.mubr.f32.gmra.mxu0 %v2347
    %v2538 = vpop.f32.mrf.mxu0
    %v2539 = vadd.f32 %v2420, %v2538
    %v2540 = vpop.f32.mrf.mxu0
    %2541 = vmatprep.mubr.f32.mxu0 %v2351
    %2542 = vmatmul.mubr.f32.gmra.mxu0 %v2350
    %v2543 = vpop.f32.mrf.mxu0
    %v2544 = vadd.f32 %v2420, %v2543
    %v2545 = vpop.f32.mrf.mxu0
    %2546 = vmatprep.mubr.f32.mxu0 %v2354
    %2547 = vmatmul.mubr.f32.gmra.mxu0 %v2353
    %v2548 = vpop.f32.mrf.mxu0
    %v2549 = vadd.f32 %v2420, %v2548
    %v2550 = vpop.f32.mrf.mxu0
    %2551 = vmatprep.mubr.f32.mxu0 %v2357
    %2552 = vmatmul.mubr.f32.gmra.mxu0 %v2356
    %v2553 = vpop.f32.mrf.mxu0
    %v2554 = vadd.f32 %v2420, %v2553
    %v2555 = vpop.f32.mrf.mxu0
    %2556 = vmatprep.mubr.f32.mxu0 %v2360
    %2557 = vmatmul.mubr.f32.gmra.mxu0 %v2359
    %v2558 = vpop.f32.mrf.mxu0
    %v2559 = vadd.f32 %v2420, %v2558
    %v2560 = vpop.f32.mrf.mxu0
    %2561 = vmatprep.mubr.f32.mxu0 %v2363
    %2562 = vmatmul.mubr.f32.gmra.mxu0 %v2362
    %v2563 = vpop.f32.mrf.mxu0
    %v2564 = vadd.f32 %v2420, %v2563
    %v2565 = vpop.f32.mrf.mxu0
    %2566 = vdwg.mxu0
    %2567 = vmatprep.subr.mxu0 0.0
    %2568 = vmatpush1.msra.mxu0 %v2413
    %2569 = vmatprep.subr.mxu0 0.0
    %2570 = vmatpush1.msra.mxu0 %v2412
    %2571 = vmatprep.subr.mxu0 0.0
    %2572 = vmatpush1.msra.mxu0 %v2411
    %2573 = vmatprep.subr.mxu0 0.0
    %2574 = vmatpush1.msra.mxu0 %v2410
    %2575 = vmatprep.subr.mxu0 0.0
    %2576 = vmatpush1.msra.mxu0 %v2409
    %2577 = vmatprep.subr.mxu0 0.0
    %2578 = vmatpush1.msra.mxu0 %v2408
    %2579 = vmatprep.subr.mxu0 0.0
    %2580 = vmatpush1.msra.mxu0 %v2407
    %2581 = vmatprep.subr.mxu0 0.0
    %2582 = vmatpush1.msra.mxu0 %v2406
    %2583 = vmatprep.subr.mxu0 0.0
    %2584 = vmatpush1.msra.mxu0 %v2405
    %2585 = vmatprep.subr.mxu0 0.0
    %2586 = vmatpush1.msra.mxu0 %v2404
    %2587 = vmatprep.subr.mxu0 0.0
    %2588 = vmatpush1.msra.mxu0 %v2403
    %2589 = vmatprep.subr.mxu0 0.0
    %2590 = vmatpush1.msra.mxu0 %v2402
    %2591 = vmatprep.subr.mxu0 0.0
    %2592 = vmatpush1.msra.mxu0 %v2401
    %2593 = vmatprep.subr.mxu0 0.0
    %2594 = vmatpush1.msra.mxu0 %v2400
    %2595 = vmatprep.subr.mxu0 0.0
    %2596 = vmatpush1.msra.mxu0 %v2399
    %2597 = vmatprep.subr.mxu0 0.0
    %2598 = vmatpush1.msra.mxu0 %v2398
    %2599 = vmatprep.subr.mxu0 0.0
    %2600 = vmatpush2.msra.mxu0 0.0
    %2601 = vmatprep.subr.mxu0 0.0
    %2602 = vmatpush2.msra.mxu0 0.0
    %2603 = vmatprep.subr.mxu0 0.0
    %2604 = vmatpush2.msra.mxu0 0.0
    %2605 = vmatprep.subr.mxu0 0.0
    %2606 = vmatpush2.msra.mxu0 0.0
    %2607 = vmatprep.subr.mxu0 0.0
    %2608 = vmatpush2.msra.mxu0 0.0
    %2609 = vmatprep.subr.mxu0 0.0
    %2610 = vmatpush2.msra.mxu0 0.0
    %2611 = vmatprep.subr.mxu0 0.0
    %2612 = vmatpush2.msra.mxu0 0.0
    %2613 = vmatprep.subr.mxu0 0.0
    %2614 = vmatpush2.msra.mxu0 0.0
    %2615 = vmatprep.subr.mxu0 0.0
    %2616 = vmatpush2.msra.mxu0 0.0
    %2617 = vmatprep.subr.mxu0 0.0
    %2618 = vmatpush2.msra.mxu0 0.0
    %2619 = vmatprep.subr.mxu0 0.0
    %2620 = vmatpush2.msra.mxu0 0.0
    %2621 = vmatprep.subr.mxu0 0.0
    %2622 = vmatpush2.msra.mxu0 0.0
    %2623 = vmatprep.subr.mxu0 0.0
    %2624 = vmatpush2.msra.mxu0 0.0
    %2625 = vmatprep.subr.mxu0 0.0
    %2626 = vmatpush2.msra.mxu0 0.0
    %2627 = vmatprep.subr.mxu0 0.0
    %2628 = vmatpush2.msra.mxu0 0.0
    %2629 = vmatprep.subr.mxu0 0.0
    %2630 = vmatpush2.msra.mxu0 0.0
    %2631 = vmatprep.mubr.f32.mxu0 0.0
    %2632 = vmatmul.mubr.f32.gmra.mxu0 %v2319
    %v2633 = vpop.f32.mrf.mxu0
    %v2634 = vadd.f32 %v2489, %v2633
    %v2635 = vpop.f32.mrf.mxu0
    %2636 = vmatprep.mubr.f32.mxu0 0.0
    %2637 = vmatmul.mubr.f32.gmra.mxu0 %v2322
    %v2638 = vpop.f32.mrf.mxu0
    %v2639 = vadd.f32 %v2494, %v2638
    %v2640 = vpop.f32.mrf.mxu0
    %2641 = vmatprep.mubr.f32.mxu0 0.0
    %2642 = vmatmul.mubr.f32.gmra.mxu0 %v2325
    %v2643 = vpop.f32.mrf.mxu0
    %v2644 = vadd.f32 %v2499, %v2643
    %v2645 = vpop.f32.mrf.mxu0
    %2646 = vmatprep.mubr.f32.mxu0 0.0
    %2647 = vmatmul.mubr.f32.gmra.mxu0 %v2328
    %v2648 = vpop.f32.mrf.mxu0
    %v2649 = vadd.f32 %v2504, %v2648
    %v2650 = vpop.f32.mrf.mxu0
    %2651 = vmatprep.mubr.f32.mxu0 0.0
    %2652 = vmatmul.mubr.f32.gmra.mxu0 %v2331
    %v2653 = vpop.f32.mrf.mxu0
    %v2654 = vadd.f32 %v2509, %v2653
    %v2655 = vpop.f32.mrf.mxu0
    %2656 = vmatprep.mubr.f32.mxu0 0.0
    %2657 = vmatmul.mubr.f32.gmra.mxu0 %v2334
    %v2658 = vpop.f32.mrf.mxu0
    %v2659 = vadd.f32 %v2514, %v2658
    %v2660 = vpop.f32.mrf.mxu0
    %2661 = vmatprep.mubr.f32.mxu0 0.0
    %2662 = vmatmul.mubr.f32.gmra.mxu0 %v2337
    %v2663 = vpop.f32.mrf.mxu0
    %v2664 = vadd.f32 %v2519, %v2663
    %v2665 = vpop.f32.mrf.mxu0
    %2666 = vmatprep.mubr.f32.mxu0 0.0
    %2667 = vmatmul.mubr.f32.gmra.mxu0 %v2340
    %v2668 = vpop.f32.mrf.mxu0
    %v2669 = vadd.f32 %v2524, %v2668
    %v2670 = vpop.f32.mrf.mxu0
    %2671 = vmatprep.mubr.f32.mxu0 0.0
    %2672 = vmatmul.mubr.f32.gmra.mxu0 %v2343
    %v2673 = vpop.f32.mrf.mxu0
    %v2674 = vadd.f32 %v2529, %v2673
    %v2675 = vpop.f32.mrf.mxu0
    %2676 = vmatprep.mubr.f32.mxu0 0.0
    %2677 = vmatmul.mubr.f32.gmra.mxu0 %v2346
    %v2678 = vpop.f32.mrf.mxu0
    %v2679 = vadd.f32 %v2534, %v2678
    %v2680 = vpop.f32.mrf.mxu0
    %2681 = vmatprep.mubr.f32.mxu0 0.0
    %2682 = vmatmul.mubr.f32.gmra.mxu0 %v2349
    %v2683 = vpop.f32.mrf.mxu0
    %v2684 = vadd.f32 %v2539, %v2683
    %v2685 = vpop.f32.mrf.mxu0
    %2686 = vmatprep.mubr.f32.mxu0 0.0
    %2687 = vmatmul.mubr.f32.gmra.mxu0 %v2352
    %v2688 = vpop.f32.mrf.mxu0
    %v2689 = vadd.f32 %v2544, %v2688
    %v2690 = vpop.f32.mrf.mxu0
    %2691 = vmatprep.mubr.f32.mxu0 0.0
    %2692 = vmatmul.mubr.f32.gmra.mxu0 %v2355
    %v2693 = vpop.f32.mrf.mxu0
    %v2694 = vadd.f32 %v2549, %v2693
    %v2695 = vpop.f32.mrf.mxu0
    %2696 = vmatprep.mubr.f32.mxu0 0.0
    %2697 = vmatmul.mubr.f32.gmra.mxu0 %v2358
    %v2698 = vpop.f32.mrf.mxu0
    %v2699 = vadd.f32 %v2554, %v2698
    %v2700 = vpop.f32.mrf.mxu0
    %2701 = vmatprep.mubr.f32.mxu0 0.0
    %2702 = vmatmul.mubr.f32.gmra.mxu0 %v2361
    %v2703 = vpop.f32.mrf.mxu0
    %v2704 = vadd.f32 %v2559, %v2703
    %v2705 = vpop.f32.mrf.mxu0
    %2706 = vmatprep.mubr.f32.mxu0 0.0
    %2707 = vmatmul.mubr.f32.gmra.mxu0 %v2364
    %v2708 = vpop.f32.mrf.mxu0
    %v2709 = vadd.f32 %v2564, %v2708
    %v2710 = vpop.f32.mrf.mxu0
    %2711 = vdwg.mxu0
    %v2712 = vadd.f32 %v2634, %v1569
    %v2713 = vadd.f32 %v2639, %v1570
    %v2714 = vadd.f32 %v2644, %v1571
    %v2715 = vadd.f32 %v2649, %v1572
    %v2716 = vadd.f32 %v2654, %v1573
    %v2717 = vadd.f32 %v2659, %v1574
    %v2718 = vadd.f32 %v2664, %v1575
    %v2719 = vadd.f32 %v2669, %v1576
    %v2720 = vadd.f32 %v2674, %v1577
    %v2721 = vadd.f32 %v2679, %v1578
    %v2722 = vadd.f32 %v2684, %v1579
    %v2723 = vadd.f32 %v2689, %v1580
    %v2724 = vadd.f32 %v2694, %v1581
    %v2725 = vadd.f32 %v2699, %v1582
    %v2726 = vadd.f32 %v2704, %v1583
    %v2727 = vadd.f32 %v2709, %v1584
    %v2728 = vmax.f32 %v2712, 0.0
    %v2729 = vmax.f32 %v2713, 0.0
    %v2730 = vmax.f32 %v2714, 0.0
    %v2731 = vmax.f32 %v2715, 0.0
    %v2732 = vmax.f32 %v2716, 0.0
    %v2733 = vmax.f32 %v2717, 0.0
    %v2734 = vmax.f32 %v2718, 0.0
    %v2735 = vmax.f32 %v2719, 0.0
    %v2736 = vmax.f32 %v2720, 0.0
    %v2737 = vmax.f32 %v2721, 0.0
    %v2738 = vmax.f32 %v2722, 0.0
    %v2739 = vmax.f32 %v2723, 0.0
    %v2740 = vmax.f32 %v2724, 0.0
    %v2741 = vmax.f32 %v2725, 0.0
    %v2742 = vmax.f32 %v2726, 0.0
    %v2743 = vmax.f32 %v2727, 0.0
    %vm2744 = vcmp.ge.s32.totalorder %v171, 8
    %vm2745 = vcmp.ge.s32.totalorder %v172, 8
    %vm2746 = vcmp.ge.s32.totalorder %v173, 8
    %vm2747 = vcmp.ge.s32.totalorder %v174, 8
    %vm2748 = vcmp.ge.s32.totalorder %v175, 8
    %vm2749 = vcmp.ge.s32.totalorder %v176, 8
    %vm2750 = vcmp.ge.s32.totalorder %v177, 8
    %vm2751 = vcmp.ge.s32.totalorder %v178, 8
    %v2752 = vsel %vm2744, 1, 0
    %v2753 = vsel %vm2745, 1, 0
    %v2754 = vsel %vm2746, 1, 0
    %v2755 = vsel %vm2747, 1, 0
    %v2756 = vsel %vm2748, 1, 0
    %v2757 = vsel %vm2749, 1, 0
    %v2758 = vsel %vm2750, 1, 0
    %v2759 = vsel %vm2751, 1, 0
    %2760 = vset.pattern.permute.xlu0 0
    %2761 = vperm.xlu0 %2760, %v2752
    %v2762 = vpop.permute.xlu0 %2761
    %2763 = vset.pattern.permute.xlu0 0
    %2764 = vperm.xlu0 %2763, %v2753
    %v2765 = vpop.permute.xlu0 %2764
    %2766 = vset.pattern.permute.xlu0 0
    %2767 = vperm.xlu0 %2766, %v2754
    %v2768 = vpop.permute.xlu0 %2767
    %2769 = vset.pattern.permute.xlu0 0
    %2770 = vperm.xlu0 %2769, %v2755
    %v2771 = vpop.permute.xlu0 %2770
    %2772 = vset.pattern.permute.xlu0 0
    %2773 = vperm.xlu0 %2772, %v2756
    %v2774 = vpop.permute.xlu0 %2773
    %2775 = vset.pattern.permute.xlu0 0
    %2776 = vperm.xlu0 %2775, %v2757
    %v2777 = vpop.permute.xlu0 %2776
    %2778 = vset.pattern.permute.xlu0 0
    %2779 = vperm.xlu0 %2778, %v2758
    %v2780 = vpop.permute.xlu0 %2779
    %2781 = vset.pattern.permute.xlu0 0
    %2782 = vperm.xlu0 %2781, %v2759
    %v2783 = vpop.permute.xlu0 %2782
    %vm2784 = vcmp.eq.s32.totalorder %v2762, 1
    %vm2785 = vcmp.eq.s32.totalorder %v2765, 1
    %vm2786 = vcmp.eq.s32.totalorder %v2768, 1
    %vm2787 = vcmp.eq.s32.totalorder %v2771, 1
    %vm2788 = vcmp.eq.s32.totalorder %v2774, 1
    %vm2789 = vcmp.eq.s32.totalorder %v2777, 1
    %vm2790 = vcmp.eq.s32.totalorder %v2780, 1
    %vm2791 = vcmp.eq.s32.totalorder %v2783, 1
    %v2792 = vsel %vm2784, %v2743, 0.0
    %v2793 = vsel %vm2785, %v2728, 0.0
    %v2794 = vsel %vm2786, %v2729, 0.0
    %v2795 = vsel %vm2787, %v2730, 0.0
    %v2796 = vsel %vm2788, %v2731, 0.0
    %v2797 = vsel %vm2789, %v2732, 0.0
    %v2798 = vsel %vm2790, %v2733, 0.0
    %v2799 = vsel %vm2791, %v2734, 0.0
    %v2800 = vsel %vm2784, %v2735, 0.0
    %v2801 = vsel %vm2785, %v2736, 0.0
    %v2802 = vsel %vm2786, %v2737, 0.0
    %v2803 = vsel %vm2787, %v2738, 0.0
    %v2804 = vsel %vm2788, %v2739, 0.0
    %v2805 = vsel %vm2789, %v2740, 0.0
    %v2806 = vsel %vm2790, %v2741, 0.0
    %v2807 = vsel %vm2791, %v2742, 0.0
    %vm2808 = vcmp.lt.s32.totalorder %v171, 56
    %vm2809 = vcmp.lt.s32.totalorder %v172, 56
    %vm2810 = vcmp.lt.s32.totalorder %v173, 56
    %vm2811 = vcmp.lt.s32.totalorder %v174, 56
    %vm2812 = vcmp.lt.s32.totalorder %v175, 56
    %vm2813 = vcmp.lt.s32.totalorder %v176, 56
    %vm2814 = vcmp.lt.s32.totalorder %v177, 56
    %vm2815 = vcmp.lt.s32.totalorder %v178, 56
    %v2816 = vsel %vm2808, 1, 0
    %v2817 = vsel %vm2809, 1, 0
    %v2818 = vsel %vm2810, 1, 0
    %v2819 = vsel %vm2811, 1, 0
    %v2820 = vsel %vm2812, 1, 0
    %v2821 = vsel %vm2813, 1, 0
    %v2822 = vsel %vm2814, 1, 0
    %v2823 = vsel %vm2815, 1, 0
    %2824 = vset.pattern.permute.xlu0 0
    %2825 = vperm.xlu0 %2824, %v2816
    %v2826 = vpop.permute.xlu0 %2825
    %2827 = vset.pattern.permute.xlu0 0
    %2828 = vperm.xlu0 %2827, %v2817
    %v2829 = vpop.permute.xlu0 %2828
    %2830 = vset.pattern.permute.xlu0 0
    %2831 = vperm.xlu0 %2830, %v2818
    %v2832 = vpop.permute.xlu0 %2831
    %2833 = vset.pattern.permute.xlu0 0
    %2834 = vperm.xlu0 %2833, %v2819
    %v2835 = vpop.permute.xlu0 %2834
    %2836 = vset.pattern.permute.xlu0 0
    %2837 = vperm.xlu0 %2836, %v2820
    %v2838 = vpop.permute.xlu0 %2837
    %2839 = vset.pattern.permute.xlu0 0
    %2840 = vperm.xlu0 %2839, %v2821
    %v2841 = vpop.permute.xlu0 %2840
    %2842 = vset.pattern.permute.xlu0 0
    %2843 = vperm.xlu0 %2842, %v2822
    %v2844 = vpop.permute.xlu0 %2843
    %2845 = vset.pattern.permute.xlu0 0
    %2846 = vperm.xlu0 %2845, %v2823
    %v2847 = vpop.permute.xlu0 %2846
    %vm2848 = vcmp.eq.s32.totalorder %v2826, 1
    %vm2849 = vcmp.eq.s32.totalorder %v2829, 1
    %vm2850 = vcmp.eq.s32.totalorder %v2832, 1
    %vm2851 = vcmp.eq.s32.totalorder %v2835, 1
    %vm2852 = vcmp.eq.s32.totalorder %v2838, 1
    %vm2853 = vcmp.eq.s32.totalorder %v2841, 1
    %vm2854 = vcmp.eq.s32.totalorder %v2844, 1
    %vm2855 = vcmp.eq.s32.totalorder %v2847, 1
    %v2856 = vsel %vm2848, %v2729, 0.0
    %v2857 = vsel %vm2849, %v2730, 0.0
    %v2858 = vsel %vm2850, %v2731, 0.0
    %v2859 = vsel %vm2851, %v2732, 0.0
    %v2860 = vsel %vm2852, %v2733, 0.0
    %v2861 = vsel %vm2853, %v2734, 0.0
    %v2862 = vsel %vm2854, %v2735, 0.0
    %v2863 = vsel %vm2855, %v2736, 0.0
    %v2864 = vsel %vm2848, %v2737, 0.0
    %v2865 = vsel %vm2849, %v2738, 0.0
    %v2866 = vsel %vm2850, %v2739, 0.0
    %v2867 = vsel %vm2851, %v2740, 0.0
    %v2868 = vsel %vm2852, %v2741, 0.0
    %v2869 = vsel %vm2853, %v2742, 0.0
    %v2870 = vsel %vm2854, %v2743, 0.0
    %v2871 = vsel %vm2855, %v2728, 0.0
    %2872 = vst [vmem:[#allocation2] sm:$0xff] %v2792
    %2873 = vst [vmem:[#allocation2 + $0x18] sm:$0xff] %v2793
    %2874 = vst [vmem:[#allocation2 + $0x30] sm:$0xff] %v2794
    %2875 = vst [vmem:[#allocation2 + $0x48] sm:$0xff] %v2795
    %2876 = vst [vmem:[#allocation2 + $0x60] sm:$0xff] %v2796
    %2877 = vst [vmem:[#allocation2 + $0x78] sm:$0xff] %v2797
    %2878 = vst [vmem:[#allocation2 + $0x90] sm:$0xff] %v2798
    %2879 = vst [vmem:[#allocation2 + $0xa8] sm:$0xff] %v2799
    %2880 = vst [vmem:[#allocation2 + $0xc0] sm:$0xff] %v2800
    %2881 = vst [vmem:[#allocation2 + $0xd8] sm:$0xff] %v2801
    %2882 = vst [vmem:[#allocation2 + $0xf0] sm:$0xff] %v2802
    %2883 = vst [vmem:[#allocation2 + $0x108] sm:$0xff] %v2803
    %2884 = vst [vmem:[#allocation2 + $0x120] sm:$0xff] %v2804
    %2885 = vst [vmem:[#allocation2 + $0x138] sm:$0xff] %v2805
    %2886 = vst [vmem:[#allocation2 + $0x150] sm:$0xff] %v2806
    %2887 = vst [vmem:[#allocation2 + $0x168] sm:$0xff] %v2807
    %2888 = vst [vmem:[#allocation2 + $0x8] sm:$0xff] %v2728
    %2889 = vst [vmem:[#allocation2 + $0x20] sm:$0xff] %v2729
    %2890 = vst [vmem:[#allocation2 + $0x38] sm:$0xff] %v2730
    %2891 = vst [vmem:[#allocation2 + $0x50] sm:$0xff] %v2731
    %2892 = vst [vmem:[#allocation2 + $0x68] sm:$0xff] %v2732
    %2893 = vst [vmem:[#allocation2 + $0x80] sm:$0xff] %v2733
    %2894 = vst [vmem:[#allocation2 + $0x98] sm:$0xff] %v2734
    %2895 = vst [vmem:[#allocation2 + $0xb0] sm:$0xff] %v2735
    %2896 = vst [vmem:[#allocation2 + $0xc8] sm:$0xff] %v2736
    %2897 = vst [vmem:[#allocation2 + $0xe0] sm:$0xff] %v2737
    %2898 = vst [vmem:[#allocation2 + $0xf8] sm:$0xff] %v2738
    %2899 = vst [vmem:[#allocation2 + $0x110] sm:$0xff] %v2739
    %2900 = vst [vmem:[#allocation2 + $0x128] sm:$0xff] %v2740
    %2901 = vst [vmem:[#allocation2 + $0x140] sm:$0xff] %v2741
    %2902 = vst [vmem:[#allocation2 + $0x158] sm:$0xff] %v2742
    %2903 = vst [vmem:[#allocation2 + $0x170] sm:$0xff] %v2743
    %2904 = vst [vmem:[#allocation2 + $0x10] sm:$0xff] %v2856
    %2905 = vst [vmem:[#allocation2 + $0x28] sm:$0xff] %v2857
    %2906 = vst [vmem:[#allocation2 + $0x40] sm:$0xff] %v2858
    %2907 = vst [vmem:[#allocation2 + $0x58] sm:$0xff] %v2859
    %2908 = vst [vmem:[#allocation2 + $0x70] sm:$0xff] %v2860
    %2909 = vst [vmem:[#allocation2 + $0x88] sm:$0xff] %v2861
    %2910 = vst [vmem:[#allocation2 + $0xa0] sm:$0xff] %v2862
    %2911 = vst [vmem:[#allocation2 + $0xb8] sm:$0xff] %v2863
    %2912 = vst [vmem:[#allocation2 + $0xd0] sm:$0xff] %v2864
    %2913 = vst [vmem:[#allocation2 + $0xe8] sm:$0xff] %v2865
    %2914 = vst [vmem:[#allocation2 + $0x100] sm:$0xff] %v2866
    %2915 = vst [vmem:[#allocation2 + $0x118] sm:$0xff] %v2867
    %2916 = vst [vmem:[#allocation2 + $0x130] sm:$0xff] %v2868
    %2917 = vst [vmem:[#allocation2 + $0x148] sm:$0xff] %v2869
    %2918 = vst [vmem:[#allocation2 + $0x160] sm:$0xff] %v2870
    %2919 = vst [vmem:[#allocation2 + $0x178] sm:$0xff] %v2871
    %v2920 = vld [vmem:[#allocation2] sm:$0xff]
    %v2921 = vld [vmem:[#allocation2 + $0x8] sm:$0xff]
    %v2922 = vld [vmem:[#allocation2 + $0x10] sm:$0xff]
    %v2923 = vld [vmem:[#allocation2 + $0x18] sm:$0xff]
    %v2924 = vld [vmem:[#allocation2 + $0x20] sm:$0xff]
    %v2925 = vld [vmem:[#allocation2 + $0x28] sm:$0xff]
    %v2926 = vld [vmem:[#allocation2 + $0x30] sm:$0xff]
    %v2927 = vld [vmem:[#allocation2 + $0x38] sm:$0xff]
    %v2928 = vld [vmem:[#allocation2 + $0x40] sm:$0xff]
    %v2929 = vld [vmem:[#allocation2 + $0x48] sm:$0xff]
    %v2930 = vld [vmem:[#allocation2 + $0x50] sm:$0xff]
    %v2931 = vld [vmem:[#allocation2 + $0x58] sm:$0xff]
    %v2932 = vld [vmem:[#allocation2 + $0x60] sm:$0xff]
    %v2933 = vld [vmem:[#allocation2 + $0x68] sm:$0xff]
    %v2934 = vld [vmem:[#allocation2 + $0x70] sm:$0xff]
    %v2935 = vld [vmem:[#allocation2 + $0x78] sm:$0xff]
    %v2936 = vld [vmem:[#allocation2 + $0x80] sm:$0xff]
    %v2937 = vld [vmem:[#allocation2 + $0x88] sm:$0xff]
    %v2938 = vld [vmem:[#allocation2 + $0x90] sm:$0xff]
    %v2939 = vld [vmem:[#allocation2 + $0x98] sm:$0xff]
    %v2940 = vld [vmem:[#allocation2 + $0xa0] sm:$0xff]
    %v2941 = vld [vmem:[#allocation2 + $0xa8] sm:$0xff]
    %v2942 = vld [vmem:[#allocation2 + $0xb0] sm:$0xff]
    %v2943 = vld [vmem:[#allocation2 + $0xb8] sm:$0xff]
    %v2944 = vld [vmem:[#allocation2 + $0xc0] sm:$0xff]
    %v2945 = vld [vmem:[#allocation2 + $0xc8] sm:$0xff]
    %v2946 = vld [vmem:[#allocation2 + $0xd0] sm:$0xff]
    %v2947 = vld [vmem:[#allocation2 + $0xd8] sm:$0xff]
    %v2948 = vld [vmem:[#allocation2 + $0xe0] sm:$0xff]
    %v2949 = vld [vmem:[#allocation2 + $0xe8] sm:$0xff]
    %v2950 = vld [vmem:[#allocation2 + $0xf0] sm:$0xff]
    %v2951 = vld [vmem:[#allocation2 + $0xf8] sm:$0xff]
    %v2952 = vld [vmem:[#allocation2 + $0x100] sm:$0xff]
    %v2953 = vld [vmem:[#allocation2 + $0x108] sm:$0xff]
    %v2954 = vld [vmem:[#allocation2 + $0x110] sm:$0xff]
    %v2955 = vld [vmem:[#allocation2 + $0x118] sm:$0xff]
    %v2956 = vld [vmem:[#allocation2 + $0x120] sm:$0xff]
    %v2957 = vld [vmem:[#allocation2 + $0x128] sm:$0xff]
    %v2958 = vld [vmem:[#allocation2 + $0x130] sm:$0xff]
    %v2959 = vld [vmem:[#allocation2 + $0x138] sm:$0xff]
    %v2960 = vld [vmem:[#allocation2 + $0x140] sm:$0xff]
    %v2961 = vld [vmem:[#allocation2 + $0x148] sm:$0xff]
    %v2962 = vld [vmem:[#allocation2 + $0x150] sm:$0xff]
    %v2963 = vld [vmem:[#allocation2 + $0x158] sm:$0xff]
    %v2964 = vld [vmem:[#allocation2 + $0x160] sm:$0xff]
    %v2965 = vld [vmem:[#allocation2 + $0x168] sm:$0xff]
    %v2966 = vld [vmem:[#allocation2 + $0x170] sm:$0xff]
    %v2967 = vld [vmem:[#allocation2 + $0x178] sm:$0xff]
    %s2968 = scalar_lea.vmem [#allocation7], 1536
    %v2969 = vld [vmem:[%s2968] sm:$0xff]
    %v2970 = vld [vmem:[%s2968 + $0x8] sm:$0xff]
    %v2971 = vld [vmem:[%s2968 + $0x10] sm:$0xff]
    %v2972 = vld [vmem:[%s2968 + $0x18] sm:$0xff]
    %v2973 = vld [vmem:[%s2968 + $0x20] sm:$0xff]
    %v2974 = vld [vmem:[%s2968 + $0x28] sm:$0xff]
    %v2975 = vld [vmem:[%s2968 + $0x30] sm:$0xff]
    %v2976 = vld [vmem:[%s2968 + $0x38] sm:$0xff]
    %v2977 = vld [vmem:[%s2968 + $0x40] sm:$0xff]
    %v2978 = vld [vmem:[%s2968 + $0x48] sm:$0xff]
    %v2979 = vld [vmem:[%s2968 + $0x50] sm:$0xff]
    %v2980 = vld [vmem:[%s2968 + $0x58] sm:$0xff]
    %v2981 = vld [vmem:[%s2968 + $0x60] sm:$0xff]
    %v2982 = vld [vmem:[%s2968 + $0x68] sm:$0xff]
    %v2983 = vld [vmem:[%s2968 + $0x70] sm:$0xff]
    %v2984 = vld [vmem:[%s2968 + $0x78] sm:$0xff]
    %v2985 = vld [vmem:[%s2968 + $0x80] sm:$0xff]
    %v2986 = vld [vmem:[%s2968 + $0x88] sm:$0xff]
    %v2987 = vld [vmem:[%s2968 + $0x90] sm:$0xff]
    %v2988 = vld [vmem:[%s2968 + $0x98] sm:$0xff]
    %v2989 = vld [vmem:[%s2968 + $0xa0] sm:$0xff]
    %v2990 = vld [vmem:[%s2968 + $0xa8] sm:$0xff]
    %v2991 = vld [vmem:[%s2968 + $0xb0] sm:$0xff]
    %v2992 = vld [vmem:[%s2968 + $0xb8] sm:$0xff]
    %v2993 = vld [vmem:[%s2968 + $0xc0] sm:$0xff]
    %v2994 = vld [vmem:[%s2968 + $0xc8] sm:$0xff]
    %v2995 = vld [vmem:[%s2968 + $0xd0] sm:$0xff]
    %v2996 = vld [vmem:[%s2968 + $0xd8] sm:$0xff]
    %v2997 = vld [vmem:[%s2968 + $0xe0] sm:$0xff]
    %v2998 = vld [vmem:[%s2968 + $0xe8] sm:$0xff]
    %v2999 = vld [vmem:[%s2968 + $0xf0] sm:$0xff]
    %v3000 = vld [vmem:[%s2968 + $0xf8] sm:$0xff]
    %v3001 = vld [vmem:[%s2968 + $0x100] sm:$0xff]
    %v3002 = vld [vmem:[%s2968 + $0x108] sm:$0xff]
    %v3003 = vld [vmem:[%s2968 + $0x110] sm:$0xff]
    %v3004 = vld [vmem:[%s2968 + $0x118] sm:$0xff]
    %v3005 = vld [vmem:[%s2968 + $0x120] sm:$0xff]
    %v3006 = vld [vmem:[%s2968 + $0x128] sm:$0xff]
    %v3007 = vld [vmem:[%s2968 + $0x130] sm:$0xff]
    %v3008 = vld [vmem:[%s2968 + $0x138] sm:$0xff]
    %v3009 = vld [vmem:[%s2968 + $0x140] sm:$0xff]
    %v3010 = vld [vmem:[%s2968 + $0x148] sm:$0xff]
    %v3011 = vld [vmem:[%s2968 + $0x150] sm:$0xff]
    %v3012 = vld [vmem:[%s2968 + $0x158] sm:$0xff]
    %v3013 = vld [vmem:[%s2968 + $0x160] sm:$0xff]
    %v3014 = vld [vmem:[%s2968 + $0x168] sm:$0xff]
    %v3015 = vld [vmem:[%s2968 + $0x170] sm:$0xff]
    %v3016 = vld [vmem:[%s2968 + $0x178] sm:$0xff]
    %s3017 = scalar_lea.vmem [#allocation8], 4
    %v3018 = vld [vmem:[%s3017] sm:$0x1]
    %v3020 = vlaneseq
    %v3021 = vshrl.u32 %v3020, 7
    %v3022 = vsub.s32 0, %v3021
    %v3023 = vrot.slane %v3018, %v3022
    %3025 = vmatprep.subr.mxu0 0.0
    %3026 = vmatpush1.msra.mxu0 %v2984
    %3027 = vmatprep.subr.mxu0 0.0
    %3028 = vmatpush1.msra.mxu0 %v2983
    %3029 = vmatprep.subr.mxu0 0.0
    %3030 = vmatpush1.msra.mxu0 %v2982
    %3031 = vmatprep.subr.mxu0 0.0
    %3032 = vmatpush1.msra.mxu0 %v2981
    %3033 = vmatprep.subr.mxu0 0.0
    %3034 = vmatpush1.msra.mxu0 %v2980
    %3035 = vmatprep.subr.mxu0 0.0
    %3036 = vmatpush1.msra.mxu0 %v2979
    %3037 = vmatprep.subr.mxu0 0.0
    %3038 = vmatpush1.msra.mxu0 %v2978
    %3039 = vmatprep.subr.mxu0 0.0
    %3040 = vmatpush1.msra.mxu0 %v2977
    %3041 = vmatprep.subr.mxu0 0.0
    %3042 = vmatpush1.msra.mxu0 %v2976
    %3043 = vmatprep.subr.mxu0 0.0
    %3044 = vmatpush1.msra.mxu0 %v2975
    %3045 = vmatprep.subr.mxu0 0.0
    %3046 = vmatpush1.msra.mxu0 %v2974
    %3047 = vmatprep.subr.mxu0 0.0
    %3048 = vmatpush1.msra.mxu0 %v2973
    %3049 = vmatprep.subr.mxu0 0.0
    %3050 = vmatpush1.msra.mxu0 %v2972
    %3051 = vmatprep.subr.mxu0 0.0
    %3052 = vmatpush1.msra.mxu0 %v2971
    %3053 = vmatprep.subr.mxu0 0.0
    %3054 = vmatpush1.msra.mxu0 %v2970
    %3055 = vmatprep.subr.mxu0 0.0
    %3056 = vmatpush1.msra.mxu0 %v2969
    %3057 = vmatprep.subr.mxu0 0.0
    %3058 = vmatpush2.msra.mxu0 %v3000
    %3059 = vmatprep.subr.mxu0 0.0
    %3060 = vmatpush2.msra.mxu0 %v2999
    %3061 = vmatprep.subr.mxu0 0.0
    %3062 = vmatpush2.msra.mxu0 %v2998
    %3063 = vmatprep.subr.mxu0 0.0
    %3064 = vmatpush2.msra.mxu0 %v2997
    %3065 = vmatprep.subr.mxu0 0.0
    %3066 = vmatpush2.msra.mxu0 %v2996
    %3067 = vmatprep.subr.mxu0 0.0
    %3068 = vmatpush2.msra.mxu0 %v2995
    %3069 = vmatprep.subr.mxu0 0.0
    %3070 = vmatpush2.msra.mxu0 %v2994
    %3071 = vmatprep.subr.mxu0 0.0
    %3072 = vmatpush2.msra.mxu0 %v2993
    %3073 = vmatprep.subr.mxu0 0.0
    %3074 = vmatpush2.msra.mxu0 %v2992
    %3075 = vmatprep.subr.mxu0 0.0
    %3076 = vmatpush2.msra.mxu0 %v2991
    %3077 = vmatprep.subr.mxu0 0.0
    %3078 = vmatpush2.msra.mxu0 %v2990
    %3079 = vmatprep.subr.mxu0 0.0
    %3080 = vmatpush2.msra.mxu0 %v2989
    %3081 = vmatprep.subr.mxu0 0.0
    %3082 = vmatpush2.msra.mxu0 %v2988
    %3083 = vmatprep.subr.mxu0 0.0
    %3084 = vmatpush2.msra.mxu0 %v2987
    %3085 = vmatprep.subr.mxu0 0.0
    %3086 = vmatpush2.msra.mxu0 %v2986
    %3087 = vmatprep.subr.mxu0 0.0
    %3088 = vmatpush2.msra.mxu0 %v2985
    %3089 = vmatprep.mubr.f32.mxu0 %v2921
    %3090 = vmatmul.mubr.f32.gmra.mxu0 %v2920
    %v3091 = vpop.f32.mrf.mxu0
    %v3092 = vadd.f32 %v3023, %v3091
    %v3093 = vpop.f32.mrf.mxu0
    %3094 = vmatprep.mubr.f32.mxu0 %v2924
    %3095 = vmatmul.mubr.f32.gmra.mxu0 %v2923
    %v3096 = vpop.f32.mrf.mxu0
    %v3097 = vadd.f32 %v3023, %v3096
    %v3098 = vpop.f32.mrf.mxu0
    %3099 = vmatprep.mubr.f32.mxu0 %v2927
    %3100 = vmatmul.mubr.f32.gmra.mxu0 %v2926
    %v3101 = vpop.f32.mrf.mxu0
    %v3102 = vadd.f32 %v3023, %v3101
    %v3103 = vpop.f32.mrf.mxu0
    %3104 = vmatprep.mubr.f32.mxu0 %v2930
    %3105 = vmatmul.mubr.f32.gmra.mxu0 %v2929
    %v3106 = vpop.f32.mrf.mxu0
    %v3107 = vadd.f32 %v3023, %v3106
    %v3108 = vpop.f32.mrf.mxu0
    %3109 = vmatprep.mubr.f32.mxu0 %v2933
    %3110 = vmatmul.mubr.f32.gmra.mxu0 %v2932
    %v3111 = vpop.f32.mrf.mxu0
    %v3112 = vadd.f32 %v3023, %v3111
    %v3113 = vpop.f32.mrf.mxu0
    %3114 = vmatprep.mubr.f32.mxu0 %v2936
    %3115 = vmatmul.mubr.f32.gmra.mxu0 %v2935
    %v3116 = vpop.f32.mrf.mxu0
    %v3117 = vadd.f32 %v3023, %v3116
    %v3118 = vpop.f32.mrf.mxu0
    %3119 = vmatprep.mubr.f32.mxu0 %v2939
    %3120 = vmatmul.mubr.f32.gmra.mxu0 %v2938
    %v3121 = vpop.f32.mrf.mxu0
    %v3122 = vadd.f32 %v3023, %v3121
    %v3123 = vpop.f32.mrf.mxu0
    %3124 = vmatprep.mubr.f32.mxu0 %v2942
    %3125 = vmatmul.mubr.f32.gmra.mxu0 %v2941
    %v3126 = vpop.f32.mrf.mxu0
    %v3127 = vadd.f32 %v3023, %v3126
    %v3128 = vpop.f32.mrf.mxu0
    %3129 = vmatprep.mubr.f32.mxu0 %v2945
    %3130 = vmatmul.mubr.f32.gmra.mxu0 %v2944
    %v3131 = vpop.f32.mrf.mxu0
    %v3132 = vadd.f32 %v3023, %v3131
    %v3133 = vpop.f32.mrf.mxu0
    %3134 = vmatprep.mubr.f32.mxu0 %v2948
    %3135 = vmatmul.mubr.f32.gmra.mxu0 %v2947
    %v3136 = vpop.f32.mrf.mxu0
    %v3137 = vadd.f32 %v3023, %v3136
    %v3138 = vpop.f32.mrf.mxu0
    %3139 = vmatprep.mubr.f32.mxu0 %v2951
    %3140 = vmatmul.mubr.f32.gmra.mxu0 %v2950
    %v3141 = vpop.f32.mrf.mxu0
    %v3142 = vadd.f32 %v3023, %v3141
    %v3143 = vpop.f32.mrf.mxu0
    %3144 = vmatprep.mubr.f32.mxu0 %v2954
    %3145 = vmatmul.mubr.f32.gmra.mxu0 %v2953
    %v3146 = vpop.f32.mrf.mxu0
    %v3147 = vadd.f32 %v3023, %v3146
    %v3148 = vpop.f32.mrf.mxu0
    %3149 = vmatprep.mubr.f32.mxu0 %v2957
    %3150 = vmatmul.mubr.f32.gmra.mxu0 %v2956
    %v3151 = vpop.f32.mrf.mxu0
    %v3152 = vadd.f32 %v3023, %v3151
    %v3153 = vpop.f32.mrf.mxu0
    %3154 = vmatprep.mubr.f32.mxu0 %v2960
    %3155 = vmatmul.mubr.f32.gmra.mxu0 %v2959
    %v3156 = vpop.f32.mrf.mxu0
    %v3157 = vadd.f32 %v3023, %v3156
    %v3158 = vpop.f32.mrf.mxu0
    %3159 = vmatprep.mubr.f32.mxu0 %v2963
    %3160 = vmatmul.mubr.f32.gmra.mxu0 %v2962
    %v3161 = vpop.f32.mrf.mxu0
    %v3162 = vadd.f32 %v3023, %v3161
    %v3163 = vpop.f32.mrf.mxu0
    %3164 = vmatprep.mubr.f32.mxu0 %v2966
    %3165 = vmatmul.mubr.f32.gmra.mxu0 %v2965
    %v3166 = vpop.f32.mrf.mxu0
    %v3167 = vadd.f32 %v3023, %v3166
    %v3168 = vpop.f32.mrf.mxu0
    %3169 = vdwg.mxu0
    %3170 = vmatprep.subr.mxu0 0.0
    %3171 = vmatpush1.msra.mxu0 %v3016
    %3172 = vmatprep.subr.mxu0 0.0
    %3173 = vmatpush1.msra.mxu0 %v3015
    %3174 = vmatprep.subr.mxu0 0.0
    %3175 = vmatpush1.msra.mxu0 %v3014
    %3176 = vmatprep.subr.mxu0 0.0
    %3177 = vmatpush1.msra.mxu0 %v3013
    %3178 = vmatprep.subr.mxu0 0.0
    %3179 = vmatpush1.msra.mxu0 %v3012
    %3180 = vmatprep.subr.mxu0 0.0
    %3181 = vmatpush1.msra.mxu0 %v3011
    %3182 = vmatprep.subr.mxu0 0.0
    %3183 = vmatpush1.msra.mxu0 %v3010
    %3184 = vmatprep.subr.mxu0 0.0
    %3185 = vmatpush1.msra.mxu0 %v3009
    %3186 = vmatprep.subr.mxu0 0.0
    %3187 = vmatpush1.msra.mxu0 %v3008
    %3188 = vmatprep.subr.mxu0 0.0
    %3189 = vmatpush1.msra.mxu0 %v3007
    %3190 = vmatprep.subr.mxu0 0.0
    %3191 = vmatpush1.msra.mxu0 %v3006
    %3192 = vmatprep.subr.mxu0 0.0
    %3193 = vmatpush1.msra.mxu0 %v3005
    %3194 = vmatprep.subr.mxu0 0.0
    %3195 = vmatpush1.msra.mxu0 %v3004
    %3196 = vmatprep.subr.mxu0 0.0
    %3197 = vmatpush1.msra.mxu0 %v3003
    %3198 = vmatprep.subr.mxu0 0.0
    %3199 = vmatpush1.msra.mxu0 %v3002
    %3200 = vmatprep.subr.mxu0 0.0
    %3201 = vmatpush1.msra.mxu0 %v3001
    %3202 = vmatprep.subr.mxu0 0.0
    %3203 = vmatpush2.msra.mxu0 0.0
    %3204 = vmatprep.subr.mxu0 0.0
    %3205 = vmatpush2.msra.mxu0 0.0
    %3206 = vmatprep.subr.mxu0 0.0
    %3207 = vmatpush2.msra.mxu0 0.0
    %3208 = vmatprep.subr.mxu0 0.0
    %3209 = vmatpush2.msra.mxu0 0.0
    %3210 = vmatprep.subr.mxu0 0.0
    %3211 = vmatpush2.msra.mxu0 0.0
    %3212 = vmatprep.subr.mxu0 0.0
    %3213 = vmatpush2.msra.mxu0 0.0
    %3214 = vmatprep.subr.mxu0 0.0
    %3215 = vmatpush2.msra.mxu0 0.0
    %3216 = vmatprep.subr.mxu0 0.0
    %3217 = vmatpush2.msra.mxu0 0.0
    %3218 = vmatprep.subr.mxu0 0.0
    %3219 = vmatpush2.msra.mxu0 0.0
    %3220 = vmatprep.subr.mxu0 0.0
    %3221 = vmatpush2.msra.mxu0 0.0
    %3222 = vmatprep.subr.mxu0 0.0
    %3223 = vmatpush2.msra.mxu0 0.0
    %3224 = vmatprep.subr.mxu0 0.0
    %3225 = vmatpush2.msra.mxu0 0.0
    %3226 = vmatprep.subr.mxu0 0.0
    %3227 = vmatpush2.msra.mxu0 0.0
    %3228 = vmatprep.subr.mxu0 0.0
    %3229 = vmatpush2.msra.mxu0 0.0
    %3230 = vmatprep.subr.mxu0 0.0
    %3231 = vmatpush2.msra.mxu0 0.0
    %3232 = vmatprep.subr.mxu0 0.0
    %3233 = vmatpush2.msra.mxu0 0.0
    %3234 = vmatprep.mubr.f32.mxu0 0.0
    %3235 = vmatmul.mubr.f32.gmra.mxu0 %v2922
    %v3236 = vpop.f32.mrf.mxu0
    %v3237 = vadd.f32 %v3092, %v3236
    %v3238 = vpop.f32.mrf.mxu0
    %3239 = vmatprep.mubr.f32.mxu0 0.0
    %3240 = vmatmul.mubr.f32.gmra.mxu0 %v2925
    %v3241 = vpop.f32.mrf.mxu0
    %v3242 = vadd.f32 %v3097, %v3241
    %v3243 = vpop.f32.mrf.mxu0
    %3244 = vmatprep.mubr.f32.mxu0 0.0
    %3245 = vmatmul.mubr.f32.gmra.mxu0 %v2928
    %v3246 = vpop.f32.mrf.mxu0
    %v3247 = vadd.f32 %v3102, %v3246
    %v3248 = vpop.f32.mrf.mxu0
    %3249 = vmatprep.mubr.f32.mxu0 0.0
    %3250 = vmatmul.mubr.f32.gmra.mxu0 %v2931
    %v3251 = vpop.f32.mrf.mxu0
    %v3252 = vadd.f32 %v3107, %v3251
    %v3253 = vpop.f32.mrf.mxu0
    %3254 = vmatprep.mubr.f32.mxu0 0.0
    %3255 = vmatmul.mubr.f32.gmra.mxu0 %v2934
    %v3256 = vpop.f32.mrf.mxu0
    %v3257 = vadd.f32 %v3112, %v3256
    %v3258 = vpop.f32.mrf.mxu0
    %3259 = vmatprep.mubr.f32.mxu0 0.0
    %3260 = vmatmul.mubr.f32.gmra.mxu0 %v2937
    %v3261 = vpop.f32.mrf.mxu0
    %v3262 = vadd.f32 %v3117, %v3261
    %v3263 = vpop.f32.mrf.mxu0
    %3264 = vmatprep.mubr.f32.mxu0 0.0
    %3265 = vmatmul.mubr.f32.gmra.mxu0 %v2940
    %v3266 = vpop.f32.mrf.mxu0
    %v3267 = vadd.f32 %v3122, %v3266
    %v3268 = vpop.f32.mrf.mxu0
    %3269 = vmatprep.mubr.f32.mxu0 0.0
    %3270 = vmatmul.mubr.f32.gmra.mxu0 %v2943
    %v3271 = vpop.f32.mrf.mxu0
    %v3272 = vadd.f32 %v3127, %v3271
    %v3273 = vpop.f32.mrf.mxu0
    %3274 = vmatprep.mubr.f32.mxu0 0.0
    %3275 = vmatmul.mubr.f32.gmra.mxu0 %v2946
    %v3276 = vpop.f32.mrf.mxu0
    %v3277 = vadd.f32 %v3132, %v3276
    %v3278 = vpop.f32.mrf.mxu0
    %3279 = vmatprep.mubr.f32.mxu0 0.0
    %3280 = vmatmul.mubr.f32.gmra.mxu0 %v2949
    %v3281 = vpop.f32.mrf.mxu0
    %v3282 = vadd.f32 %v3137, %v3281
    %v3283 = vpop.f32.mrf.mxu0
    %3284 = vmatprep.mubr.f32.mxu0 0.0
    %3285 = vmatmul.mubr.f32.gmra.mxu0 %v2952
    %v3286 = vpop.f32.mrf.mxu0
    %v3287 = vadd.f32 %v3142, %v3286
    %v3288 = vpop.f32.mrf.mxu0
    %3289 = vmatprep.mubr.f32.mxu0 0.0
    %3290 = vmatmul.mubr.f32.gmra.mxu0 %v2955
    %v3291 = vpop.f32.mrf.mxu0
    %v3292 = vadd.f32 %v3147, %v3291
    %v3293 = vpop.f32.mrf.mxu0
    %3294 = vmatprep.mubr.f32.mxu0 0.0
    %3295 = vmatmul.mubr.f32.gmra.mxu0 %v2958
    %v3296 = vpop.f32.mrf.mxu0
    %v3297 = vadd.f32 %v3152, %v3296
    %v3298 = vpop.f32.mrf.mxu0
    %3299 = vmatprep.mubr.f32.mxu0 0.0
    %3300 = vmatmul.mubr.f32.gmra.mxu0 %v2961
    %v3301 = vpop.f32.mrf.mxu0
    %v3302 = vadd.f32 %v3157, %v3301
    %v3303 = vpop.f32.mrf.mxu0
    %3304 = vmatprep.mubr.f32.mxu0 0.0
    %3305 = vmatmul.mubr.f32.gmra.mxu0 %v2964
    %v3306 = vpop.f32.mrf.mxu0
    %v3307 = vadd.f32 %v3162, %v3306
    %v3308 = vpop.f32.mrf.mxu0
    %3309 = vmatprep.mubr.f32.mxu0 0.0
    %3310 = vmatmul.mubr.f32.gmra.mxu0 %v2967
    %v3311 = vpop.f32.mrf.mxu0
    %v3312 = vadd.f32 %v3167, %v3311
    %v3313 = vpop.f32.mrf.mxu0
    %3314 = vdwg.mxu0
    %v3315 = vmax.f32 %v3237, 0.0
    %v3316 = vmax.f32 %v3242, 0.0
    %v3317 = vmax.f32 %v3247, 0.0
    %v3318 = vmax.f32 %v3252, 0.0
    %v3319 = vmax.f32 %v3257, 0.0
    %v3320 = vmax.f32 %v3262, 0.0
    %v3321 = vmax.f32 %v3267, 0.0
    %v3322 = vmax.f32 %v3272, 0.0
    %v3323 = vmax.f32 %v3277, 0.0
    %v3324 = vmax.f32 %v3282, 0.0
    %v3325 = vmax.f32 %v3287, 0.0
    %v3326 = vmax.f32 %v3292, 0.0
    %v3327 = vmax.f32 %v3297, 0.0
    %v3328 = vmax.f32 %v3302, 0.0
    %v3329 = vmax.f32 %v3307, 0.0
    %v3330 = vmax.f32 %v3312, 0.0
    %v3331 = vsel %vm2784, %v3330, 0.0
    %v3332 = vsel %vm2785, %v3315, 0.0
    %v3333 = vsel %vm2786, %v3316, 0.0
    %v3334 = vsel %vm2787, %v3317, 0.0
    %v3335 = vsel %vm2788, %v3318, 0.0
    %v3336 = vsel %vm2789, %v3319, 0.0
    %v3337 = vsel %vm2790, %v3320, 0.0
    %v3338 = vsel %vm2791, %v3321, 0.0
    %v3339 = vsel %vm2784, %v3322, 0.0
    %v3340 = vsel %vm2785, %v3323, 0.0
    %v3341 = vsel %vm2786, %v3324, 0.0
    %v3342 = vsel %vm2787, %v3325, 0.0
    %v3343 = vsel %vm2788, %v3326, 0.0
    %v3344 = vsel %vm2789, %v3327, 0.0
    %v3345 = vsel %vm2790, %v3328, 0.0
    %v3346 = vsel %vm2791, %v3329, 0.0
    %v3347 = vsel %vm2848, %v3316, 0.0
    %v3348 = vsel %vm2849, %v3317, 0.0
    %v3349 = vsel %vm2850, %v3318, 0.0
    %v3350 = vsel %vm2851, %v3319, 0.0
    %v3351 = vsel %vm2852, %v3320, 0.0
    %v3352 = vsel %vm2853, %v3321, 0.0
    %v3353 = vsel %vm2854, %v3322, 0.0
    %v3354 = vsel %vm2855, %v3323, 0.0
    %v3355 = vsel %vm2848, %v3324, 0.0
    %v3356 = vsel %vm2849, %v3325, 0.0
    %v3357 = vsel %vm2850, %v3326, 0.0
    %v3358 = vsel %vm2851, %v3327, 0.0
    %v3359 = vsel %vm2852, %v3328, 0.0
    %v3360 = vsel %vm2853, %v3329, 0.0
    %v3361 = vsel %vm2854, %v3330, 0.0
    %v3362 = vsel %vm2855, %v3315, 0.0
    %3363 = vst [vmem:[#allocation2] sm:$0xff] %v3331
    %3364 = vst [vmem:[#allocation2 + $0x18] sm:$0xff] %v3332
    %3365 = vst [vmem:[#allocation2 + $0x30] sm:$0xff] %v3333
    %3366 = vst [vmem:[#allocation2 + $0x48] sm:$0xff] %v3334
    %3367 = vst [vmem:[#allocation2 + $0x60] sm:$0xff] %v3335
    %3368 = vst [vmem:[#allocation2 + $0x78] sm:$0xff] %v3336
    %3369 = vst [vmem:[#allocation2 + $0x90] sm:$0xff] %v3337
    %3370 = vst [vmem:[#allocation2 + $0xa8] sm:$0xff] %v3338
    %3371 = vst [vmem:[#allocation2 + $0xc0] sm:$0xff] %v3339
    %3372 = vst [vmem:[#allocation2 + $0xd8] sm:$0xff] %v3340
    %3373 = vst [vmem:[#allocation2 + $0xf0] sm:$0xff] %v3341
    %3374 = vst [vmem:[#allocation2 + $0x108] sm:$0xff] %v3342
    %3375 = vst [vmem:[#allocation2 + $0x120] sm:$0xff] %v3343
    %3376 = vst [vmem:[#allocation2 + $0x138] sm:$0xff] %v3344
    %3377 = vst [vmem:[#allocation2 + $0x150] sm:$0xff] %v3345
    %3378 = vst [vmem:[#allocation2 + $0x168] sm:$0xff] %v3346
    %3379 = vst [vmem:[#allocation2 + $0x8] sm:$0xff] %v3315
    %3380 = vst [vmem:[#allocation2 + $0x20] sm:$0xff] %v3316
    %3381 = vst [vmem:[#allocation2 + $0x38] sm:$0xff] %v3317
    %3382 = vst [vmem:[#allocation2 + $0x50] sm:$0xff] %v3318
    %3383 = vst [vmem:[#allocation2 + $0x68] sm:$0xff] %v3319
    %3384 = vst [vmem:[#allocation2 + $0x80] sm:$0xff] %v3320
    %3385 = vst [vmem:[#allocation2 + $0x98] sm:$0xff] %v3321
    %3386 = vst [vmem:[#allocation2 + $0xb0] sm:$0xff] %v3322
    %3387 = vst [vmem:[#allocation2 + $0xc8] sm:$0xff] %v3323
    %3388 = vst [vmem:[#allocation2 + $0xe0] sm:$0xff] %v3324
    %3389 = vst [vmem:[#allocation2 + $0xf8] sm:$0xff] %v3325
    %3390 = vst [vmem:[#allocation2 + $0x110] sm:$0xff] %v3326
    %3391 = vst [vmem:[#allocation2 + $0x128] sm:$0xff] %v3327
    %3392 = vst [vmem:[#allocation2 + $0x140] sm:$0xff] %v3328
    %3393 = vst [vmem:[#allocation2 + $0x158] sm:$0xff] %v3329
    %3394 = vst [vmem:[#allocation2 + $0x170] sm:$0xff] %v3330
    %3395 = vst [vmem:[#allocation2 + $0x10] sm:$0xff] %v3347
    %3396 = vst [vmem:[#allocation2 + $0x28] sm:$0xff] %v3348
    %3397 = vst [vmem:[#allocation2 + $0x40] sm:$0xff] %v3349
    %3398 = vst [vmem:[#allocation2 + $0x58] sm:$0xff] %v3350
    %3399 = vst [vmem:[#allocation2 + $0x70] sm:$0xff] %v3351
    %3400 = vst [vmem:[#allocation2 + $0x88] sm:$0xff] %v3352
    %3401 = vst [vmem:[#allocation2 + $0xa0] sm:$0xff] %v3353
    %3402 = vst [vmem:[#allocation2 + $0xb8] sm:$0xff] %v3354
    %3403 = vst [vmem:[#allocation2 + $0xd0] sm:$0xff] %v3355
    %3404 = vst [vmem:[#allocation2 + $0xe8] sm:$0xff] %v3356
    %3405 = vst [vmem:[#allocation2 + $0x100] sm:$0xff] %v3357
    %3406 = vst [vmem:[#allocation2 + $0x118] sm:$0xff] %v3358
    %3407 = vst [vmem:[#allocation2 + $0x130] sm:$0xff] %v3359
    %3408 = vst [vmem:[#allocation2 + $0x148] sm:$0xff] %v3360
    %3409 = vst [vmem:[#allocation2 + $0x160] sm:$0xff] %v3361
    %3410 = vst [vmem:[#allocation2 + $0x178] sm:$0xff] %v3362
    %v3411 = vld [vmem:[#allocation2] sm:$0xff]
    %v3412 = vld [vmem:[#allocation2 + $0x8] sm:$0xff]
    %v3413 = vld [vmem:[#allocation2 + $0x10] sm:$0xff]
    %v3414 = vld [vmem:[#allocation2 + $0x18] sm:$0xff]
    %v3415 = vld [vmem:[#allocation2 + $0x20] sm:$0xff]
    %v3416 = vld [vmem:[#allocation2 + $0x28] sm:$0xff]
    %v3417 = vld [vmem:[#allocation2 + $0x30] sm:$0xff]
    %v3418 = vld [vmem:[#allocation2 + $0x38] sm:$0xff]
    %v3419 = vld [vmem:[#allocation2 + $0x40] sm:$0xff]
    %v3420 = vld [vmem:[#allocation2 + $0x48] sm:$0xff]
    %v3421 = vld [vmem:[#allocation2 + $0x50] sm:$0xff]
    %v3422 = vld [vmem:[#allocation2 + $0x58] sm:$0xff]
    %v3423 = vld [vmem:[#allocation2 + $0x60] sm:$0xff]
    %v3424 = vld [vmem:[#allocation2 + $0x68] sm:$0xff]
    %v3425 = vld [vmem:[#allocation2 + $0x70] sm:$0xff]
    %v3426 = vld [vmem:[#allocation2 + $0x78] sm:$0xff]
    %v3427 = vld [vmem:[#allocation2 + $0x80] sm:$0xff]
    %v3428 = vld [vmem:[#allocation2 + $0x88] sm:$0xff]
    %v3429 = vld [vmem:[#allocation2 + $0x90] sm:$0xff]
    %v3430 = vld [vmem:[#allocation2 + $0x98] sm:$0xff]
    %v3431 = vld [vmem:[#allocation2 + $0xa0] sm:$0xff]
    %v3432 = vld [vmem:[#allocation2 + $0xa8] sm:$0xff]
    %v3433 = vld [vmem:[#allocation2 + $0xb0] sm:$0xff]
    %v3434 = vld [vmem:[#allocation2 + $0xb8] sm:$0xff]
    %v3435 = vld [vmem:[#allocation2 + $0xc0] sm:$0xff]
    %v3436 = vld [vmem:[#allocation2 + $0xc8] sm:$0xff]
    %v3437 = vld [vmem:[#allocation2 + $0xd0] sm:$0xff]
    %v3438 = vld [vmem:[#allocation2 + $0xd8] sm:$0xff]
    %v3439 = vld [vmem:[#allocation2 + $0xe0] sm:$0xff]
    %v3440 = vld [vmem:[#allocation2 + $0xe8] sm:$0xff]
    %v3441 = vld [vmem:[#allocation2 + $0xf0] sm:$0xff]
    %v3442 = vld [vmem:[#allocation2 + $0xf8] sm:$0xff]
    %v3443 = vld [vmem:[#allocation2 + $0x100] sm:$0xff]
    %v3444 = vld [vmem:[#allocation2 + $0x108] sm:$0xff]
    %v3445 = vld [vmem:[#allocation2 + $0x110] sm:$0xff]
    %v3446 = vld [vmem:[#allocation2 + $0x118] sm:$0xff]
    %v3447 = vld [vmem:[#allocation2 + $0x120] sm:$0xff]
    %v3448 = vld [vmem:[#allocation2 + $0x128] sm:$0xff]
    %v3449 = vld [vmem:[#allocation2 + $0x130] sm:$0xff]
    %v3450 = vld [vmem:[#allocation2 + $0x138] sm:$0xff]
    %v3451 = vld [vmem:[#allocation2 + $0x140] sm:$0xff]
    %v3452 = vld [vmem:[#allocation2 + $0x148] sm:$0xff]
    %v3453 = vld [vmem:[#allocation2 + $0x150] sm:$0xff]
    %v3454 = vld [vmem:[#allocation2 + $0x158] sm:$0xff]
    %v3455 = vld [vmem:[#allocation2 + $0x160] sm:$0xff]
    %v3456 = vld [vmem:[#allocation2 + $0x168] sm:$0xff]
    %v3457 = vld [vmem:[#allocation2 + $0x170] sm:$0xff]
    %v3458 = vld [vmem:[#allocation2 + $0x178] sm:$0xff]
    %s3459 = scalar_lea.vmem [#allocation7], 1920
    %v3460 = vld [vmem:[%s3459] sm:$0xff]
    %v3461 = vld [vmem:[%s3459 + $0x8] sm:$0xff]
    %v3462 = vld [vmem:[%s3459 + $0x10] sm:$0xff]
    %v3463 = vld [vmem:[%s3459 + $0x18] sm:$0xff]
    %v3464 = vld [vmem:[%s3459 + $0x20] sm:$0xff]
    %v3465 = vld [vmem:[%s3459 + $0x28] sm:$0xff]
    %v3466 = vld [vmem:[%s3459 + $0x30] sm:$0xff]
    %v3467 = vld [vmem:[%s3459 + $0x38] sm:$0xff]
    %v3468 = vld [vmem:[%s3459 + $0x40] sm:$0xff]
    %v3469 = vld [vmem:[%s3459 + $0x48] sm:$0xff]
    %v3470 = vld [vmem:[%s3459 + $0x50] sm:$0xff]
    %v3471 = vld [vmem:[%s3459 + $0x58] sm:$0xff]
    %v3472 = vld [vmem:[%s3459 + $0x60] sm:$0xff]
    %v3473 = vld [vmem:[%s3459 + $0x68] sm:$0xff]
    %v3474 = vld [vmem:[%s3459 + $0x70] sm:$0xff]
    %v3475 = vld [vmem:[%s3459 + $0x78] sm:$0xff]
    %v3476 = vld [vmem:[%s3459 + $0x80] sm:$0xff]
    %v3477 = vld [vmem:[%s3459 + $0x88] sm:$0xff]
    %v3478 = vld [vmem:[%s3459 + $0x90] sm:$0xff]
    %v3479 = vld [vmem:[%s3459 + $0x98] sm:$0xff]
    %v3480 = vld [vmem:[%s3459 + $0xa0] sm:$0xff]
    %v3481 = vld [vmem:[%s3459 + $0xa8] sm:$0xff]
    %v3482 = vld [vmem:[%s3459 + $0xb0] sm:$0xff]
    %v3483 = vld [vmem:[%s3459 + $0xb8] sm:$0xff]
    %v3484 = vld [vmem:[%s3459 + $0xc0] sm:$0xff]
    %v3485 = vld [vmem:[%s3459 + $0xc8] sm:$0xff]
    %v3486 = vld [vmem:[%s3459 + $0xd0] sm:$0xff]
    %v3487 = vld [vmem:[%s3459 + $0xd8] sm:$0xff]
    %v3488 = vld [vmem:[%s3459 + $0xe0] sm:$0xff]
    %v3489 = vld [vmem:[%s3459 + $0xe8] sm:$0xff]
    %v3490 = vld [vmem:[%s3459 + $0xf0] sm:$0xff]
    %v3491 = vld [vmem:[%s3459 + $0xf8] sm:$0xff]
    %v3492 = vld [vmem:[%s3459 + $0x100] sm:$0xff]
    %v3493 = vld [vmem:[%s3459 + $0x108] sm:$0xff]
    %v3494 = vld [vmem:[%s3459 + $0x110] sm:$0xff]
    %v3495 = vld [vmem:[%s3459 + $0x118] sm:$0xff]
    %v3496 = vld [vmem:[%s3459 + $0x120] sm:$0xff]
    %v3497 = vld [vmem:[%s3459 + $0x128] sm:$0xff]
    %v3498 = vld [vmem:[%s3459 + $0x130] sm:$0xff]
    %v3499 = vld [vmem:[%s3459 + $0x138] sm:$0xff]
    %v3500 = vld [vmem:[%s3459 + $0x140] sm:$0xff]
    %v3501 = vld [vmem:[%s3459 + $0x148] sm:$0xff]
    %v3502 = vld [vmem:[%s3459 + $0x150] sm:$0xff]
    %v3503 = vld [vmem:[%s3459 + $0x158] sm:$0xff]
    %v3504 = vld [vmem:[%s3459 + $0x160] sm:$0xff]
    %v3505 = vld [vmem:[%s3459 + $0x168] sm:$0xff]
    %v3506 = vld [vmem:[%s3459 + $0x170] sm:$0xff]
    %v3507 = vld [vmem:[%s3459 + $0x178] sm:$0xff]
    %s3508 = scalar_lea.vmem [#allocation8], 5
    %v3509 = vld [vmem:[%s3508] sm:$0x1]
    %v3511 = vlaneseq
    %v3512 = vshrl.u32 %v3511, 7
    %v3513 = vsub.s32 0, %v3512
    %v3514 = vrot.slane %v3509, %v3513
    %3516 = vmatprep.subr.mxu0 0.0
    %3517 = vmatpush1.msra.mxu0 %v3475
    %3518 = vmatprep.subr.mxu0 0.0
    %3519 = vmatpush1.msra.mxu0 %v3474
    %3520 = vmatprep.subr.mxu0 0.0
    %3521 = vmatpush1.msra.mxu0 %v3473
    %3522 = vmatprep.subr.mxu0 0.0
    %3523 = vmatpush1.msra.mxu0 %v3472
    %3524 = vmatprep.subr.mxu0 0.0
    %3525 = vmatpush1.msra.mxu0 %v3471
    %3526 = vmatprep.subr.mxu0 0.0
    %3527 = vmatpush1.msra.mxu0 %v3470
    %3528 = vmatprep.subr.mxu0 0.0
    %3529 = vmatpush1.msra.mxu0 %v3469
    %3530 = vmatprep.subr.mxu0 0.0
    %3531 = vmatpush1.msra.mxu0 %v3468
    %3532 = vmatprep.subr.mxu0 0.0
    %3533 = vmatpush1.msra.mxu0 %v3467
    %3534 = vmatprep.subr.mxu0 0.0
    %3535 = vmatpush1.msra.mxu0 %v3466
    %3536 = vmatprep.subr.mxu0 0.0
    %3537 = vmatpush1.msra.mxu0 %v3465
    %3538 = vmatprep.subr.mxu0 0.0
    %3539 = vmatpush1.msra.mxu0 %v3464
    %3540 = vmatprep.subr.mxu0 0.0
    %3541 = vmatpush1.msra.mxu0 %v3463
    %3542 = vmatprep.subr.mxu0 0.0
    %3543 = vmatpush1.msra.mxu0 %v3462
    %3544 = vmatprep.subr.mxu0 0.0
    %3545 = vmatpush1.msra.mxu0 %v3461
    %3546 = vmatprep.subr.mxu0 0.0
    %3547 = vmatpush1.msra.mxu0 %v3460
    %3548 = vmatprep.subr.mxu0 0.0
    %3549 = vmatpush2.msra.mxu0 %v3491
    %3550 = vmatprep.subr.mxu0 0.0
    %3551 = vmatpush2.msra.mxu0 %v3490
    %3552 = vmatprep.subr.mxu0 0.0
    %3553 = vmatpush2.msra.mxu0 %v3489
    %3554 = vmatprep.subr.mxu0 0.0
    %3555 = vmatpush2.msra.mxu0 %v3488
    %3556 = vmatprep.subr.mxu0 0.0
    %3557 = vmatpush2.msra.mxu0 %v3487
    %3558 = vmatprep.subr.mxu0 0.0
    %3559 = vmatpush2.msra.mxu0 %v3486
    %3560 = vmatprep.subr.mxu0 0.0
    %3561 = vmatpush2.msra.mxu0 %v3485
    %3562 = vmatprep.subr.mxu0 0.0
    %3563 = vmatpush2.msra.mxu0 %v3484
    %3564 = vmatprep.subr.mxu0 0.0
    %3565 = vmatpush2.msra.mxu0 %v3483
    %3566 = vmatprep.subr.mxu0 0.0
    %3567 = vmatpush2.msra.mxu0 %v3482
    %3568 = vmatprep.subr.mxu0 0.0
    %3569 = vmatpush2.msra.mxu0 %v3481
    %3570 = vmatprep.subr.mxu0 0.0
    %3571 = vmatpush2.msra.mxu0 %v3480
    %3572 = vmatprep.subr.mxu0 0.0
    %3573 = vmatpush2.msra.mxu0 %v3479
    %3574 = vmatprep.subr.mxu0 0.0
    %3575 = vmatpush2.msra.mxu0 %v3478
    %3576 = vmatprep.subr.mxu0 0.0
    %3577 = vmatpush2.msra.mxu0 %v3477
    %3578 = vmatprep.subr.mxu0 0.0
    %3579 = vmatpush2.msra.mxu0 %v3476
    %3580 = vmatprep.mubr.f32.mxu0 %v3412
    %3581 = vmatmul.mubr.f32.gmra.mxu0 %v3411
    %v3582 = vpop.f32.mrf.mxu0
    %v3583 = vadd.f32 %v3514, %v3582
    %v3584 = vpop.f32.mrf.mxu0
    %3585 = vmatprep.mubr.f32.mxu0 %v3415
    %3586 = vmatmul.mubr.f32.gmra.mxu0 %v3414
    %v3587 = vpop.f32.mrf.mxu0
    %v3588 = vadd.f32 %v3514, %v3587
    %v3589 = vpop.f32.mrf.mxu0
    %3590 = vmatprep.mubr.f32.mxu0 %v3418
    %3591 = vmatmul.mubr.f32.gmra.mxu0 %v3417
    %v3592 = vpop.f32.mrf.mxu0
    %v3593 = vadd.f32 %v3514, %v3592
    %v3594 = vpop.f32.mrf.mxu0
    %3595 = vmatprep.mubr.f32.mxu0 %v3421
    %3596 = vmatmul.mubr.f32.gmra.mxu0 %v3420
    %v3597 = vpop.f32.mrf.mxu0
    %v3598 = vadd.f32 %v3514, %v3597
    %v3599 = vpop.f32.mrf.mxu0
    %3600 = vmatprep.mubr.f32.mxu0 %v3424
    %3601 = vmatmul.mubr.f32.gmra.mxu0 %v3423
    %v3602 = vpop.f32.mrf.mxu0
    %v3603 = vadd.f32 %v3514, %v3602
    %v3604 = vpop.f32.mrf.mxu0
    %3605 = vmatprep.mubr.f32.mxu0 %v3427
    %3606 = vmatmul.mubr.f32.gmra.mxu0 %v3426
    %v3607 = vpop.f32.mrf.mxu0
    %v3608 = vadd.f32 %v3514, %v3607
    %v3609 = vpop.f32.mrf.mxu0
    %3610 = vmatprep.mubr.f32.mxu0 %v3430
    %3611 = vmatmul.mubr.f32.gmra.mxu0 %v3429
    %v3612 = vpop.f32.mrf.mxu0
    %v3613 = vadd.f32 %v3514, %v3612
    %v3614 = vpop.f32.mrf.mxu0
    %3615 = vmatprep.mubr.f32.mxu0 %v3433
    %3616 = vmatmul.mubr.f32.gmra.mxu0 %v3432
    %v3617 = vpop.f32.mrf.mxu0
    %v3618 = vadd.f32 %v3514, %v3617
    %v3619 = vpop.f32.mrf.mxu0
    %3620 = vmatprep.mubr.f32.mxu0 %v3436
    %3621 = vmatmul.mubr.f32.gmra.mxu0 %v3435
    %v3622 = vpop.f32.mrf.mxu0
    %v3623 = vadd.f32 %v3514, %v3622
    %v3624 = vpop.f32.mrf.mxu0
    %3625 = vmatprep.mubr.f32.mxu0 %v3439
    %3626 = vmatmul.mubr.f32.gmra.mxu0 %v3438
    %v3627 = vpop.f32.mrf.mxu0
    %v3628 = vadd.f32 %v3514, %v3627
    %v3629 = vpop.f32.mrf.mxu0
    %3630 = vmatprep.mubr.f32.mxu0 %v3442
    %3631 = vmatmul.mubr.f32.gmra.mxu0 %v3441
    %v3632 = vpop.f32.mrf.mxu0
    %v3633 = vadd.f32 %v3514, %v3632
    %v3634 = vpop.f32.mrf.mxu0
    %3635 = vmatprep.mubr.f32.mxu0 %v3445
    %3636 = vmatmul.mubr.f32.gmra.mxu0 %v3444
    %v3637 = vpop.f32.mrf.mxu0
    %v3638 = vadd.f32 %v3514, %v3637
    %v3639 = vpop.f32.mrf.mxu0
    %3640 = vmatprep.mubr.f32.mxu0 %v3448
    %3641 = vmatmul.mubr.f32.gmra.mxu0 %v3447
    %v3642 = vpop.f32.mrf.mxu0
    %v3643 = vadd.f32 %v3514, %v3642
    %v3644 = vpop.f32.mrf.mxu0
    %3645 = vmatprep.mubr.f32.mxu0 %v3451
    %3646 = vmatmul.mubr.f32.gmra.mxu0 %v3450
    %v3647 = vpop.f32.mrf.mxu0
    %v3648 = vadd.f32 %v3514, %v3647
    %v3649 = vpop.f32.mrf.mxu0
    %3650 = vmatprep.mubr.f32.mxu0 %v3454
    %3651 = vmatmul.mubr.f32.gmra.mxu0 %v3453
    %v3652 = vpop.f32.mrf.mxu0
    %v3653 = vadd.f32 %v3514, %v3652
    %v3654 = vpop.f32.mrf.mxu0
    %3655 = vmatprep.mubr.f32.mxu0 %v3457
    %3656 = vmatmul.mubr.f32.gmra.mxu0 %v3456
    %v3657 = vpop.f32.mrf.mxu0
    %v3658 = vadd.f32 %v3514, %v3657
    %v3659 = vpop.f32.mrf.mxu0
    %3660 = vdwg.mxu0
    %3661 = vmatprep.subr.mxu0 0.0
    %3662 = vmatpush1.msra.mxu0 %v3507
    %3663 = vmatprep.subr.mxu0 0.0
    %3664 = vmatpush1.msra.mxu0 %v3506
    %3665 = vmatprep.subr.mxu0 0.0
    %3666 = vmatpush1.msra.mxu0 %v3505
    %3667 = vmatprep.subr.mxu0 0.0
    %3668 = vmatpush1.msra.mxu0 %v3504
    %3669 = vmatprep.subr.mxu0 0.0
    %3670 = vmatpush1.msra.mxu0 %v3503
    %3671 = vmatprep.subr.mxu0 0.0
    %3672 = vmatpush1.msra.mxu0 %v3502
    %3673 = vmatprep.subr.mxu0 0.0
    %3674 = vmatpush1.msra.mxu0 %v3501
    %3675 = vmatprep.subr.mxu0 0.0
    %3676 = vmatpush1.msra.mxu0 %v3500
    %3677 = vmatprep.subr.mxu0 0.0
    %3678 = vmatpush1.msra.mxu0 %v3499
    %3679 = vmatprep.subr.mxu0 0.0
    %3680 = vmatpush1.msra.mxu0 %v3498
    %3681 = vmatprep.subr.mxu0 0.0
    %3682 = vmatpush1.msra.mxu0 %v3497
    %3683 = vmatprep.subr.mxu0 0.0
    %3684 = vmatpush1.msra.mxu0 %v3496
    %3685 = vmatprep.subr.mxu0 0.0
    %3686 = vmatpush1.msra.mxu0 %v3495
    %3687 = vmatprep.subr.mxu0 0.0
    %3688 = vmatpush1.msra.mxu0 %v3494
    %3689 = vmatprep.subr.mxu0 0.0
    %3690 = vmatpush1.msra.mxu0 %v3493
    %3691 = vmatprep.subr.mxu0 0.0
    %3692 = vmatpush1.msra.mxu0 %v3492
    %3693 = vmatprep.subr.mxu0 0.0
    %3694 = vmatpush2.msra.mxu0 0.0
    %3695 = vmatprep.subr.mxu0 0.0
    %3696 = vmatpush2.msra.mxu0 0.0
    %3697 = vmatprep.subr.mxu0 0.0
    %3698 = vmatpush2.msra.mxu0 0.0
    %3699 = vmatprep.subr.mxu0 0.0
    %3700 = vmatpush2.msra.mxu0 0.0
    %3701 = vmatprep.subr.mxu0 0.0
    %3702 = vmatpush2.msra.mxu0 0.0
    %3703 = vmatprep.subr.mxu0 0.0
    %3704 = vmatpush2.msra.mxu0 0.0
    %3705 = vmatprep.subr.mxu0 0.0
    %3706 = vmatpush2.msra.mxu0 0.0
    %3707 = vmatprep.subr.mxu0 0.0
    %3708 = vmatpush2.msra.mxu0 0.0
    %3709 = vmatprep.subr.mxu0 0.0
    %3710 = vmatpush2.msra.mxu0 0.0
    %3711 = vmatprep.subr.mxu0 0.0
    %3712 = vmatpush2.msra.mxu0 0.0
    %3713 = vmatprep.subr.mxu0 0.0
    %3714 = vmatpush2.msra.mxu0 0.0
    %3715 = vmatprep.subr.mxu0 0.0
    %3716 = vmatpush2.msra.mxu0 0.0
    %3717 = vmatprep.subr.mxu0 0.0
    %3718 = vmatpush2.msra.mxu0 0.0
    %3719 = vmatprep.subr.mxu0 0.0
    %3720 = vmatpush2.msra.mxu0 0.0
    %3721 = vmatprep.subr.mxu0 0.0
    %3722 = vmatpush2.msra.mxu0 0.0
    %3723 = vmatprep.subr.mxu0 0.0
    %3724 = vmatpush2.msra.mxu0 0.0
    %3725 = vmatprep.mubr.f32.mxu0 0.0
    %3726 = vmatmul.mubr.f32.gmra.mxu0 %v3413
    %v3727 = vpop.f32.mrf.mxu0
    %v3728 = vadd.f32 %v3583, %v3727
    %v3729 = vpop.f32.mrf.mxu0
    %3730 = vmatprep.mubr.f32.mxu0 0.0
    %3731 = vmatmul.mubr.f32.gmra.mxu0 %v3416
    %v3732 = vpop.f32.mrf.mxu0
    %v3733 = vadd.f32 %v3588, %v3732
    %v3734 = vpop.f32.mrf.mxu0
    %3735 = vmatprep.mubr.f32.mxu0 0.0
    %3736 = vmatmul.mubr.f32.gmra.mxu0 %v3419
    %v3737 = vpop.f32.mrf.mxu0
    %v3738 = vadd.f32 %v3593, %v3737
    %v3739 = vpop.f32.mrf.mxu0
    %3740 = vmatprep.mubr.f32.mxu0 0.0
    %3741 = vmatmul.mubr.f32.gmra.mxu0 %v3422
    %v3742 = vpop.f32.mrf.mxu0
    %v3743 = vadd.f32 %v3598, %v3742
    %v3744 = vpop.f32.mrf.mxu0
    %3745 = vmatprep.mubr.f32.mxu0 0.0
    %3746 = vmatmul.mubr.f32.gmra.mxu0 %v3425
    %v3747 = vpop.f32.mrf.mxu0
    %v3748 = vadd.f32 %v3603, %v3747
    %v3749 = vpop.f32.mrf.mxu0
    %3750 = vmatprep.mubr.f32.mxu0 0.0
    %3751 = vmatmul.mubr.f32.gmra.mxu0 %v3428
    %v3752 = vpop.f32.mrf.mxu0
    %v3753 = vadd.f32 %v3608, %v3752
    %v3754 = vpop.f32.mrf.mxu0
    %3755 = vmatprep.mubr.f32.mxu0 0.0
    %3756 = vmatmul.mubr.f32.gmra.mxu0 %v3431
    %v3757 = vpop.f32.mrf.mxu0
    %v3758 = vadd.f32 %v3613, %v3757
    %v3759 = vpop.f32.mrf.mxu0
    %3760 = vmatprep.mubr.f32.mxu0 0.0
    %3761 = vmatmul.mubr.f32.gmra.mxu0 %v3434
    %v3762 = vpop.f32.mrf.mxu0
    %v3763 = vadd.f32 %v3618, %v3762
    %v3764 = vpop.f32.mrf.mxu0
    %3765 = vmatprep.mubr.f32.mxu0 0.0
    %3766 = vmatmul.mubr.f32.gmra.mxu0 %v3437
    %v3767 = vpop.f32.mrf.mxu0
    %v3768 = vadd.f32 %v3623, %v3767
    %v3769 = vpop.f32.mrf.mxu0
    %3770 = vmatprep.mubr.f32.mxu0 0.0
    %3771 = vmatmul.mubr.f32.gmra.mxu0 %v3440
    %v3772 = vpop.f32.mrf.mxu0
    %v3773 = vadd.f32 %v3628, %v3772
    %v3774 = vpop.f32.mrf.mxu0
    %3775 = vmatprep.mubr.f32.mxu0 0.0
    %3776 = vmatmul.mubr.f32.gmra.mxu0 %v3443
    %v3777 = vpop.f32.mrf.mxu0
    %v3778 = vadd.f32 %v3633, %v3777
    %v3779 = vpop.f32.mrf.mxu0
    %3780 = vmatprep.mubr.f32.mxu0 0.0
    %3781 = vmatmul.mubr.f32.gmra.mxu0 %v3446
    %v3782 = vpop.f32.mrf.mxu0
    %v3783 = vadd.f32 %v3638, %v3782
    %v3784 = vpop.f32.mrf.mxu0
    %3785 = vmatprep.mubr.f32.mxu0 0.0
    %3786 = vmatmul.mubr.f32.gmra.mxu0 %v3449
    %v3787 = vpop.f32.mrf.mxu0
    %v3788 = vadd.f32 %v3643, %v3787
    %v3789 = vpop.f32.mrf.mxu0
    %3790 = vmatprep.mubr.f32.mxu0 0.0
    %3791 = vmatmul.mubr.f32.gmra.mxu0 %v3452
    %v3792 = vpop.f32.mrf.mxu0
    %v3793 = vadd.f32 %v3648, %v3792
    %v3794 = vpop.f32.mrf.mxu0
    %3795 = vmatprep.mubr.f32.mxu0 0.0
    %3796 = vmatmul.mubr.f32.gmra.mxu0 %v3455
    %v3797 = vpop.f32.mrf.mxu0
    %v3798 = vadd.f32 %v3653, %v3797
    %v3799 = vpop.f32.mrf.mxu0
    %3800 = vmatprep.mubr.f32.mxu0 0.0
    %3801 = vmatmul.mubr.f32.gmra.mxu0 %v3458
    %v3802 = vpop.f32.mrf.mxu0
    %v3803 = vadd.f32 %v3658, %v3802
    %v3804 = vpop.f32.mrf.mxu0
    %3805 = vdwg.mxu0
    %v3806 = vadd.f32 %v3728, %v2728
    %v3807 = vadd.f32 %v3733, %v2729
    %v3808 = vadd.f32 %v3738, %v2730
    %v3809 = vadd.f32 %v3743, %v2731
    %v3810 = vadd.f32 %v3748, %v2732
    %v3811 = vadd.f32 %v3753, %v2733
    %v3812 = vadd.f32 %v3758, %v2734
    %v3813 = vadd.f32 %v3763, %v2735
    %v3814 = vadd.f32 %v3768, %v2736
    %v3815 = vadd.f32 %v3773, %v2737
    %v3816 = vadd.f32 %v3778, %v2738
    %v3817 = vadd.f32 %v3783, %v2739
    %v3818 = vadd.f32 %v3788, %v2740
    %v3819 = vadd.f32 %v3793, %v2741
    %v3820 = vadd.f32 %v3798, %v2742
    %v3821 = vadd.f32 %v3803, %v2743
    %v3822 = vmax.f32 %v3806, 0.0
    %v3823 = vmax.f32 %v3807, 0.0
    %v3824 = vmax.f32 %v3808, 0.0
    %v3825 = vmax.f32 %v3809, 0.0
    %v3826 = vmax.f32 %v3810, 0.0
    %v3827 = vmax.f32 %v3811, 0.0
    %v3828 = vmax.f32 %v3812, 0.0
    %v3829 = vmax.f32 %v3813, 0.0
    %v3830 = vmax.f32 %v3814, 0.0
    %v3831 = vmax.f32 %v3815, 0.0
    %v3832 = vmax.f32 %v3816, 0.0
    %v3833 = vmax.f32 %v3817, 0.0
    %v3834 = vmax.f32 %v3818, 0.0
    %v3835 = vmax.f32 %v3819, 0.0
    %v3836 = vmax.f32 %v3820, 0.0
    %v3837 = vmax.f32 %v3821, 0.0
    %vm3838 = vcmp.ge.s32.totalorder %v171, 16
    %vm3839 = vcmp.ge.s32.totalorder %v172, 16
    %vm3840 = vcmp.ge.s32.totalorder %v173, 16
    %vm3841 = vcmp.ge.s32.totalorder %v174, 16
    %vm3842 = vcmp.ge.s32.totalorder %v175, 16
    %vm3843 = vcmp.ge.s32.totalorder %v176, 16
    %vm3844 = vcmp.ge.s32.totalorder %v177, 16
    %vm3845 = vcmp.ge.s32.totalorder %v178, 16
    %v3846 = vsel %vm3838, 1, 0
    %v3847 = vsel %vm3839, 1, 0
    %v3848 = vsel %vm3840, 1, 0
    %v3849 = vsel %vm3841, 1, 0
    %v3850 = vsel %vm3842, 1, 0
    %v3851 = vsel %vm3843, 1, 0
    %v3852 = vsel %vm3844, 1, 0
    %v3853 = vsel %vm3845, 1, 0
    %3854 = vset.pattern.permute.xlu0 0
    %3855 = vperm.xlu0 %3854, %v3846
    %v3856 = vpop.permute.xlu0 %3855
    %3857 = vset.pattern.permute.xlu0 0
    %3858 = vperm.xlu0 %3857, %v3847
    %v3859 = vpop.permute.xlu0 %3858
    %3860 = vset.pattern.permute.xlu0 0
    %3861 = vperm.xlu0 %3860, %v3848
    %v3862 = vpop.permute.xlu0 %3861
    %3863 = vset.pattern.permute.xlu0 0
    %3864 = vperm.xlu0 %3863, %v3849
    %v3865 = vpop.permute.xlu0 %3864
    %3866 = vset.pattern.permute.xlu0 0
    %3867 = vperm.xlu0 %3866, %v3850
    %v3868 = vpop.permute.xlu0 %3867
    %3869 = vset.pattern.permute.xlu0 0
    %3870 = vperm.xlu0 %3869, %v3851
    %v3871 = vpop.permute.xlu0 %3870
    %3872 = vset.pattern.permute.xlu0 0
    %3873 = vperm.xlu0 %3872, %v3852
    %v3874 = vpop.permute.xlu0 %3873
    %3875 = vset.pattern.permute.xlu0 0
    %3876 = vperm.xlu0 %3875, %v3853
    %v3877 = vpop.permute.xlu0 %3876
    %vm3878 = vcmp.eq.s32.totalorder %v3856, 1
    %vm3879 = vcmp.eq.s32.totalorder %v3859, 1
    %vm3880 = vcmp.eq.s32.totalorder %v3862, 1
    %vm3881 = vcmp.eq.s32.totalorder %v3865, 1
    %vm3882 = vcmp.eq.s32.totalorder %v3868, 1
    %vm3883 = vcmp.eq.s32.totalorder %v3871, 1
    %vm3884 = vcmp.eq.s32.totalorder %v3874, 1
    %vm3885 = vcmp.eq.s32.totalorder %v3877, 1
    %v3886 = vsel %vm3878, %v3836, 0.0
    %v3887 = vsel %vm3879, %v3837, 0.0
    %v3888 = vsel %vm3880, %v3822, 0.0
    %v3889 = vsel %vm3881, %v3823, 0.0
    %v3890 = vsel %vm3882, %v3824, 0.0
    %v3891 = vsel %vm3883, %v3825, 0.0
    %v3892 = vsel %vm3884, %v3826, 0.0
    %v3893 = vsel %vm3885, %v3827, 0.0
    %v3894 = vsel %vm3878, %v3828, 0.0
    %v3895 = vsel %vm3879, %v3829, 0.0
    %v3896 = vsel %vm3880, %v3830, 0.0
    %v3897 = vsel %vm3881, %v3831, 0.0
    %v3898 = vsel %vm3882, %v3832, 0.0
    %v3899 = vsel %vm3883, %v3833, 0.0
    %v3900 = vsel %vm3884, %v3834, 0.0
    %v3901 = vsel %vm3885, %v3835, 0.0
    %vm3902 = vcmp.lt.s32.totalorder %v171, 48
    %vm3903 = vcmp.lt.s32.totalorder %v172, 48
    %vm3904 = vcmp.lt.s32.totalorder %v173, 48
    %vm3905 = vcmp.lt.s32.totalorder %v174, 48
    %vm3906 = vcmp.lt.s32.totalorder %v175, 48
    %vm3907 = vcmp.lt.s32.totalorder %v176, 48
    %vm3908 = vcmp.lt.s32.totalorder %v177, 48
    %vm3909 = vcmp.lt.s32.totalorder %v178, 48
    %v3910 = vsel %vm3902, 1, 0
    %v3911 = vsel %vm3903, 1, 0
    %v3912 = vsel %vm3904, 1, 0
    %v3913 = vsel %vm3905, 1, 0
    %v3914 = vsel %vm3906, 1, 0
    %v3915 = vsel %vm3907, 1, 0
    %v3916 = vsel %vm3908, 1, 0
    %v3917 = vsel %vm3909, 1, 0
    %3918 = vset.pattern.permute.xlu0 0
    %3919 = vperm.xlu0 %3918, %v3910
    %v3920 = vpop.permute.xlu0 %3919
    %3921 = vset.pattern.permute.xlu0 0
    %3922 = vperm.xlu0 %3921, %v3911
    %v3923 = vpop.permute.xlu0 %3922
    %3924 = vset.pattern.permute.xlu0 0
    %3925 = vperm.xlu0 %3924, %v3912
    %v3926 = vpop.permute.xlu0 %3925
    %3927 = vset.pattern.permute.xlu0 0
    %3928 = vperm.xlu0 %3927, %v3913
    %v3929 = vpop.permute.xlu0 %3928
    %3930 = vset.pattern.permute.xlu0 0
    %3931 = vperm.xlu0 %3930, %v3914
    %v3932 = vpop.permute.xlu0 %3931
    %3933 = vset.pattern.permute.xlu0 0
    %3934 = vperm.xlu0 %3933, %v3915
    %v3935 = vpop.permute.xlu0 %3934
    %3936 = vset.pattern.permute.xlu0 0
    %3937 = vperm.xlu0 %3936, %v3916
    %v3938 = vpop.permute.xlu0 %3937
    %3939 = vset.pattern.permute.xlu0 0
    %3940 = vperm.xlu0 %3939, %v3917
    %v3941 = vpop.permute.xlu0 %3940
    %vm3942 = vcmp.eq.s32.totalorder %v3920, 1
    %vm3943 = vcmp.eq.s32.totalorder %v3923, 1
    %vm3944 = vcmp.eq.s32.totalorder %v3926, 1
    %vm3945 = vcmp.eq.s32.totalorder %v3929, 1
    %vm3946 = vcmp.eq.s32.totalorder %v3932, 1
    %vm3947 = vcmp.eq.s32.totalorder %v3935, 1
    %vm3948 = vcmp.eq.s32.totalorder %v3938, 1
    %vm3949 = vcmp.eq.s32.totalorder %v3941, 1
    %v3950 = vsel %vm3942, %v3824, 0.0
    %v3951 = vsel %vm3943, %v3825, 0.0
    %v3952 = vsel %vm3944, %v3826, 0.0
    %v3953 = vsel %vm3945, %v3827, 0.0
    %v3954 = vsel %vm3946, %v3828, 0.0
    %v3955 = vsel %vm3947, %v3829, 0.0
    %v3956 = vsel %vm3948, %v3830, 0.0
    %v3957 = vsel %vm3949, %v3831, 0.0
    %v3958 = vsel %vm3942, %v3832, 0.0
    %v3959 = vsel %vm3943, %v3833, 0.0
    %v3960 = vsel %vm3944, %v3834, 0.0
    %v3961 = vsel %vm3945, %v3835, 0.0
    %v3962 = vsel %vm3946, %v3836, 0.0
    %v3963 = vsel %vm3947, %v3837, 0.0
    %v3964 = vsel %vm3948, %v3822, 0.0
    %v3965 = vsel %vm3949, %v3823, 0.0
    %3966 = vst [vmem:[#allocation2] sm:$0xff] %v3886
    %3967 = vst [vmem:[#allocation2 + $0x18] sm:$0xff] %v3887
    %3968 = vst [vmem:[#allocation2 + $0x30] sm:$0xff] %v3888
    %3969 = vst [vmem:[#allocation2 + $0x48] sm:$0xff] %v3889
    %3970 = vst [vmem:[#allocation2 + $0x60] sm:$0xff] %v3890
    %3971 = vst [vmem:[#allocation2 + $0x78] sm:$0xff] %v3891
    %3972 = vst [vmem:[#allocation2 + $0x90] sm:$0xff] %v3892
    %3973 = vst [vmem:[#allocation2 + $0xa8] sm:$0xff] %v3893
    %3974 = vst [vmem:[#allocation2 + $0xc0] sm:$0xff] %v3894
    %3975 = vst [vmem:[#allocation2 + $0xd8] sm:$0xff] %v3895
    %3976 = vst [vmem:[#allocation2 + $0xf0] sm:$0xff] %v3896
    %3977 = vst [vmem:[#allocation2 + $0x108] sm:$0xff] %v3897
    %3978 = vst [vmem:[#allocation2 + $0x120] sm:$0xff] %v3898
    %3979 = vst [vmem:[#allocation2 + $0x138] sm:$0xff] %v3899
    %3980 = vst [vmem:[#allocation2 + $0x150] sm:$0xff] %v3900
    %3981 = vst [vmem:[#allocation2 + $0x168] sm:$0xff] %v3901
    %3982 = vst [vmem:[#allocation2 + $0x8] sm:$0xff] %v3822
    %3983 = vst [vmem:[#allocation2 + $0x20] sm:$0xff] %v3823
    %3984 = vst [vmem:[#allocation2 + $0x38] sm:$0xff] %v3824
    %3985 = vst [vmem:[#allocation2 + $0x50] sm:$0xff] %v3825
    %3986 = vst [vmem:[#allocation2 + $0x68] sm:$0xff] %v3826
    %3987 = vst [vmem:[#allocation2 + $0x80] sm:$0xff] %v3827
    %3988 = vst [vmem:[#allocation2 + $0x98] sm:$0xff] %v3828
    %3989 = vst [vmem:[#allocation2 + $0xb0] sm:$0xff] %v3829
    %3990 = vst [vmem:[#allocation2 + $0xc8] sm:$0xff] %v3830
    %3991 = vst [vmem:[#allocation2 + $0xe0] sm:$0xff] %v3831
    %3992 = vst [vmem:[#allocation2 + $0xf8] sm:$0xff] %v3832
    %3993 = vst [vmem:[#allocation2 + $0x110] sm:$0xff] %v3833
    %3994 = vst [vmem:[#allocation2 + $0x128] sm:$0xff] %v3834
    %3995 = vst [vmem:[#allocation2 + $0x140] sm:$0xff] %v3835
    %3996 = vst [vmem:[#allocation2 + $0x158] sm:$0xff] %v3836
    %3997 = vst [vmem:[#allocation2 + $0x170] sm:$0xff] %v3837
    %3998 = vst [vmem:[#allocation2 + $0x10] sm:$0xff] %v3950
    %3999 = vst [vmem:[#allocation2 + $0x28] sm:$0xff] %v3951
    %4000 = vst [vmem:[#allocation2 + $0x40] sm:$0xff] %v3952
    %4001 = vst [vmem:[#allocation2 + $0x58] sm:$0xff] %v3953
    %4002 = vst [vmem:[#allocation2 + $0x70] sm:$0xff] %v3954
    %4003 = vst [vmem:[#allocation2 + $0x88] sm:$0xff] %v3955
    %4004 = vst [vmem:[#allocation2 + $0xa0] sm:$0xff] %v3956
    %4005 = vst [vmem:[#allocation2 + $0xb8] sm:$0xff] %v3957
    %4006 = vst [vmem:[#allocation2 + $0xd0] sm:$0xff] %v3958
    %4007 = vst [vmem:[#allocation2 + $0xe8] sm:$0xff] %v3959
    %4008 = vst [vmem:[#allocation2 + $0x100] sm:$0xff] %v3960
    %4009 = vst [vmem:[#allocation2 + $0x118] sm:$0xff] %v3961
    %4010 = vst [vmem:[#allocation2 + $0x130] sm:$0xff] %v3962
    %4011 = vst [vmem:[#allocation2 + $0x148] sm:$0xff] %v3963
    %4012 = vst [vmem:[#allocation2 + $0x160] sm:$0xff] %v3964
    %4013 = vst [vmem:[#allocation2 + $0x178] sm:$0xff] %v3965
    %v4014 = vld [vmem:[#allocation2] sm:$0xff]
    %v4015 = vld [vmem:[#allocation2 + $0x8] sm:$0xff]
    %v4016 = vld [vmem:[#allocation2 + $0x10] sm:$0xff]
    %v4017 = vld [vmem:[#allocation2 + $0x18] sm:$0xff]
    %v4018 = vld [vmem:[#allocation2 + $0x20] sm:$0xff]
    %v4019 = vld [vmem:[#allocation2 + $0x28] sm:$0xff]
    %v4020 = vld [vmem:[#allocation2 + $0x30] sm:$0xff]
    %v4021 = vld [vmem:[#allocation2 + $0x38] sm:$0xff]
    %v4022 = vld [vmem:[#allocation2 + $0x40] sm:$0xff]
    %v4023 = vld [vmem:[#allocation2 + $0x48] sm:$0xff]
    %v4024 = vld [vmem:[#allocation2 + $0x50] sm:$0xff]
    %v4025 = vld [vmem:[#allocation2 + $0x58] sm:$0xff]
    %v4026 = vld [vmem:[#allocation2 + $0x60] sm:$0xff]
    %v4027 = vld [vmem:[#allocation2 + $0x68] sm:$0xff]
    %v4028 = vld [vmem:[#allocation2 + $0x70] sm:$0xff]
    %v4029 = vld [vmem:[#allocation2 + $0x78] sm:$0xff]
    %v4030 = vld [vmem:[#allocation2 + $0x80] sm:$0xff]
    %v4031 = vld [vmem:[#allocation2 + $0x88] sm:$0xff]
    %v4032 = vld [vmem:[#allocation2 + $0x90] sm:$0xff]
    %v4033 = vld [vmem:[#allocation2 + $0x98] sm:$0xff]
    %v4034 = vld [vmem:[#allocation2 + $0xa0] sm:$0xff]
    %v4035 = vld [vmem:[#allocation2 + $0xa8] sm:$0xff]
    %v4036 = vld [vmem:[#allocation2 + $0xb0] sm:$0xff]
    %v4037 = vld [vmem:[#allocation2 + $0xb8] sm:$0xff]
    %v4038 = vld [vmem:[#allocation2 + $0xc0] sm:$0xff]
    %v4039 = vld [vmem:[#allocation2 + $0xc8] sm:$0xff]
    %v4040 = vld [vmem:[#allocation2 + $0xd0] sm:$0xff]
    %v4041 = vld [vmem:[#allocation2 + $0xd8] sm:$0xff]
    %v4042 = vld [vmem:[#allocation2 + $0xe0] sm:$0xff]
    %v4043 = vld [vmem:[#allocation2 + $0xe8] sm:$0xff]
    %v4044 = vld [vmem:[#allocation2 + $0xf0] sm:$0xff]
    %v4045 = vld [vmem:[#allocation2 + $0xf8] sm:$0xff]
    %v4046 = vld [vmem:[#allocation2 + $0x100] sm:$0xff]
    %v4047 = vld [vmem:[#allocation2 + $0x108] sm:$0xff]
    %v4048 = vld [vmem:[#allocation2 + $0x110] sm:$0xff]
    %v4049 = vld [vmem:[#allocation2 + $0x118] sm:$0xff]
    %v4050 = vld [vmem:[#allocation2 + $0x120] sm:$0xff]
    %v4051 = vld [vmem:[#allocation2 + $0x128] sm:$0xff]
    %v4052 = vld [vmem:[#allocation2 + $0x130] sm:$0xff]
    %v4053 = vld [vmem:[#allocation2 + $0x138] sm:$0xff]
    %v4054 = vld [vmem:[#allocation2 + $0x140] sm:$0xff]
    %v4055 = vld [vmem:[#allocation2 + $0x148] sm:$0xff]
    %v4056 = vld [vmem:[#allocation2 + $0x150] sm:$0xff]
    %v4057 = vld [vmem:[#allocation2 + $0x158] sm:$0xff]
    %v4058 = vld [vmem:[#allocation2 + $0x160] sm:$0xff]
    %v4059 = vld [vmem:[#allocation2 + $0x168] sm:$0xff]
    %v4060 = vld [vmem:[#allocation2 + $0x170] sm:$0xff]
    %v4061 = vld [vmem:[#allocation2 + $0x178] sm:$0xff]
    %s4062 = scalar_lea.vmem [#allocation7], 2304
    %v4063 = vld [vmem:[%s4062] sm:$0xff]
    %v4064 = vld [vmem:[%s4062 + $0x8] sm:$0xff]
    %v4065 = vld [vmem:[%s4062 + $0x10] sm:$0xff]
    %v4066 = vld [vmem:[%s4062 + $0x18] sm:$0xff]
    %v4067 = vld [vmem:[%s4062 + $0x20] sm:$0xff]
    %v4068 = vld [vmem:[%s4062 + $0x28] sm:$0xff]
    %v4069 = vld [vmem:[%s4062 + $0x30] sm:$0xff]
    %v4070 = vld [vmem:[%s4062 + $0x38] sm:$0xff]
    %v4071 = vld [vmem:[%s4062 + $0x40] sm:$0xff]
    %v4072 = vld [vmem:[%s4062 + $0x48] sm:$0xff]
    %v4073 = vld [vmem:[%s4062 + $0x50] sm:$0xff]
    %v4074 = vld [vmem:[%s4062 + $0x58] sm:$0xff]
    %v4075 = vld [vmem:[%s4062 + $0x60] sm:$0xff]
    %v4076 = vld [vmem:[%s4062 + $0x68] sm:$0xff]
    %v4077 = vld [vmem:[%s4062 + $0x70] sm:$0xff]
    %v4078 = vld [vmem:[%s4062 + $0x78] sm:$0xff]
    %v4079 = vld [vmem:[%s4062 + $0x80] sm:$0xff]
    %v4080 = vld [vmem:[%s4062 + $0x88] sm:$0xff]
    %v4081 = vld [vmem:[%s4062 + $0x90] sm:$0xff]
    %v4082 = vld [vmem:[%s4062 + $0x98] sm:$0xff]
    %v4083 = vld [vmem:[%s4062 + $0xa0] sm:$0xff]
    %v4084 = vld [vmem:[%s4062 + $0xa8] sm:$0xff]
    %v4085 = vld [vmem:[%s4062 + $0xb0] sm:$0xff]
    %v4086 = vld [vmem:[%s4062 + $0xb8] sm:$0xff]
    %v4087 = vld [vmem:[%s4062 + $0xc0] sm:$0xff]
    %v4088 = vld [vmem:[%s4062 + $0xc8] sm:$0xff]
    %v4089 = vld [vmem:[%s4062 + $0xd0] sm:$0xff]
    %v4090 = vld [vmem:[%s4062 + $0xd8] sm:$0xff]
    %v4091 = vld [vmem:[%s4062 + $0xe0] sm:$0xff]
    %v4092 = vld [vmem:[%s4062 + $0xe8] sm:$0xff]
    %v4093 = vld [vmem:[%s4062 + $0xf0] sm:$0xff]
    %v4094 = vld [vmem:[%s4062 + $0xf8] sm:$0xff]
    %v4095 = vld [vmem:[%s4062 + $0x100] sm:$0xff]
    %v4096 = vld [vmem:[%s4062 + $0x108] sm:$0xff]
    %v4097 = vld [vmem:[%s4062 + $0x110] sm:$0xff]
    %v4098 = vld [vmem:[%s4062 + $0x118] sm:$0xff]
    %v4099 = vld [vmem:[%s4062 + $0x120] sm:$0xff]
    %v4100 = vld [vmem:[%s4062 + $0x128] sm:$0xff]
    %v4101 = vld [vmem:[%s4062 + $0x130] sm:$0xff]
    %v4102 = vld [vmem:[%s4062 + $0x138] sm:$0xff]
    %v4103 = vld [vmem:[%s4062 + $0x140] sm:$0xff]
    %v4104 = vld [vmem:[%s4062 + $0x148] sm:$0xff]
    %v4105 = vld [vmem:[%s4062 + $0x150] sm:$0xff]
    %v4106 = vld [vmem:[%s4062 + $0x158] sm:$0xff]
    %v4107 = vld [vmem:[%s4062 + $0x160] sm:$0xff]
    %v4108 = vld [vmem:[%s4062 + $0x168] sm:$0xff]
    %v4109 = vld [vmem:[%s4062 + $0x170] sm:$0xff]
    %v4110 = vld [vmem:[%s4062 + $0x178] sm:$0xff]
    %s4111 = scalar_lea.vmem [#allocation8], 6
    %v4112 = vld [vmem:[%s4111] sm:$0x1]
    %v4114 = vlaneseq
    %v4115 = vshrl.u32 %v4114, 7
    %v4116 = vsub.s32 0, %v4115
    %v4117 = vrot.slane %v4112, %v4116
    %4119 = vmatprep.subr.mxu0 0.0
    %4120 = vmatpush1.msra.mxu0 %v4078
    %4121 = vmatprep.subr.mxu0 0.0
    %4122 = vmatpush1.msra.mxu0 %v4077
    %4123 = vmatprep.subr.mxu0 0.0
    %4124 = vmatpush1.msra.mxu0 %v4076
    %4125 = vmatprep.subr.mxu0 0.0
    %4126 = vmatpush1.msra.mxu0 %v4075
    %4127 = vmatprep.subr.mxu0 0.0
    %4128 = vmatpush1.msra.mxu0 %v4074
    %4129 = vmatprep.subr.mxu0 0.0
    %4130 = vmatpush1.msra.mxu0 %v4073
    %4131 = vmatprep.subr.mxu0 0.0
    %4132 = vmatpush1.msra.mxu0 %v4072
    %4133 = vmatprep.subr.mxu0 0.0
    %4134 = vmatpush1.msra.mxu0 %v4071
    %4135 = vmatprep.subr.mxu0 0.0
    %4136 = vmatpush1.msra.mxu0 %v4070
    %4137 = vmatprep.subr.mxu0 0.0
    %4138 = vmatpush1.msra.mxu0 %v4069
    %4139 = vmatprep.subr.mxu0 0.0
    %4140 = vmatpush1.msra.mxu0 %v4068
    %4141 = vmatprep.subr.mxu0 0.0
    %4142 = vmatpush1.msra.mxu0 %v4067
    %4143 = vmatprep.subr.mxu0 0.0
    %4144 = vmatpush1.msra.mxu0 %v4066
    %4145 = vmatprep.subr.mxu0 0.0
    %4146 = vmatpush1.msra.mxu0 %v4065
    %4147 = vmatprep.subr.mxu0 0.0
    %4148 = vmatpush1.msra.mxu0 %v4064
    %4149 = vmatprep.subr.mxu0 0.0
    %4150 = vmatpush1.msra.mxu0 %v4063
    %4151 = vmatprep.subr.mxu0 0.0
    %4152 = vmatpush2.msra.mxu0 %v4094
    %4153 = vmatprep.subr.mxu0 0.0
    %4154 = vmatpush2.msra.mxu0 %v4093
    %4155 = vmatprep.subr.mxu0 0.0
    %4156 = vmatpush2.msra.mxu0 %v4092
    %4157 = vmatprep.subr.mxu0 0.0
    %4158 = vmatpush2.msra.mxu0 %v4091
    %4159 = vmatprep.subr.mxu0 0.0
    %4160 = vmatpush2.msra.mxu0 %v4090
    %4161 = vmatprep.subr.mxu0 0.0
    %4162 = vmatpush2.msra.mxu0 %v4089
    %4163 = vmatprep.subr.mxu0 0.0
    %4164 = vmatpush2.msra.mxu0 %v4088
    %4165 = vmatprep.subr.mxu0 0.0
    %4166 = vmatpush2.msra.mxu0 %v4087
    %4167 = vmatprep.subr.mxu0 0.0
    %4168 = vmatpush2.msra.mxu0 %v4086
    %4169 = vmatprep.subr.mxu0 0.0
    %4170 = vmatpush2.msra.mxu0 %v4085
    %4171 = vmatprep.subr.mxu0 0.0
    %4172 = vmatpush2.msra.mxu0 %v4084
    %4173 = vmatprep.subr.mxu0 0.0
    %4174 = vmatpush2.msra.mxu0 %v4083
    %4175 = vmatprep.subr.mxu0 0.0
    %4176 = vmatpush2.msra.mxu0 %v4082
    %4177 = vmatprep.subr.mxu0 0.0
    %4178 = vmatpush2.msra.mxu0 %v4081
    %4179 = vmatprep.subr.mxu0 0.0
    %4180 = vmatpush2.msra.mxu0 %v4080
    %4181 = vmatprep.subr.mxu0 0.0
    %4182 = vmatpush2.msra.mxu0 %v4079
    %4183 = vmatprep.mubr.f32.mxu0 %v4015
    %4184 = vmatmul.mubr.f32.gmra.mxu0 %v4014
    %v4185 = vpop.f32.mrf.mxu0
    %v4186 = vadd.f32 %v4117, %v4185
    %v4187 = vpop.f32.mrf.mxu0
    %4188 = vmatprep.mubr.f32.mxu0 %v4018
    %4189 = vmatmul.mubr.f32.gmra.mxu0 %v4017
    %v4190 = vpop.f32.mrf.mxu0
    %v4191 = vadd.f32 %v4117, %v4190
    %v4192 = vpop.f32.mrf.mxu0
    %4193 = vmatprep.mubr.f32.mxu0 %v4021
    %4194 = vmatmul.mubr.f32.gmra.mxu0 %v4020
    %v4195 = vpop.f32.mrf.mxu0
    %v4196 = vadd.f32 %v4117, %v4195
    %v4197 = vpop.f32.mrf.mxu0
    %4198 = vmatprep.mubr.f32.mxu0 %v4024
    %4199 = vmatmul.mubr.f32.gmra.mxu0 %v4023
    %v4200 = vpop.f32.mrf.mxu0
    %v4201 = vadd.f32 %v4117, %v4200
    %v4202 = vpop.f32.mrf.mxu0
    %4203 = vmatprep.mubr.f32.mxu0 %v4027
    %4204 = vmatmul.mubr.f32.gmra.mxu0 %v4026
    %v4205 = vpop.f32.mrf.mxu0
    %v4206 = vadd.f32 %v4117, %v4205
    %v4207 = vpop.f32.mrf.mxu0
    %4208 = vmatprep.mubr.f32.mxu0 %v4030
    %4209 = vmatmul.mubr.f32.gmra.mxu0 %v4029
    %v4210 = vpop.f32.mrf.mxu0
    %v4211 = vadd.f32 %v4117, %v4210
    %v4212 = vpop.f32.mrf.mxu0
    %4213 = vmatprep.mubr.f32.mxu0 %v4033
    %4214 = vmatmul.mubr.f32.gmra.mxu0 %v4032
    %v4215 = vpop.f32.mrf.mxu0
    %v4216 = vadd.f32 %v4117, %v4215
    %v4217 = vpop.f32.mrf.mxu0
    %4218 = vmatprep.mubr.f32.mxu0 %v4036
    %4219 = vmatmul.mubr.f32.gmra.mxu0 %v4035
    %v4220 = vpop.f32.mrf.mxu0
    %v4221 = vadd.f32 %v4117, %v4220
    %v4222 = vpop.f32.mrf.mxu0
    %4223 = vmatprep.mubr.f32.mxu0 %v4039
    %4224 = vmatmul.mubr.f32.gmra.mxu0 %v4038
    %v4225 = vpop.f32.mrf.mxu0
    %v4226 = vadd.f32 %v4117, %v4225
    %v4227 = vpop.f32.mrf.mxu0
    %4228 = vmatprep.mubr.f32.mxu0 %v4042
    %4229 = vmatmul.mubr.f32.gmra.mxu0 %v4041
    %v4230 = vpop.f32.mrf.mxu0
    %v4231 = vadd.f32 %v4117, %v4230
    %v4232 = vpop.f32.mrf.mxu0
    %4233 = vmatprep.mubr.f32.mxu0 %v4045
    %4234 = vmatmul.mubr.f32.gmra.mxu0 %v4044
    %v4235 = vpop.f32.mrf.mxu0
    %v4236 = vadd.f32 %v4117, %v4235
    %v4237 = vpop.f32.mrf.mxu0
    %4238 = vmatprep.mubr.f32.mxu0 %v4048
    %4239 = vmatmul.mubr.f32.gmra.mxu0 %v4047
    %v4240 = vpop.f32.mrf.mxu0
    %v4241 = vadd.f32 %v4117, %v4240
    %v4242 = vpop.f32.mrf.mxu0
    %4243 = vmatprep.mubr.f32.mxu0 %v4051
    %4244 = vmatmul.mubr.f32.gmra.mxu0 %v4050
    %v4245 = vpop.f32.mrf.mxu0
    %v4246 = vadd.f32 %v4117, %v4245
    %v4247 = vpop.f32.mrf.mxu0
    %4248 = vmatprep.mubr.f32.mxu0 %v4054
    %4249 = vmatmul.mubr.f32.gmra.mxu0 %v4053
    %v4250 = vpop.f32.mrf.mxu0
    %v4251 = vadd.f32 %v4117, %v4250
    %v4252 = vpop.f32.mrf.mxu0
    %4253 = vmatprep.mubr.f32.mxu0 %v4057
    %4254 = vmatmul.mubr.f32.gmra.mxu0 %v4056
    %v4255 = vpop.f32.mrf.mxu0
    %v4256 = vadd.f32 %v4117, %v4255
    %v4257 = vpop.f32.mrf.mxu0
    %4258 = vmatprep.mubr.f32.mxu0 %v4060
    %4259 = vmatmul.mubr.f32.gmra.mxu0 %v4059
    %v4260 = vpop.f32.mrf.mxu0
    %v4261 = vadd.f32 %v4117, %v4260
    %v4262 = vpop.f32.mrf.mxu0
    %4263 = vdwg.mxu0
    %4264 = vmatprep.subr.mxu0 0.0
    %4265 = vmatpush1.msra.mxu0 %v4110
    %4266 = vmatprep.subr.mxu0 0.0
    %4267 = vmatpush1.msra.mxu0 %v4109
    %4268 = vmatprep.subr.mxu0 0.0
    %4269 = vmatpush1.msra.mxu0 %v4108
    %4270 = vmatprep.subr.mxu0 0.0
    %4271 = vmatpush1.msra.mxu0 %v4107
    %4272 = vmatprep.subr.mxu0 0.0
    %4273 = vmatpush1.msra.mxu0 %v4106
    %4274 = vmatprep.subr.mxu0 0.0
    %4275 = vmatpush1.msra.mxu0 %v4105
    %4276 = vmatprep.subr.mxu0 0.0
    %4277 = vmatpush1.msra.mxu0 %v4104
    %4278 = vmatprep.subr.mxu0 0.0
    %4279 = vmatpush1.msra.mxu0 %v4103
    %4280 = vmatprep.subr.mxu0 0.0
    %4281 = vmatpush1.msra.mxu0 %v4102
    %4282 = vmatprep.subr.mxu0 0.0
    %4283 = vmatpush1.msra.mxu0 %v4101
    %4284 = vmatprep.subr.mxu0 0.0
    %4285 = vmatpush1.msra.mxu0 %v4100
    %4286 = vmatprep.subr.mxu0 0.0
    %4287 = vmatpush1.msra.mxu0 %v4099
    %4288 = vmatprep.subr.mxu0 0.0
    %4289 = vmatpush1.msra.mxu0 %v4098
    %4290 = vmatprep.subr.mxu0 0.0
    %4291 = vmatpush1.msra.mxu0 %v4097
    %4292 = vmatprep.subr.mxu0 0.0
    %4293 = vmatpush1.msra.mxu0 %v4096
    %4294 = vmatprep.subr.mxu0 0.0
    %4295 = vmatpush1.msra.mxu0 %v4095
    %4296 = vmatprep.subr.mxu0 0.0
    %4297 = vmatpush2.msra.mxu0 0.0
    %4298 = vmatprep.subr.mxu0 0.0
    %4299 = vmatpush2.msra.mxu0 0.0
    %4300 = vmatprep.subr.mxu0 0.0
    %4301 = vmatpush2.msra.mxu0 0.0
    %4302 = vmatprep.subr.mxu0 0.0
    %4303 = vmatpush2.msra.mxu0 0.0
    %4304 = vmatprep.subr.mxu0 0.0
    %4305 = vmatpush2.msra.mxu0 0.0
    %4306 = vmatprep.subr.mxu0 0.0
    %4307 = vmatpush2.msra.mxu0 0.0
    %4308 = vmatprep.subr.mxu0 0.0
    %4309 = vmatpush2.msra.mxu0 0.0
    %4310 = vmatprep.subr.mxu0 0.0
    %4311 = vmatpush2.msra.mxu0 0.0
    %4312 = vmatprep.subr.mxu0 0.0
    %4313 = vmatpush2.msra.mxu0 0.0
    %4314 = vmatprep.subr.mxu0 0.0
    %4315 = vmatpush2.msra.mxu0 0.0
    %4316 = vmatprep.subr.mxu0 0.0
    %4317 = vmatpush2.msra.mxu0 0.0
    %4318 = vmatprep.subr.mxu0 0.0
    %4319 = vmatpush2.msra.mxu0 0.0
    %4320 = vmatprep.subr.mxu0 0.0
    %4321 = vmatpush2.msra.mxu0 0.0
    %4322 = vmatprep.subr.mxu0 0.0
    %4323 = vmatpush2.msra.mxu0 0.0
    %4324 = vmatprep.subr.mxu0 0.0
    %4325 = vmatpush2.msra.mxu0 0.0
    %4326 = vmatprep.subr.mxu0 0.0
    %4327 = vmatpush2.msra.mxu0 0.0
    %4328 = vmatprep.mubr.f32.mxu0 0.0
    %4329 = vmatmul.mubr.f32.gmra.mxu0 %v4016
    %v4330 = vpop.f32.mrf.mxu0
    %v4331 = vadd.f32 %v4186, %v4330
    %v4332 = vpop.f32.mrf.mxu0
    %4333 = vmatprep.mubr.f32.mxu0 0.0
    %4334 = vmatmul.mubr.f32.gmra.mxu0 %v4019
    %v4335 = vpop.f32.mrf.mxu0
    %v4336 = vadd.f32 %v4191, %v4335
    %v4337 = vpop.f32.mrf.mxu0
    %4338 = vmatprep.mubr.f32.mxu0 0.0
    %4339 = vmatmul.mubr.f32.gmra.mxu0 %v4022
    %v4340 = vpop.f32.mrf.mxu0
    %v4341 = vadd.f32 %v4196, %v4340
    %v4342 = vpop.f32.mrf.mxu0
    %4343 = vmatprep.mubr.f32.mxu0 0.0
    %4344 = vmatmul.mubr.f32.gmra.mxu0 %v4025
    %v4345 = vpop.f32.mrf.mxu0
    %v4346 = vadd.f32 %v4201, %v4345
    %v4347 = vpop.f32.mrf.mxu0
    %4348 = vmatprep.mubr.f32.mxu0 0.0
    %4349 = vmatmul.mubr.f32.gmra.mxu0 %v4028
    %v4350 = vpop.f32.mrf.mxu0
    %v4351 = vadd.f32 %v4206, %v4350
    %v4352 = vpop.f32.mrf.mxu0
    %4353 = vmatprep.mubr.f32.mxu0 0.0
    %4354 = vmatmul.mubr.f32.gmra.mxu0 %v4031
    %v4355 = vpop.f32.mrf.mxu0
    %v4356 = vadd.f32 %v4211, %v4355
    %v4357 = vpop.f32.mrf.mxu0
    %4358 = vmatprep.mubr.f32.mxu0 0.0
    %4359 = vmatmul.mubr.f32.gmra.mxu0 %v4034
    %v4360 = vpop.f32.mrf.mxu0
    %v4361 = vadd.f32 %v4216, %v4360
    %v4362 = vpop.f32.mrf.mxu0
    %4363 = vmatprep.mubr.f32.mxu0 0.0
    %4364 = vmatmul.mubr.f32.gmra.mxu0 %v4037
    %v4365 = vpop.f32.mrf.mxu0
    %v4366 = vadd.f32 %v4221, %v4365
    %v4367 = vpop.f32.mrf.mxu0
    %4368 = vmatprep.mubr.f32.mxu0 0.0
    %4369 = vmatmul.mubr.f32.gmra.mxu0 %v4040
    %v4370 = vpop.f32.mrf.mxu0
    %v4371 = vadd.f32 %v4226, %v4370
    %v4372 = vpop.f32.mrf.mxu0
    %4373 = vmatprep.mubr.f32.mxu0 0.0
    %4374 = vmatmul.mubr.f32.gmra.mxu0 %v4043
    %v4375 = vpop.f32.mrf.mxu0
    %v4376 = vadd.f32 %v4231, %v4375
    %v4377 = vpop.f32.mrf.mxu0
    %4378 = vmatprep.mubr.f32.mxu0 0.0
    %4379 = vmatmul.mubr.f32.gmra.mxu0 %v4046
    %v4380 = vpop.f32.mrf.mxu0
    %v4381 = vadd.f32 %v4236, %v4380
    %v4382 = vpop.f32.mrf.mxu0
    %4383 = vmatprep.mubr.f32.mxu0 0.0
    %4384 = vmatmul.mubr.f32.gmra.mxu0 %v4049
    %v4385 = vpop.f32.mrf.mxu0
    %v4386 = vadd.f32 %v4241, %v4385
    %v4387 = vpop.f32.mrf.mxu0
    %4388 = vmatprep.mubr.f32.mxu0 0.0
    %4389 = vmatmul.mubr.f32.gmra.mxu0 %v4052
    %v4390 = vpop.f32.mrf.mxu0
    %v4391 = vadd.f32 %v4246, %v4390
    %v4392 = vpop.f32.mrf.mxu0
    %4393 = vmatprep.mubr.f32.mxu0 0.0
    %4394 = vmatmul.mubr.f32.gmra.mxu0 %v4055
    %v4395 = vpop.f32.mrf.mxu0
    %v4396 = vadd.f32 %v4251, %v4395
    %v4397 = vpop.f32.mrf.mxu0
    %4398 = vmatprep.mubr.f32.mxu0 0.0
    %4399 = vmatmul.mubr.f32.gmra.mxu0 %v4058
    %v4400 = vpop.f32.mrf.mxu0
    %v4401 = vadd.f32 %v4256, %v4400
    %v4402 = vpop.f32.mrf.mxu0
    %4403 = vmatprep.mubr.f32.mxu0 0.0
    %4404 = vmatmul.mubr.f32.gmra.mxu0 %v4061
    %v4405 = vpop.f32.mrf.mxu0
    %v4406 = vadd.f32 %v4261, %v4405
    %v4407 = vpop.f32.mrf.mxu0
    %4408 = vdwg.mxu0
    %v4409 = vmax.f32 %v4331, 0.0
    %v4410 = vmax.f32 %v4336, 0.0
    %v4411 = vmax.f32 %v4341, 0.0
    %v4412 = vmax.f32 %v4346, 0.0
    %v4413 = vmax.f32 %v4351, 0.0
    %v4414 = vmax.f32 %v4356, 0.0
    %v4415 = vmax.f32 %v4361, 0.0
    %v4416 = vmax.f32 %v4366, 0.0
    %v4417 = vmax.f32 %v4371, 0.0
    %v4418 = vmax.f32 %v4376, 0.0
    %v4419 = vmax.f32 %v4381, 0.0
    %v4420 = vmax.f32 %v4386, 0.0
    %v4421 = vmax.f32 %v4391, 0.0
    %v4422 = vmax.f32 %v4396, 0.0
    %v4423 = vmax.f32 %v4401, 0.0
    %v4424 = vmax.f32 %v4406, 0.0
    %v4425 = vsel %vm3878, %v4423, 0.0
    %v4426 = vsel %vm3879, %v4424, 0.0
    %v4427 = vsel %vm3880, %v4409, 0.0
    %v4428 = vsel %vm3881, %v4410, 0.0
    %v4429 = vsel %vm3882, %v4411, 0.0
    %v4430 = vsel %vm3883, %v4412, 0.0
    %v4431 = vsel %vm3884, %v4413, 0.0
    %v4432 = vsel %vm3885, %v4414, 0.0
    %v4433 = vsel %vm3878, %v4415, 0.0
    %v4434 = vsel %vm3879, %v4416, 0.0
    %v4435 = vsel %vm3880, %v4417, 0.0
    %v4436 = vsel %vm3881, %v4418, 0.0
    %v4437 = vsel %vm3882, %v4419, 0.0
    %v4438 = vsel %vm3883, %v4420, 0.0
    %v4439 = vsel %vm3884, %v4421, 0.0
    %v4440 = vsel %vm3885, %v4422, 0.0
    %v4441 = vsel %vm3942, %v4411, 0.0
    %v4442 = vsel %vm3943, %v4412, 0.0
    %v4443 = vsel %vm3944, %v4413, 0.0
    %v4444 = vsel %vm3945, %v4414, 0.0
    %v4445 = vsel %vm3946, %v4415, 0.0
    %v4446 = vsel %vm3947, %v4416, 0.0
    %v4447 = vsel %vm3948, %v4417, 0.0
    %v4448 = vsel %vm3949, %v4418, 0.0
    %v4449 = vsel %vm3942, %v4419, 0.0
    %v4450 = vsel %vm3943, %v4420, 0.0
    %v4451 = vsel %vm3944, %v4421, 0.0
    %v4452 = vsel %vm3945, %v4422, 0.0
    %v4453 = vsel %vm3946, %v4423, 0.0
    %v4454 = vsel %vm3947, %v4424, 0.0
    %v4455 = vsel %vm3948, %v4409, 0.0
    %v4456 = vsel %vm3949, %v4410, 0.0
    %4457 = vst [vmem:[#allocation2] sm:$0xff] %v4425
    %4458 = vst [vmem:[#allocation2 + $0x18] sm:$0xff] %v4426
    %4459 = vst [vmem:[#allocation2 + $0x30] sm:$0xff] %v4427
    %4460 = vst [vmem:[#allocation2 + $0x48] sm:$0xff] %v4428
    %4461 = vst [vmem:[#allocation2 + $0x60] sm:$0xff] %v4429
    %4462 = vst [vmem:[#allocation2 + $0x78] sm:$0xff] %v4430
    %4463 = vst [vmem:[#allocation2 + $0x90] sm:$0xff] %v4431
    %4464 = vst [vmem:[#allocation2 + $0xa8] sm:$0xff] %v4432
    %4465 = vst [vmem:[#allocation2 + $0xc0] sm:$0xff] %v4433
    %4466 = vst [vmem:[#allocation2 + $0xd8] sm:$0xff] %v4434
    %4467 = vst [vmem:[#allocation2 + $0xf0] sm:$0xff] %v4435
    %4468 = vst [vmem:[#allocation2 + $0x108] sm:$0xff] %v4436
    %4469 = vst [vmem:[#allocation2 + $0x120] sm:$0xff] %v4437
    %4470 = vst [vmem:[#allocation2 + $0x138] sm:$0xff] %v4438
    %4471 = vst [vmem:[#allocation2 + $0x150] sm:$0xff] %v4439
    %4472 = vst [vmem:[#allocation2 + $0x168] sm:$0xff] %v4440
    %4473 = vst [vmem:[#allocation2 + $0x8] sm:$0xff] %v4409
    %4474 = vst [vmem:[#allocation2 + $0x20] sm:$0xff] %v4410
    %4475 = vst [vmem:[#allocation2 + $0x38] sm:$0xff] %v4411
    %4476 = vst [vmem:[#allocation2 + $0x50] sm:$0xff] %v4412
    %4477 = vst [vmem:[#allocation2 + $0x68] sm:$0xff] %v4413
    %4478 = vst [vmem:[#allocation2 + $0x80] sm:$0xff] %v4414
    %4479 = vst [vmem:[#allocation2 + $0x98] sm:$0xff] %v4415
    %4480 = vst [vmem:[#allocation2 + $0xb0] sm:$0xff] %v4416
    %4481 = vst [vmem:[#allocation2 + $0xc8] sm:$0xff] %v4417
    %4482 = vst [vmem:[#allocation2 + $0xe0] sm:$0xff] %v4418
    %4483 = vst [vmem:[#allocation2 + $0xf8] sm:$0xff] %v4419
    %4484 = vst [vmem:[#allocation2 + $0x110] sm:$0xff] %v4420
    %4485 = vst [vmem:[#allocation2 + $0x128] sm:$0xff] %v4421
    %4486 = vst [vmem:[#allocation2 + $0x140] sm:$0xff] %v4422
    %4487 = vst [vmem:[#allocation2 + $0x158] sm:$0xff] %v4423
    %4488 = vst [vmem:[#allocation2 + $0x170] sm:$0xff] %v4424
    %4489 = vst [vmem:[#allocation2 + $0x10] sm:$0xff] %v4441
    %4490 = vst [vmem:[#allocation2 + $0x28] sm:$0xff] %v4442
    %4491 = vst [vmem:[#allocation2 + $0x40] sm:$0xff] %v4443
    %4492 = vst [vmem:[#allocation2 + $0x58] sm:$0xff] %v4444
    %4493 = vst [vmem:[#allocation2 + $0x70] sm:$0xff] %v4445
    %4494 = vst [vmem:[#allocation2 + $0x88] sm:$0xff] %v4446
    %4495 = vst [vmem:[#allocation2 + $0xa0] sm:$0xff] %v4447
    %4496 = vst [vmem:[#allocation2 + $0xb8] sm:$0xff] %v4448
    %4497 = vst [vmem:[#allocation2 + $0xd0] sm:$0xff] %v4449
    %4498 = vst [vmem:[#allocation2 + $0xe8] sm:$0xff] %v4450
    %4499 = vst [vmem:[#allocation2 + $0x100] sm:$0xff] %v4451
    %4500 = vst [vmem:[#allocation2 + $0x118] sm:$0xff] %v4452
    %4501 = vst [vmem:[#allocation2 + $0x130] sm:$0xff] %v4453
    %4502 = vst [vmem:[#allocation2 + $0x148] sm:$0xff] %v4454
    %4503 = vst [vmem:[#allocation2 + $0x160] sm:$0xff] %v4455
    %4504 = vst [vmem:[#allocation2 + $0x178] sm:$0xff] %v4456
    %v4505 = vld [vmem:[#allocation2] sm:$0xff]
    %v4506 = vld [vmem:[#allocation2 + $0x8] sm:$0xff]
    %v4507 = vld [vmem:[#allocation2 + $0x10] sm:$0xff]
    %v4508 = vld [vmem:[#allocation2 + $0x18] sm:$0xff]
    %v4509 = vld [vmem:[#allocation2 + $0x20] sm:$0xff]
    %v4510 = vld [vmem:[#allocation2 + $0x28] sm:$0xff]
    %v4511 = vld [vmem:[#allocation2 + $0x30] sm:$0xff]
    %v4512 = vld [vmem:[#allocation2 + $0x38] sm:$0xff]
    %v4513 = vld [vmem:[#allocation2 + $0x40] sm:$0xff]
    %v4514 = vld [vmem:[#allocation2 + $0x48] sm:$0xff]
    %v4515 = vld [vmem:[#allocation2 + $0x50] sm:$0xff]
    %v4516 = vld [vmem:[#allocation2 + $0x58] sm:$0xff]
    %v4517 = vld [vmem:[#allocation2 + $0x60] sm:$0xff]
    %v4518 = vld [vmem:[#allocation2 + $0x68] sm:$0xff]
    %v4519 = vld [vmem:[#allocation2 + $0x70] sm:$0xff]
    %v4520 = vld [vmem:[#allocation2 + $0x78] sm:$0xff]
    %v4521 = vld [vmem:[#allocation2 + $0x80] sm:$0xff]
    %v4522 = vld [vmem:[#allocation2 + $0x88] sm:$0xff]
    %v4523 = vld [vmem:[#allocation2 + $0x90] sm:$0xff]
    %v4524 = vld [vmem:[#allocation2 + $0x98] sm:$0xff]
    %v4525 = vld [vmem:[#allocation2 + $0xa0] sm:$0xff]
    %v4526 = vld [vmem:[#allocation2 + $0xa8] sm:$0xff]
    %v4527 = vld [vmem:[#allocation2 + $0xb0] sm:$0xff]
    %v4528 = vld [vmem:[#allocation2 + $0xb8] sm:$0xff]
    %v4529 = vld [vmem:[#allocation2 + $0xc0] sm:$0xff]
    %v4530 = vld [vmem:[#allocation2 + $0xc8] sm:$0xff]
    %v4531 = vld [vmem:[#allocation2 + $0xd0] sm:$0xff]
    %v4532 = vld [vmem:[#allocation2 + $0xd8] sm:$0xff]
    %v4533 = vld [vmem:[#allocation2 + $0xe0] sm:$0xff]
    %v4534 = vld [vmem:[#allocation2 + $0xe8] sm:$0xff]
    %v4535 = vld [vmem:[#allocation2 + $0xf0] sm:$0xff]
    %v4536 = vld [vmem:[#allocation2 + $0xf8] sm:$0xff]
    %v4537 = vld [vmem:[#allocation2 + $0x100] sm:$0xff]
    %v4538 = vld [vmem:[#allocation2 + $0x108] sm:$0xff]
    %v4539 = vld [vmem:[#allocation2 + $0x110] sm:$0xff]
    %v4540 = vld [vmem:[#allocation2 + $0x118] sm:$0xff]
    %v4541 = vld [vmem:[#allocation2 + $0x120] sm:$0xff]
    %v4542 = vld [vmem:[#allocation2 + $0x128] sm:$0xff]
    %v4543 = vld [vmem:[#allocation2 + $0x130] sm:$0xff]
    %v4544 = vld [vmem:[#allocation2 + $0x138] sm:$0xff]
    %v4545 = vld [vmem:[#allocation2 + $0x140] sm:$0xff]
    %v4546 = vld [vmem:[#allocation2 + $0x148] sm:$0xff]
    %v4547 = vld [vmem:[#allocation2 + $0x150] sm:$0xff]
    %v4548 = vld [vmem:[#allocation2 + $0x158] sm:$0xff]
    %v4549 = vld [vmem:[#allocation2 + $0x160] sm:$0xff]
    %v4550 = vld [vmem:[#allocation2 + $0x168] sm:$0xff]
    %v4551 = vld [vmem:[#allocation2 + $0x170] sm:$0xff]
    %v4552 = vld [vmem:[#allocation2 + $0x178] sm:$0xff]
    %s4553 = scalar_lea.vmem [#allocation7], 2688
    %v4554 = vld [vmem:[%s4553] sm:$0xff]
    %v4555 = vld [vmem:[%s4553 + $0x8] sm:$0xff]
    %v4556 = vld [vmem:[%s4553 + $0x10] sm:$0xff]
    %v4557 = vld [vmem:[%s4553 + $0x18] sm:$0xff]
    %v4558 = vld [vmem:[%s4553 + $0x20] sm:$0xff]
    %v4559 = vld [vmem:[%s4553 + $0x28] sm:$0xff]
    %v4560 = vld [vmem:[%s4553 + $0x30] sm:$0xff]
    %v4561 = vld [vmem:[%s4553 + $0x38] sm:$0xff]
    %v4562 = vld [vmem:[%s4553 + $0x40] sm:$0xff]
    %v4563 = vld [vmem:[%s4553 + $0x48] sm:$0xff]
    %v4564 = vld [vmem:[%s4553 + $0x50] sm:$0xff]
    %v4565 = vld [vmem:[%s4553 + $0x58] sm:$0xff]
    %v4566 = vld [vmem:[%s4553 + $0x60] sm:$0xff]
    %v4567 = vld [vmem:[%s4553 + $0x68] sm:$0xff]
    %v4568 = vld [vmem:[%s4553 + $0x70] sm:$0xff]
    %v4569 = vld [vmem:[%s4553 + $0x78] sm:$0xff]
    %v4570 = vld [vmem:[%s4553 + $0x80] sm:$0xff]
    %v4571 = vld [vmem:[%s4553 + $0x88] sm:$0xff]
    %v4572 = vld [vmem:[%s4553 + $0x90] sm:$0xff]
    %v4573 = vld [vmem:[%s4553 + $0x98] sm:$0xff]
    %v4574 = vld [vmem:[%s4553 + $0xa0] sm:$0xff]
    %v4575 = vld [vmem:[%s4553 + $0xa8] sm:$0xff]
    %v4576 = vld [vmem:[%s4553 + $0xb0] sm:$0xff]
    %v4577 = vld [vmem:[%s4553 + $0xb8] sm:$0xff]
    %v4578 = vld [vmem:[%s4553 + $0xc0] sm:$0xff]
    %v4579 = vld [vmem:[%s4553 + $0xc8] sm:$0xff]
    %v4580 = vld [vmem:[%s4553 + $0xd0] sm:$0xff]
    %v4581 = vld [vmem:[%s4553 + $0xd8] sm:$0xff]
    %v4582 = vld [vmem:[%s4553 + $0xe0] sm:$0xff]
    %v4583 = vld [vmem:[%s4553 + $0xe8] sm:$0xff]
    %v4584 = vld [vmem:[%s4553 + $0xf0] sm:$0xff]
    %v4585 = vld [vmem:[%s4553 + $0xf8] sm:$0xff]
    %v4586 = vld [vmem:[%s4553 + $0x100] sm:$0xff]
    %v4587 = vld [vmem:[%s4553 + $0x108] sm:$0xff]
    %v4588 = vld [vmem:[%s4553 + $0x110] sm:$0xff]
    %v4589 = vld [vmem:[%s4553 + $0x118] sm:$0xff]
    %v4590 = vld [vmem:[%s4553 + $0x120] sm:$0xff]
    %v4591 = vld [vmem:[%s4553 + $0x128] sm:$0xff]
    %v4592 = vld [vmem:[%s4553 + $0x130] sm:$0xff]
    %v4593 = vld [vmem:[%s4553 + $0x138] sm:$0xff]
    %v4594 = vld [vmem:[%s4553 + $0x140] sm:$0xff]
    %v4595 = vld [vmem:[%s4553 + $0x148] sm:$0xff]
    %v4596 = vld [vmem:[%s4553 + $0x150] sm:$0xff]
    %v4597 = vld [vmem:[%s4553 + $0x158] sm:$0xff]
    %v4598 = vld [vmem:[%s4553 + $0x160] sm:$0xff]
    %v4599 = vld [vmem:[%s4553 + $0x168] sm:$0xff]
    %v4600 = vld [vmem:[%s4553 + $0x170] sm:$0xff]
    %v4601 = vld [vmem:[%s4553 + $0x178] sm:$0xff]
    %s4602 = scalar_lea.vmem [#allocation8], 7
    %v4603 = vld [vmem:[%s4602] sm:$0x1]
    %v4605 = vlaneseq
    %v4606 = vshrl.u32 %v4605, 7
    %v4607 = vsub.s32 0, %v4606
    %v4608 = vrot.slane %v4603, %v4607
    %4610 = vmatprep.subr.mxu0 0.0
    %4611 = vmatpush1.msra.mxu0 %v4569
    %4612 = vmatprep.subr.mxu0 0.0
    %4613 = vmatpush1.msra.mxu0 %v4568
    %4614 = vmatprep.subr.mxu0 0.0
    %4615 = vmatpush1.msra.mxu0 %v4567
    %4616 = vmatprep.subr.mxu0 0.0
    %4617 = vmatpush1.msra.mxu0 %v4566
    %4618 = vmatprep.subr.mxu0 0.0
    %4619 = vmatpush1.msra.mxu0 %v4565
    %4620 = vmatprep.subr.mxu0 0.0
    %4621 = vmatpush1.msra.mxu0 %v4564
    %4622 = vmatprep.subr.mxu0 0.0
    %4623 = vmatpush1.msra.mxu0 %v4563
    %4624 = vmatprep.subr.mxu0 0.0
    %4625 = vmatpush1.msra.mxu0 %v4562
    %4626 = vmatprep.subr.mxu0 0.0
    %4627 = vmatpush1.msra.mxu0 %v4561
    %4628 = vmatprep.subr.mxu0 0.0
    %4629 = vmatpush1.msra.mxu0 %v4560
    %4630 = vmatprep.subr.mxu0 0.0
    %4631 = vmatpush1.msra.mxu0 %v4559
    %4632 = vmatprep.subr.mxu0 0.0
    %4633 = vmatpush1.msra.mxu0 %v4558
    %4634 = vmatprep.subr.mxu0 0.0
    %4635 = vmatpush1.msra.mxu0 %v4557
    %4636 = vmatprep.subr.mxu0 0.0
    %4637 = vmatpush1.msra.mxu0 %v4556
    %4638 = vmatprep.subr.mxu0 0.0
    %4639 = vmatpush1.msra.mxu0 %v4555
    %4640 = vmatprep.subr.mxu0 0.0
    %4641 = vmatpush1.msra.mxu0 %v4554
    %4642 = vmatprep.subr.mxu0 0.0
    %4643 = vmatpush2.msra.mxu0 %v4585
    %4644 = vmatprep.subr.mxu0 0.0
    %4645 = vmatpush2.msra.mxu0 %v4584
    %4646 = vmatprep.subr.mxu0 0.0
    %4647 = vmatpush2.msra.mxu0 %v4583
    %4648 = vmatprep.subr.mxu0 0.0
    %4649 = vmatpush2.msra.mxu0 %v4582
    %4650 = vmatprep.subr.mxu0 0.0
    %4651 = vmatpush2.msra.mxu0 %v4581
    %4652 = vmatprep.subr.mxu0 0.0
    %4653 = vmatpush2.msra.mxu0 %v4580
    %4654 = vmatprep.subr.mxu0 0.0
    %4655 = vmatpush2.msra.mxu0 %v4579
    %4656 = vmatprep.subr.mxu0 0.0
    %4657 = vmatpush2.msra.mxu0 %v4578
    %4658 = vmatprep.subr.mxu0 0.0
    %4659 = vmatpush2.msra.mxu0 %v4577
    %4660 = vmatprep.subr.mxu0 0.0
    %4661 = vmatpush2.msra.mxu0 %v4576
    %4662 = vmatprep.subr.mxu0 0.0
    %4663 = vmatpush2.msra.mxu0 %v4575
    %4664 = vmatprep.subr.mxu0 0.0
    %4665 = vmatpush2.msra.mxu0 %v4574
    %4666 = vmatprep.subr.mxu0 0.0
    %4667 = vmatpush2.msra.mxu0 %v4573
    %4668 = vmatprep.subr.mxu0 0.0
    %4669 = vmatpush2.msra.mxu0 %v4572
    %4670 = vmatprep.subr.mxu0 0.0
    %4671 = vmatpush2.msra.mxu0 %v4571
    %4672 = vmatprep.subr.mxu0 0.0
    %4673 = vmatpush2.msra.mxu0 %v4570
    %4674 = vmatprep.mubr.f32.mxu0 %v4506
    %4675 = vmatmul.mubr.f32.gmra.mxu0 %v4505
    %v4676 = vpop.f32.mrf.mxu0
    %v4677 = vadd.f32 %v4608, %v4676
    %v4678 = vpop.f32.mrf.mxu0
    %4679 = vmatprep.mubr.f32.mxu0 %v4509
    %4680 = vmatmul.mubr.f32.gmra.mxu0 %v4508
    %v4681 = vpop.f32.mrf.mxu0
    %v4682 = vadd.f32 %v4608, %v4681
    %v4683 = vpop.f32.mrf.mxu0
    %4684 = vmatprep.mubr.f32.mxu0 %v4512
    %4685 = vmatmul.mubr.f32.gmra.mxu0 %v4511
    %v4686 = vpop.f32.mrf.mxu0
    %v4687 = vadd.f32 %v4608, %v4686
    %v4688 = vpop.f32.mrf.mxu0
    %4689 = vmatprep.mubr.f32.mxu0 %v4515
    %4690 = vmatmul.mubr.f32.gmra.mxu0 %v4514
    %v4691 = vpop.f32.mrf.mxu0
    %v4692 = vadd.f32 %v4608, %v4691
    %v4693 = vpop.f32.mrf.mxu0
    %4694 = vmatprep.mubr.f32.mxu0 %v4518
    %4695 = vmatmul.mubr.f32.gmra.mxu0 %v4517
    %v4696 = vpop.f32.mrf.mxu0
    %v4697 = vadd.f32 %v4608, %v4696
    %v4698 = vpop.f32.mrf.mxu0
    %4699 = vmatprep.mubr.f32.mxu0 %v4521
    %4700 = vmatmul.mubr.f32.gmra.mxu0 %v4520
    %v4701 = vpop.f32.mrf.mxu0
    %v4702 = vadd.f32 %v4608, %v4701
    %v4703 = vpop.f32.mrf.mxu0
    %4704 = vmatprep.mubr.f32.mxu0 %v4524
    %4705 = vmatmul.mubr.f32.gmra.mxu0 %v4523
    %v4706 = vpop.f32.mrf.mxu0
    %v4707 = vadd.f32 %v4608, %v4706
    %v4708 = vpop.f32.mrf.mxu0
    %4709 = vmatprep.mubr.f32.mxu0 %v4527
    %4710 = vmatmul.mubr.f32.gmra.mxu0 %v4526
    %v4711 = vpop.f32.mrf.mxu0
    %v4712 = vadd.f32 %v4608, %v4711
    %v4713 = vpop.f32.mrf.mxu0
    %4714 = vmatprep.mubr.f32.mxu0 %v4530
    %4715 = vmatmul.mubr.f32.gmra.mxu0 %v4529
    %v4716 = vpop.f32.mrf.mxu0
    %v4717 = vadd.f32 %v4608, %v4716
    %v4718 = vpop.f32.mrf.mxu0
    %4719 = vmatprep.mubr.f32.mxu0 %v4533
    %4720 = vmatmul.mubr.f32.gmra.mxu0 %v4532
    %v4721 = vpop.f32.mrf.mxu0
    %v4722 = vadd.f32 %v4608, %v4721
    %v4723 = vpop.f32.mrf.mxu0
    %4724 = vmatprep.mubr.f32.mxu0 %v4536
    %4725 = vmatmul.mubr.f32.gmra.mxu0 %v4535
    %v4726 = vpop.f32.mrf.mxu0
    %v4727 = vadd.f32 %v4608, %v4726
    %v4728 = vpop.f32.mrf.mxu0
    %4729 = vmatprep.mubr.f32.mxu0 %v4539
    %4730 = vmatmul.mubr.f32.gmra.mxu0 %v4538
    %v4731 = vpop.f32.mrf.mxu0
    %v4732 = vadd.f32 %v4608, %v4731
    %v4733 = vpop.f32.mrf.mxu0
    %4734 = vmatprep.mubr.f32.mxu0 %v4542
    %4735 = vmatmul.mubr.f32.gmra.mxu0 %v4541
    %v4736 = vpop.f32.mrf.mxu0
    %v4737 = vadd.f32 %v4608, %v4736
    %v4738 = vpop.f32.mrf.mxu0
    %4739 = vmatprep.mubr.f32.mxu0 %v4545
    %4740 = vmatmul.mubr.f32.gmra.mxu0 %v4544
    %v4741 = vpop.f32.mrf.mxu0
    %v4742 = vadd.f32 %v4608, %v4741
    %v4743 = vpop.f32.mrf.mxu0
    %4744 = vmatprep.mubr.f32.mxu0 %v4548
    %4745 = vmatmul.mubr.f32.gmra.mxu0 %v4547
    %v4746 = vpop.f32.mrf.mxu0
    %v4747 = vadd.f32 %v4608, %v4746
    %v4748 = vpop.f32.mrf.mxu0
    %4749 = vmatprep.mubr.f32.mxu0 %v4551
    %4750 = vmatmul.mubr.f32.gmra.mxu0 %v4550
    %v4751 = vpop.f32.mrf.mxu0
    %v4752 = vadd.f32 %v4608, %v4751
    %v4753 = vpop.f32.mrf.mxu0
    %4754 = vdwg.mxu0
    %4755 = vmatprep.subr.mxu0 0.0
    %4756 = vmatpush1.msra.mxu0 %v4601
    %4757 = vmatprep.subr.mxu0 0.0
    %4758 = vmatpush1.msra.mxu0 %v4600
    %4759 = vmatprep.subr.mxu0 0.0
    %4760 = vmatpush1.msra.mxu0 %v4599
    %4761 = vmatprep.subr.mxu0 0.0
    %4762 = vmatpush1.msra.mxu0 %v4598
    %4763 = vmatprep.subr.mxu0 0.0
    %4764 = vmatpush1.msra.mxu0 %v4597
    %4765 = vmatprep.subr.mxu0 0.0
    %4766 = vmatpush1.msra.mxu0 %v4596
    %4767 = vmatprep.subr.mxu0 0.0
    %4768 = vmatpush1.msra.mxu0 %v4595
    %4769 = vmatprep.subr.mxu0 0.0
    %4770 = vmatpush1.msra.mxu0 %v4594
    %4771 = vmatprep.subr.mxu0 0.0
    %4772 = vmatpush1.msra.mxu0 %v4593
    %4773 = vmatprep.subr.mxu0 0.0
    %4774 = vmatpush1.msra.mxu0 %v4592
    %4775 = vmatprep.subr.mxu0 0.0
    %4776 = vmatpush1.msra.mxu0 %v4591
    %4777 = vmatprep.subr.mxu0 0.0
    %4778 = vmatpush1.msra.mxu0 %v4590
    %4779 = vmatprep.subr.mxu0 0.0
    %4780 = vmatpush1.msra.mxu0 %v4589
    %4781 = vmatprep.subr.mxu0 0.0
    %4782 = vmatpush1.msra.mxu0 %v4588
    %4783 = vmatprep.subr.mxu0 0.0
    %4784 = vmatpush1.msra.mxu0 %v4587
    %4785 = vmatprep.subr.mxu0 0.0
    %4786 = vmatpush1.msra.mxu0 %v4586
    %4787 = vmatprep.subr.mxu0 0.0
    %4788 = vmatpush2.msra.mxu0 0.0
    %4789 = vmatprep.subr.mxu0 0.0
    %4790 = vmatpush2.msra.mxu0 0.0
    %4791 = vmatprep.subr.mxu0 0.0
    %4792 = vmatpush2.msra.mxu0 0.0
    %4793 = vmatprep.subr.mxu0 0.0
    %4794 = vmatpush2.msra.mxu0 0.0
    %4795 = vmatprep.subr.mxu0 0.0
    %4796 = vmatpush2.msra.mxu0 0.0
    %4797 = vmatprep.subr.mxu0 0.0
    %4798 = vmatpush2.msra.mxu0 0.0
    %4799 = vmatprep.subr.mxu0 0.0
    %4800 = vmatpush2.msra.mxu0 0.0
    %4801 = vmatprep.subr.mxu0 0.0
    %4802 = vmatpush2.msra.mxu0 0.0
    %4803 = vmatprep.subr.mxu0 0.0
    %4804 = vmatpush2.msra.mxu0 0.0
    %4805 = vmatprep.subr.mxu0 0.0
    %4806 = vmatpush2.msra.mxu0 0.0
    %4807 = vmatprep.subr.mxu0 0.0
    %4808 = vmatpush2.msra.mxu0 0.0
    %4809 = vmatprep.subr.mxu0 0.0
    %4810 = vmatpush2.msra.mxu0 0.0
    %4811 = vmatprep.subr.mxu0 0.0
    %4812 = vmatpush2.msra.mxu0 0.0
    %4813 = vmatprep.subr.mxu0 0.0
    %4814 = vmatpush2.msra.mxu0 0.0
    %4815 = vmatprep.subr.mxu0 0.0
    %4816 = vmatpush2.msra.mxu0 0.0
    %4817 = vmatprep.subr.mxu0 0.0
    %4818 = vmatpush2.msra.mxu0 0.0
    %4819 = vmatprep.mubr.f32.mxu0 0.0
    %4820 = vmatmul.mubr.f32.gmra.mxu0 %v4507
    %v4821 = vpop.f32.mrf.mxu0
    %v4822 = vadd.f32 %v4677, %v4821
    %v4823 = vpop.f32.mrf.mxu0
    %4824 = vmatprep.mubr.f32.mxu0 0.0
    %4825 = vmatmul.mubr.f32.gmra.mxu0 %v4510
    %v4826 = vpop.f32.mrf.mxu0
    %v4827 = vadd.f32 %v4682, %v4826
    %v4828 = vpop.f32.mrf.mxu0
    %4829 = vmatprep.mubr.f32.mxu0 0.0
    %4830 = vmatmul.mubr.f32.gmra.mxu0 %v4513
    %v4831 = vpop.f32.mrf.mxu0
    %v4832 = vadd.f32 %v4687, %v4831
    %v4833 = vpop.f32.mrf.mxu0
    %4834 = vmatprep.mubr.f32.mxu0 0.0
    %4835 = vmatmul.mubr.f32.gmra.mxu0 %v4516
    %v4836 = vpop.f32.mrf.mxu0
    %v4837 = vadd.f32 %v4692, %v4836
    %v4838 = vpop.f32.mrf.mxu0
    %4839 = vmatprep.mubr.f32.mxu0 0.0
    %4840 = vmatmul.mubr.f32.gmra.mxu0 %v4519
    %v4841 = vpop.f32.mrf.mxu0
    %v4842 = vadd.f32 %v4697, %v4841
    %v4843 = vpop.f32.mrf.mxu0
    %4844 = vmatprep.mubr.f32.mxu0 0.0
    %4845 = vmatmul.mubr.f32.gmra.mxu0 %v4522
    %v4846 = vpop.f32.mrf.mxu0
    %v4847 = vadd.f32 %v4702, %v4846
    %v4848 = vpop.f32.mrf.mxu0
    %4849 = vmatprep.mubr.f32.mxu0 0.0
    %4850 = vmatmul.mubr.f32.gmra.mxu0 %v4525
    %v4851 = vpop.f32.mrf.mxu0
    %v4852 = vadd.f32 %v4707, %v4851
    %v4853 = vpop.f32.mrf.mxu0
    %4854 = vmatprep.mubr.f32.mxu0 0.0
    %4855 = vmatmul.mubr.f32.gmra.mxu0 %v4528
    %v4856 = vpop.f32.mrf.mxu0
    %v4857 = vadd.f32 %v4712, %v4856
    %v4858 = vpop.f32.mrf.mxu0
    %4859 = vmatprep.mubr.f32.mxu0 0.0
    %4860 = vmatmul.mubr.f32.gmra.mxu0 %v4531
    %v4861 = vpop.f32.mrf.mxu0
    %v4862 = vadd.f32 %v4717, %v4861
    %v4863 = vpop.f32.mrf.mxu0
    %4864 = vmatprep.mubr.f32.mxu0 0.0
    %4865 = vmatmul.mubr.f32.gmra.mxu0 %v4534
    %v4866 = vpop.f32.mrf.mxu0
    %v4867 = vadd.f32 %v4722, %v4866
    %v4868 = vpop.f32.mrf.mxu0
    %4869 = vmatprep.mubr.f32.mxu0 0.0
    %4870 = vmatmul.mubr.f32.gmra.mxu0 %v4537
    %v4871 = vpop.f32.mrf.mxu0
    %v4872 = vadd.f32 %v4727, %v4871
    %v4873 = vpop.f32.mrf.mxu0
    %4874 = vmatprep.mubr.f32.mxu0 0.0
    %4875 = vmatmul.mubr.f32.gmra.mxu0 %v4540
    %v4876 = vpop.f32.mrf.mxu0
    %v4877 = vadd.f32 %v4732, %v4876
    %v4878 = vpop.f32.mrf.mxu0
    %4879 = vmatprep.mubr.f32.mxu0 0.0
    %4880 = vmatmul.mubr.f32.gmra.mxu0 %v4543
    %v4881 = vpop.f32.mrf.mxu0
    %v4882 = vadd.f32 %v4737, %v4881
    %v4883 = vpop.f32.mrf.mxu0
    %4884 = vmatprep.mubr.f32.mxu0 0.0
    %4885 = vmatmul.mubr.f32.gmra.mxu0 %v4546
    %v4886 = vpop.f32.mrf.mxu0
    %v4887 = vadd.f32 %v4742, %v4886
    %v4888 = vpop.f32.mrf.mxu0
    %4889 = vmatprep.mubr.f32.mxu0 0.0
    %4890 = vmatmul.mubr.f32.gmra.mxu0 %v4549
    %v4891 = vpop.f32.mrf.mxu0
    %v4892 = vadd.f32 %v4747, %v4891
    %v4893 = vpop.f32.mrf.mxu0
    %4894 = vmatprep.mubr.f32.mxu0 0.0
    %4895 = vmatmul.mubr.f32.gmra.mxu0 %v4552
    %v4896 = vpop.f32.mrf.mxu0
    %v4897 = vadd.f32 %v4752, %v4896
    %v4898 = vpop.f32.mrf.mxu0
    %4899 = vdwg.mxu0
    %v4900 = vadd.f32 %v4822, %v3822
    %v4901 = vadd.f32 %v4827, %v3823
    %v4902 = vadd.f32 %v4832, %v3824
    %v4903 = vadd.f32 %v4837, %v3825
    %v4904 = vadd.f32 %v4842, %v3826
    %v4905 = vadd.f32 %v4847, %v3827
    %v4906 = vadd.f32 %v4852, %v3828
    %v4907 = vadd.f32 %v4857, %v3829
    %v4908 = vadd.f32 %v4862, %v3830
    %v4909 = vadd.f32 %v4867, %v3831
    %v4910 = vadd.f32 %v4872, %v3832
    %v4911 = vadd.f32 %v4877, %v3833
    %v4912 = vadd.f32 %v4882, %v3834
    %v4913 = vadd.f32 %v4887, %v3835
    %v4914 = vadd.f32 %v4892, %v3836
    %v4915 = vadd.f32 %v4897, %v3837
    %v4916 = vmax.f32 %v4900, 0.0
    %v4917 = vmax.f32 %v4901, 0.0
    %v4918 = vmax.f32 %v4902, 0.0
    %v4919 = vmax.f32 %v4903, 0.0
    %v4920 = vmax.f32 %v4904, 0.0
    %v4921 = vmax.f32 %v4905, 0.0
    %v4922 = vmax.f32 %v4906, 0.0
    %v4923 = vmax.f32 %v4907, 0.0
    %v4924 = vmax.f32 %v4908, 0.0
    %v4925 = vmax.f32 %v4909, 0.0
    %v4926 = vmax.f32 %v4910, 0.0
    %v4927 = vmax.f32 %v4911, 0.0
    %v4928 = vmax.f32 %v4912, 0.0
    %v4929 = vmax.f32 %v4913, 0.0
    %v4930 = vmax.f32 %v4914, 0.0
    %v4931 = vmax.f32 %v4915, 0.0
    %4932 = vxpose.xlu0.b32.start [1/16] %v4916, 128
    %4933 = vxpose.xlu0.b32.cont [2/16] %v4917, 128
    %4934 = vxpose.xlu0.b32.cont [3/16] %v4918, 128
    %4935 = vxpose.xlu0.b32.cont [4/16] %v4919, 128
    %4936 = vxpose.xlu0.b32.cont [5/16] %v4920, 128
    %4937 = vxpose.xlu0.b32.cont [6/16] %v4921, 128
    %4938 = vxpose.xlu0.b32.cont [7/16] %v4922, 128
    %4939 = vxpose.xlu0.b32.cont [8/16] %v4923, 128
    %4940 = vxpose.xlu0.b32.cont [9/16] 0.0, 128
    %4941 = vxpose.xlu0.b32.cont [10/16] 0.0, 128
    %4942 = vxpose.xlu0.b32.cont [11/16] 0.0, 128
    %4943 = vxpose.xlu0.b32.cont [12/16] 0.0, 128
    %4944 = vxpose.xlu0.b32.cont [13/16] 0.0, 128
    %4945 = vxpose.xlu0.b32.cont [14/16] 0.0, 128
    %4946 = vxpose.xlu0.b32.cont [15/16] 0.0, 128
    %4947 = vxpose.xlu0.b32.end [16/16] 0.0, 128
    %v4948 = vpop.trf.xlu0
    %v4949 = vpop.trf.xlu0
    %v4950 = vpop.trf.xlu0
    %v4951 = vpop.trf.xlu0
    %v4952 = vpop.trf.xlu0
    %v4953 = vpop.trf.xlu0
    %v4954 = vpop.trf.xlu0
    %v4955 = vpop.trf.xlu0
    %v4956 = vpop.trf.xlu0
    %v4957 = vpop.trf.xlu0
    %v4958 = vpop.trf.xlu0
    %v4959 = vpop.trf.xlu0
    %v4960 = vpop.trf.xlu0
    %v4961 = vpop.trf.xlu0
    %v4962 = vpop.trf.xlu0
    %v4963 = vpop.trf.xlu0
    %vm4964 = vcmask 523264
    %4965 = vst.msk [vmem:[%s5] sm:$0xff] %vm4964, %v4948
    %4966 = vst.msk [vmem:[%s5 + $0x8] sm:$0xff] %vm4964, %v4949
    %4967 = vst.msk [vmem:[%s5 + $0x10] sm:$0xff] %vm4964, %v4950
    %4968 = vst.msk [vmem:[%s5 + $0x18] sm:$0xff] %vm4964, %v4951
    %4969 = vst.msk [vmem:[%s5 + $0x20] sm:$0xff] %vm4964, %v4952
    %4970 = vst.msk [vmem:[%s5 + $0x28] sm:$0xff] %vm4964, %v4953
    %4971 = vst.msk [vmem:[%s5 + $0x30] sm:$0xff] %vm4964, %v4954
    %4972 = vst.msk [vmem:[%s5 + $0x38] sm:$0xff] %vm4964, %v4955
    %4973 = vst.msk [vmem:[%s5 + $0x40] sm:$0xff] %vm4964, %v4956
    %4974 = vst.msk [vmem:[%s5 + $0x48] sm:$0xff] %vm4964, %v4957
    %4975 = vst.msk [vmem:[%s5 + $0x50] sm:$0xff] %vm4964, %v4958
    %4976 = vst.msk [vmem:[%s5 + $0x58] sm:$0xff] %vm4964, %v4959
    %4977 = vst.msk [vmem:[%s5 + $0x60] sm:$0xff] %vm4964, %v4960
    %4978 = vst.msk [vmem:[%s5 + $0x68] sm:$0xff] %vm4964, %v4961
    %4979 = vst.msk [vmem:[%s5 + $0x70] sm:$0xff] %vm4964, %v4962
    %4980 = vst.msk [vmem:[%s5 + $0x78] sm:$0xff] %vm4964, %v4963
    %4981 = vxpose.xlu0.b32.start [1/16] %v4924, 128
    %4982 = vxpose.xlu0.b32.cont [2/16] %v4925, 128
    %4983 = vxpose.xlu0.b32.cont [3/16] %v4926, 128
    %4984 = vxpose.xlu0.b32.cont [4/16] %v4927, 128
    %4985 = vxpose.xlu0.b32.cont [5/16] %v4928, 128
    %4986 = vxpose.xlu0.b32.cont [6/16] %v4929, 128
    %4987 = vxpose.xlu0.b32.cont [7/16] %v4930, 128
    %4988 = vxpose.xlu0.b32.cont [8/16] %v4931, 128
    %4989 = vxpose.xlu0.b32.cont [9/16] 0.0, 128
    %4990 = vxpose.xlu0.b32.cont [10/16] 0.0, 128
    %4991 = vxpose.xlu0.b32.cont [11/16] 0.0, 128
    %4992 = vxpose.xlu0.b32.cont [12/16] 0.0, 128
    %4993 = vxpose.xlu0.b32.cont [13/16] 0.0, 128
    %4994 = vxpose.xlu0.b32.cont [14/16] 0.0, 128
    %4995 = vxpose.xlu0.b32.cont [15/16] 0.0, 128
    %4996 = vxpose.xlu0.b32.end [16/16] 0.0, 128
    %v4997 = vpop.trf.xlu0
    %v4998 = vpop.trf.xlu0
    %v4999 = vpop.trf.xlu0
    %v5000 = vpop.trf.xlu0
    %v5001 = vpop.trf.xlu0
    %v5002 = vpop.trf.xlu0
    %v5003 = vpop.trf.xlu0
    %v5004 = vpop.trf.xlu0
    %v5005 = vpop.trf.xlu0
    %v5006 = vpop.trf.xlu0
    %v5007 = vpop.trf.xlu0
    %v5008 = vpop.trf.xlu0
    %v5009 = vpop.trf.xlu0
    %v5010 = vpop.trf.xlu0
    %v5011 = vpop.trf.xlu0
    %v5012 = vpop.trf.xlu0
    %s5013 = scalar_lea.vmem %s5, 128
    %5014 = vst.msk [vmem:[%s5013] sm:$0xff] %vm4964, %v4997
    %5015 = vst.msk [vmem:[%s5013 + $0x8] sm:$0xff] %vm4964, %v4998
    %5016 = vst.msk [vmem:[%s5013 + $0x10] sm:$0xff] %vm4964, %v4999
    %5017 = vst.msk [vmem:[%s5013 + $0x18] sm:$0xff] %vm4964, %v5000
    %5018 = vst.msk [vmem:[%s5013 + $0x20] sm:$0xff] %vm4964, %v5001
    %5019 = vst.msk [vmem:[%s5013 + $0x28] sm:$0xff] %vm4964, %v5002
    %5020 = vst.msk [vmem:[%s5013 + $0x30] sm:$0xff] %vm4964, %v5003
    %5021 = vst.msk [vmem:[%s5013 + $0x38] sm:$0xff] %vm4964, %v5004
    %5022 = vst.msk [vmem:[%s5013 + $0x40] sm:$0xff] %vm4964, %v5005
    %5023 = vst.msk [vmem:[%s5013 + $0x48] sm:$0xff] %vm4964, %v5006
    %5024 = vst.msk [vmem:[%s5013 + $0x50] sm:$0xff] %vm4964, %v5007
    %5025 = vst.msk [vmem:[%s5013 + $0x58] sm:$0xff] %vm4964, %v5008
    %5026 = vst.msk [vmem:[%s5013 + $0x60] sm:$0xff] %vm4964, %v5009
    %5027 = vst.msk [vmem:[%s5013 + $0x68] sm:$0xff] %vm4964, %v5010
    %5028 = vst.msk [vmem:[%s5013 + $0x70] sm:$0xff] %vm4964, %v5011
    %5029 = vst.msk [vmem:[%s5013 + $0x78] sm:$0xff] %vm4964, %v5012
    // Predicated region
    $region38: #{forward.1} parent=1 // pred_check
      _
    $region39: #{forward.1} parent=1 // pred_check_branch
      %5031 = sbr.rel (0) target = $region41
    $region40: #{forward.1} parent=1 // pred_region
      _
    $region41: #{forward.1} parent=1 // pred_fallthru
      _
    // Predicated region
    $region42: #{forward.1} parent=1 // pred_check
      _
    $region43: #{forward.1} parent=1 // pred_check_branch
      %5033 = sbr.rel (0) target = $region45
    $region44: #{forward.1} parent=1 // pred_region
      _
    $region45: #{forward.1} parent=1 // pred_fallthru
      _
    %5034 = vsyncpa [#allocation4], 1
    %5035 = vsyncpa [#allocation6], 1
    %5036 = vsyncpa [#allocation9], 1

</llo_original>
